<compile_context>
chip_gen: v6e
topology: v6e:2x2x1
jax: 0.10.0
libtpu: 0.0.40
codegen_flags: <defaults>
</compile_context>

<pallas_src>
import functools
import math

import jax
import jax.numpy as jnp
from jax import lax
from jax.experimental import pallas as pl
from jax.experimental.pallas import tpu as pltpu


def _layernorm_f32(x, alpha, beta, eps):
    # Matches the PyTorch module exactly: torch.std is unbiased (divisor N-1),
    # and the denominator is (std + eps), not sqrt(var + eps).
    n = x.shape[-1]
    mean = jnp.mean(x, axis=-1, keepdims=True)
    c = x - mean
    var = jnp.sum(c * c, axis=-1, keepdims=True) * (1.0 / (n - 1))
    std = jnp.sqrt(var)
    inv = pl.reciprocal(std + eps, approx=True)   # EUP slot -> effectively free
    return alpha * c * inv + beta


def _encoder_block_kernel(
    x_ref, qid_ref, kid_ref,
    wq_ref, wk_ref, wv_ref, wo_ref,
    a1_ref, g1_ref,
    w1_ref, b1_ref, w2_ref, b2_ref,
    a2_ref, g2_ref,
    out_ref,
    *, block_b, seq, h, d_k, eps,
):
    d = h * d_k
    m = block_b * seq
    x = x_ref[...].reshape(m, d)            # (M, D) f32, M = block_b * seq (fat matmul rows)

    # Additive attention bias, built ONCE (hoisted out of the head loop).
    # qid: batch id of each query row (M, 1); kid: batch id of each key, or -1 if the key
    # is masked out by src_mask (1, M). keep <=> same batch AND key valid.
    keep = qid_ref[0] == kid_ref[0]                         # (M, 1) == (1, M) -> (M, M)
    bias = jnp.where(keep, 0.0, -1e9).astype(jnp.float32)   # cross-batch & padded keys -> -1e9

    # ---------------- residual connection 1: pre-norm self-attention ----------------
    xn = _layernorm_f32(x, a1_ref[...], g1_ref[...], eps)
    xn_b = xn.astype(jnp.bfloat16)

    # bf16 MXU operands, f32 accumulation, M = block_b*seq rows.
    q = jnp.dot(xn_b, wq_ref[...], preferred_element_type=jnp.float32)
    k = jnp.dot(xn_b, wk_ref[...], preferred_element_type=jnp.float32)
    v = jnp.dot(xn_b, wv_ref[...], preferred_element_type=jnp.float32)
    q_b = q.astype(jnp.bfloat16)
    k_b = k.astype(jnp.bfloat16)
    v_b = v.astype(jnp.bfloat16)

    inv_sqrt_dk = 1.0 / math.sqrt(d_k)
    head_outs = []
    for head in range(h):                    # static, small h
        sl = slice(head * d_k, (head + 1) * d_k)
        # scores over the whole batch tile; cross-batch pairs are killed by `bias`.
        s = lax.dot_general(q_b[:, sl], k_b[:, sl], (((1,), (1,)), ((), ())),
                            preferred_element_type=jnp.float32)
        s = s * inv_sqrt_dk + bias
        s = s - jnp.max(s, axis=-1, keepdims=True)          # stable softmax, f32
        e = jnp.exp(s)
        p = e * pl.reciprocal(jnp.sum(e, axis=-1, keepdims=True), approx=True)
        head_outs.append(jnp.dot(p.astype(jnp.bfloat16), v_b[:, sl],
                                 preferred_element_type=jnp.float32))
    cat = jnp.concatenate(head_outs, axis=-1)               # (M, D) == concat(head_0..head_{h-1})
    attn = jnp.dot(cat.astype(jnp.bfloat16), wo_ref[...],   # ONE Wo projection
                   preferred_element_type=jnp.float32)

    # TODO(synk): dropout layers are identity (inference / eval mode).
    x1 = x + attn

    # ---------------- residual connection 2: pre-norm feed-forward ----------------
    xn2 = _layernorm_f32(x1, a2_ref[...], g2_ref[...], eps)
    hid = jnp.dot(xn2.astype(jnp.bfloat16), w1_ref[...],
                  preferred_element_type=jnp.float32) + b1_ref[...]
    hid = jnp.maximum(hid, 0.0)
    ffn = jnp.dot(hid.astype(jnp.bfloat16), w2_ref[...],
                  preferred_element_type=jnp.float32) + b2_ref[...]

    out_ref[...] = (x1 + ffn).reshape(block_b, seq, d).astype(out_ref.dtype)


def _pick_block_b(B, S, max_rows=256):
    """Largest batch tile s.t. block_b*S <= max_rows while keeping >=2 grid steps (v7x megacore)."""
    best = 1
    for cand in range(1, B + 1):
        if B % cand:
            continue
        if cand * S > max(max_rows, S):
            continue
        if (B // cand) >= 2 or B == 1:
            best = cand
    return best


def encoder_block(x, src_mask, params, *, h, eps=1e-6, block_b=None):
    """x: (B, S, D) f32; src_mask: (B, 1, S) f32 (1=keep, 0=mask); params: dict of f32 arrays.

    Linear weights are passed pre-transposed ((in, out)) so the kernel does x @ W_t,
    matching PyTorch's y = x @ W.T (+ b). Weights are cast to bf16 at the call boundary.
    """
    B, S, D = x.shape
    assert D % h == 0
    d_k = D // h
    d_ff = params["w1_t"].shape[1]

    if block_b is None:
        block_b = _pick_block_b(B, S)
    if B % block_b != 0:
        raise ValueError(f"block_b={block_b} must divide B={B}")
    nb = B // block_b
    m = block_b * S

    # Precompute tiny per-tile id vectors (host side):
    #   qid: batch index of every flattened query row, shape (nb, m, 1)
    #   kid: batch index of every flattened key, or -1 where src_mask == 0, shape (nb, 1, m)
    batch_ids = jnp.broadcast_to(jnp.arange(B, dtype=jnp.int32)[:, None], (B, S))
    qid = batch_ids.reshape(nb, m, 1)
    kid = jnp.where(src_mask.reshape(B, S) != 0, batch_ids, -1).reshape(nb, 1, m)

    to_b16 = lambda a: a.astype(jnp.bfloat16)   # MXU-native weight dtype; biases/LN params stay f32

    def full(shape):
        return pl.BlockSpec(shape, lambda i, _n=len(shape): (0,) * _n)

    in_specs = [
        pl.BlockSpec((block_b, S, D), lambda i: (i, 0, 0)),   # x (batch tile)
        pl.BlockSpec((1, m, 1), lambda i: (i, 0, 0)),         # qid
        pl.BlockSpec((1, 1, m), lambda i: (i, 0, 0)),         # kid (encodes src_mask)
        full((D, D)), full((D, D)), full((D, D)), full((D, D)),   # Wq_t, Wk_t, Wv_t, Wo_t (bf16)
        full((1, D)), full((1, D)),                                # alpha1, beta1
        full((D, d_ff)), full((1, d_ff)),                          # W1_t (bf16), b1
        full((d_ff, D)), full((1, D)),                             # W2_t (bf16), b2
        full((1, D)), full((1, D)),                                # alpha2, beta2
    ]

    kernel = functools.partial(_encoder_block_kernel,
                               block_b=block_b, seq=S, h=h, d_k=d_k, eps=eps)

    flops = (2 * B * S * D * D * 4              # Q, K, V, O projections
             + 2 * B * h * S * S * d_k * 2      # scores + attention @ V
             + 2 * B * S * D * d_ff * 2)        # FFN
    transcendentals = B * h * S * S
    bytes_accessed = (2 * B * S * D * 4                                   # x in + out
                      + B * S * 2 * 4                                     # qid/kid
                      + (4 * D * D + 2 * D * d_ff) * 2                    # bf16 weights
                      + (4 * D + d_ff + D) * 4)                           # biases / LN params

    return pl.pallas_call(
        kernel,
        grid_spec=pltpu.PrefetchScalarGridSpec(
            num_scalar_prefetch=0,
            grid=(nb,),
            in_specs=in_specs,
            out_specs=pl.BlockSpec((block_b, S, D), lambda i: (i, 0, 0)),
        ),
        out_shape=jax.ShapeDtypeStruct((B, S, D), x.dtype),
        compiler_params=pltpu.CompilerParams(
            dimension_semantics=("parallel",),      # disjoint per-tile outputs -> megacore-safe
            vmem_limit_bytes=48 * 1024 * 1024,      # leaves headroom on v7x's 64 MiB VMEM
        ),
        cost_estimate=pl.CostEstimate(flops=flops,
                                      transcendentals=transcendentals,
                                      bytes_accessed=bytes_accessed),
    )(
        x, qid, kid,
        to_b16(params["wq_t"]), to_b16(params["wk_t"]),
        to_b16(params["wv_t"]), to_b16(params["wo_t"]),
        params["alpha1"], params["beta1"],
        to_b16(params["w1_t"]), params["b1"],
        to_b16(params["w2_t"]), params["b2"],
        params["alpha2"], params["beta2"],
    )


def encoder_block_ref(x, src_mask, params, *, h, eps=1e-6):
    """Pure-JAX f32 reference reproducing the PyTorch EncoderBlock forward exactly."""
    def ln(z, a, b):
        n = z.shape[-1]
        mean = jnp.mean(z, axis=-1, keepdims=True)
        c = z - mean
        std = jnp.sqrt(jnp.sum(c * c, axis=-1, keepdims=True) / (n - 1))
        return a * c / (std + eps) + b

    B, S, D = x.shape
    d_k = D // h

    xn = ln(x, params["alpha1"], params["beta1"])
    q = (xn @ params["wq_t"]).reshape(B, S, h, d_k).transpose(0, 2, 1, 3)
    k = (xn @ params["wk_t"]).reshape(B, S, h, d_k).transpose(0, 2, 1, 3)
    v = (xn @ params["wv_t"]).reshape(B, S, h, d_k).transpose(0, 2, 1, 3)
    scores = jnp.einsum("bhqd,bhkd->bhqk", q, k) / math.sqrt(d_k)
    m = src_mask[:, :, None, :]                   # (B,1,1,S)
    scores = jnp.where(m == 0, -1e9, scores)
    p = jax.nn.softmax(scores, axis=-1)
    attn = jnp.einsum("bhqk,bhkd->bhqd", p, v)
    attn = attn.transpose(0, 2, 1, 3).reshape(B, S, D) @ params["wo_t"]
    x1 = x + attn

    xn2 = ln(x1, params["alpha2"], params["beta2"])
    hid = jnp.maximum(xn2 @ params["w1_t"] + params["b1"], 0.0)
    ffn = hid @ params["w2_t"] + params["b2"]
    return x1 + ffn


if __name__ == "__main__":
    # Small shapes consistent with the module; lane-dense D/d_ff (multiples of 128),
    # B*S per grid step = 128 rows (fat matmul M), 2 parallel grid steps.
    B, S, D, H, D_FF = 8, 32, 128, 4, 256
    EPS = 1e-6

    key = jax.random.PRNGKey(0)
    keys = jax.random.split(key, 10)

    def w(k, shape, scale=0.05):
        return scale * jax.random.normal(k, shape, dtype=jnp.float32)

    params = {
        "wq_t": w(keys[0], (D, D)),
        "wk_t": w(keys[1], (D, D)),
        "wv_t": w(keys[2], (D, D)),
        "wo_t": w(keys[3], (D, D)),
        "alpha1": jnp.ones((1, D), jnp.float32),
        "beta1": jnp.zeros((1, D), jnp.float32),
        "w1_t": w(keys[4], (D, D_FF)),
        "b1": w(keys[5], (1, D_FF)),
        "w2_t": w(keys[6], (D_FF, D)),
        "b2": w(keys[7], (1, D)),
        "alpha2": jnp.ones((1, D), jnp.float32),
        "beta2": jnp.zeros((1, D), jnp.float32),
    }

    x = jax.random.normal(keys[8], (B, S, D), dtype=jnp.float32)
    # src_mask: 1 = valid key position, 0 = padding (varying lengths per sequence)
    lengths = jnp.array([S, S - 4, S, S // 2, S, 8, S - 8, S], dtype=jnp.int32)
    src_mask = (jnp.arange(S)[None, :] < lengths[:, None]).astype(jnp.float32).reshape(B, 1, S)

    out = encoder_block(x, src_mask, params, h=H, eps=EPS, block_b=4)
    out = jax.block_until_ready(out)

    ref = encoder_block_ref(x, src_mask, params, h=H, eps=EPS)

    assert out.shape == (B, S, D)
    assert bool(jnp.all(jnp.isfinite(out)))
    assert jnp.allclose(out, ref, atol=2e-2, rtol=2e-2), (
        f"mismatch vs reference, max abs diff = {float(jnp.max(jnp.abs(out - ref)))}")

    print("KERNEL_OK")
</pallas_src>

<mosaic_0001>
module attributes {stable_mosaic.version = 11 : i64} {
  func.func @_encoder_block_kernel(%arg0: i32, %arg1: memref<4x32x128xf32, #tpu.memory_space<vmem>>, %arg2: memref<1x128x1xi32, #tpu.memory_space<vmem>>, %arg3: memref<1x1x128xi32, #tpu.memory_space<vmem>>, %arg4: memref<128x128xbf16, #tpu.memory_space<vmem>>, %arg5: memref<128x128xbf16, #tpu.memory_space<vmem>>, %arg6: memref<128x128xbf16, #tpu.memory_space<vmem>>, %arg7: memref<128x128xbf16, #tpu.memory_space<vmem>>, %arg8: memref<1x128xf32, #tpu.memory_space<vmem>>, %arg9: memref<1x128xf32, #tpu.memory_space<vmem>>, %arg10: memref<128x256xbf16, #tpu.memory_space<vmem>>, %arg11: memref<1x256xf32, #tpu.memory_space<vmem>>, %arg12: memref<256x128xbf16, #tpu.memory_space<vmem>>, %arg13: memref<1x128xf32, #tpu.memory_space<vmem>>, %arg14: memref<1x128xf32, #tpu.memory_space<vmem>>, %arg15: memref<1x128xf32, #tpu.memory_space<vmem>>, %arg16: memref<4x32x128xf32, #tpu.memory_space<vmem>>) attributes {dimension_semantics = [#tpu.dimension_semantics<parallel>], iteration_bounds = array<i64: 2>, scalar_prefetch = 0 : i64, scratch_operands = 0 : i64, tpu.core_type = #tpu.core_type<tc>, window_params = [{transform_indices = @transform_0, window_bounds = array<i64: 4, 32, 128>}, {transform_indices = @transform_1, window_bounds = array<i64: 1, 128, 1>}, {transform_indices = @transform_2, window_bounds = array<i64: 1, 1, 128>}, {pipeline_mode = #tpu.pipeline_mode<synchronous>, transform_indices = @transform_3, window_bounds = array<i64: 128, 128>}, {pipeline_mode = #tpu.pipeline_mode<synchronous>, transform_indices = @transform_4, window_bounds = array<i64: 128, 128>}, {pipeline_mode = #tpu.pipeline_mode<synchronous>, transform_indices = @transform_5, window_bounds = array<i64: 128, 128>}, {pipeline_mode = #tpu.pipeline_mode<synchronous>, transform_indices = @transform_6, window_bounds = array<i64: 128, 128>}, {pipeline_mode = #tpu.pipeline_mode<synchronous>, transform_indices = @transform_7, window_bounds = array<i64: 1, 128>}, {pipeline_mode = #tpu.pipeline_mode<synchronous>, transform_indices = @transform_8, window_bounds = array<i64: 1, 128>}, {pipeline_mode = #tpu.pipeline_mode<synchronous>, transform_indices = @transform_9, window_bounds = array<i64: 128, 256>}, {pipeline_mode = #tpu.pipeline_mode<synchronous>, transform_indices = @transform_10, window_bounds = array<i64: 1, 256>}, {pipeline_mode = #tpu.pipeline_mode<synchronous>, transform_indices = @transform_11, window_bounds = array<i64: 256, 128>}, {pipeline_mode = #tpu.pipeline_mode<synchronous>, transform_indices = @transform_12, window_bounds = array<i64: 1, 128>}, {pipeline_mode = #tpu.pipeline_mode<synchronous>, transform_indices = @transform_13, window_bounds = array<i64: 1, 128>}, {pipeline_mode = #tpu.pipeline_mode<synchronous>, transform_indices = @transform_14, window_bounds = array<i64: 1, 128>}, {transform_indices = @transform_15, window_bounds = array<i64: 4, 32, 128>}]} {
    %c0 = arith.constant 0 : index
    %c0_0 = arith.constant 0 : index
    %c0_1 = arith.constant 0 : index
    %0 = vector.load %arg1[%c0, %c0_0, %c0_1] : memref<4x32x128xf32, #tpu.memory_space<vmem>>, vector<4x32x128xf32>
    %1 = vector.shape_cast %0 : vector<4x32x128xf32> to vector<128x128xf32>
    %c0_2 = arith.constant 0 : index
    %c0_3 = arith.constant 0 : index
    %c0_4 = arith.constant 0 : index
    %2 = vector.load %arg2[%c0_2, %c0_3, %c0_4] : memref<1x128x1xi32, #tpu.memory_space<vmem>>, vector<1x128x1xi32>
    %3 = vector.shape_cast %2 : vector<1x128x1xi32> to vector<128x1xi32>
    %c0_5 = arith.constant 0 : index
    %c0_6 = arith.constant 0 : index
    %c0_7 = arith.constant 0 : index
    %4 = vector.load %arg3[%c0_5, %c0_6, %c0_7] : memref<1x1x128xi32, #tpu.memory_space<vmem>>, vector<1x1x128xi32>
    %5 = vector.shape_cast %4 : vector<1x1x128xi32> to vector<1x128xi32>
    %6 = vector.broadcast %3 : vector<128x1xi32> to vector<128x128xi32>
    %7 = vector.broadcast %5 : vector<1x128xi32> to vector<128x128xi32>
    %8 = arith.cmpi eq, %6, %7 : vector<128x128xi32>
    %cst = arith.constant 0.000000e+00 : f32
    %cst_8 = arith.constant -1.000000e+09 : f32
    %9 = vector.broadcast %cst : f32 to vector<128x128xf32>
    %10 = vector.broadcast %cst_8 : f32 to vector<128x128xf32>
    %11 = arith.select %8, %9, %10 : vector<128x128xi1>, vector<128x128xf32>
    %c0_9 = arith.constant 0 : index
    %c0_10 = arith.constant 0 : index
    %12 = vector.load %arg8[%c0_9, %c0_10] : memref<1x128xf32, #tpu.memory_space<vmem>>, vector<1x128xf32>
    %c0_11 = arith.constant 0 : index
    %c0_12 = arith.constant 0 : index
    %13 = vector.load %arg9[%c0_11, %c0_12] : memref<1x128xf32, #tpu.memory_space<vmem>>, vector<1x128xf32>
    %cst_13 = arith.constant dense<0.000000e+00> : vector<128xf32>
    %14 = vector.multi_reduction <add>, %1, %cst_13 [1] : vector<128x128xf32> to vector<128xf32>
    %15 = vector.shape_cast %14 : vector<128xf32> to vector<128x1xf32>
    %cst_14 = arith.constant 1.280000e+02 : f32
    %16 = vector.broadcast %cst_14 : f32 to vector<128x1xf32>
    %17 = arith.divf %15, %16 : vector<128x1xf32>
    %18 = vector.broadcast %17 : vector<128x1xf32> to vector<128x128xf32>
    %19 = arith.subf %1, %18 : vector<128x128xf32>
    %20 = arith.mulf %19, %19 : vector<128x128xf32>
    %cst_15 = arith.constant dense<0.000000e+00> : vector<128xf32>
    %21 = vector.multi_reduction <add>, %20, %cst_15 [1] : vector<128x128xf32> to vector<128xf32>
    %22 = vector.shape_cast %21 : vector<128xf32> to vector<128x1xf32>
    %cst_16 = arith.constant 0.00787401571 : f32
    %23 = vector.broadcast %cst_16 : f32 to vector<128x1xf32>
    %24 = arith.mulf %22, %23 : vector<128x1xf32>
    %25 = math.sqrt %24 : vector<128x1xf32>
    %cst_17 = arith.constant 9.99999997E-7 : f32
    %26 = vector.broadcast %cst_17 : f32 to vector<128x1xf32>
    %27 = arith.addf %25, %26 : vector<128x1xf32>
    %28 = tpu.reciprocal %27 {approx = true} : vector<128x1xf32> -> vector<128x1xf32>
    %29 = vector.broadcast %12 : vector<1x128xf32> to vector<128x128xf32>
    %30 = arith.mulf %29, %19 : vector<128x128xf32>
    %31 = vector.broadcast %28 : vector<128x1xf32> to vector<128x128xf32>
    %32 = arith.mulf %30, %31 : vector<128x128xf32>
    %33 = vector.broadcast %13 : vector<1x128xf32> to vector<128x128xf32>
    %34 = arith.addf %32, %33 : vector<128x128xf32>
    %35 = arith.truncf %34 : vector<128x128xf32> to vector<128x128xbf16>
    %c0_18 = arith.constant 0 : index
    %c0_19 = arith.constant 0 : index
    %36 = vector.load %arg4[%c0_18, %c0_19] : memref<128x128xbf16, #tpu.memory_space<vmem>>, vector<128x128xbf16>
    %cst_20 = arith.constant dense<0.000000e+00> : vector<128x128xf32>
    %37 = tpu.matmul %35, %36, %cst_20 {dimension_numbers = #tpu.dot_dimension_numbers<[1], [0], [0], [1], [0, 0, 1, 1], [], []>} : vector<128x128xbf16>, vector<128x128xbf16>, vector<128x128xf32> -> vector<128x128xf32>
    %c0_21 = arith.constant 0 : index
    %c0_22 = arith.constant 0 : index
    %38 = vector.load %arg5[%c0_21, %c0_22] : memref<128x128xbf16, #tpu.memory_space<vmem>>, vector<128x128xbf16>
    %cst_23 = arith.constant dense<0.000000e+00> : vector<128x128xf32>
    %39 = tpu.matmul %35, %38, %cst_23 {dimension_numbers = #tpu.dot_dimension_numbers<[1], [0], [0], [1], [0, 0, 1, 1], [], []>} : vector<128x128xbf16>, vector<128x128xbf16>, vector<128x128xf32> -> vector<128x128xf32>
    %c0_24 = arith.constant 0 : index
    %c0_25 = arith.constant 0 : index
    %40 = vector.load %arg6[%c0_24, %c0_25] : memref<128x128xbf16, #tpu.memory_space<vmem>>, vector<128x128xbf16>
    %cst_26 = arith.constant dense<0.000000e+00> : vector<128x128xf32>
    %41 = tpu.matmul %35, %40, %cst_26 {dimension_numbers = #tpu.dot_dimension_numbers<[1], [0], [0], [1], [0, 0, 1, 1], [], []>} : vector<128x128xbf16>, vector<128x128xbf16>, vector<128x128xf32> -> vector<128x128xf32>
    %42 = arith.truncf %37 : vector<128x128xf32> to vector<128x128xbf16>
    %43 = arith.truncf %39 : vector<128x128xf32> to vector<128x128xbf16>
    %44 = arith.truncf %41 : vector<128x128xf32> to vector<128x128xbf16>
    %45 = vector.extract_strided_slice %42 {offsets = [0, 0], sizes = [128, 32], strides = [1, 1]} : vector<128x128xbf16> to vector<128x32xbf16>
    %46 = vector.extract_strided_slice %43 {offsets = [0, 0], sizes = [128, 32], strides = [1, 1]} : vector<128x128xbf16> to vector<128x32xbf16>
    %cst_27 = arith.constant dense<0.000000e+00> : vector<128x128xf32>
    %47 = tpu.matmul %45, %46, %cst_27 {dimension_numbers = #tpu.dot_dimension_numbers<[1], [1], [0], [0], [0, 0, 1, 0], [], []>} : vector<128x32xbf16>, vector<128x32xbf16>, vector<128x128xf32> -> vector<128x128xf32>
    %cst_28 = arith.constant 0.176776692 : f32
    %48 = vector.broadcast %cst_28 : f32 to vector<128x128xf32>
    %49 = arith.mulf %47, %48 : vector<128x128xf32>
    %50 = arith.addf %49, %11 : vector<128x128xf32>
    %cst_29 = arith.constant dense<0xFF800000> : vector<128xf32>
    %51 = vector.multi_reduction <maximumf>, %50, %cst_29 [1] : vector<128x128xf32> to vector<128xf32>
    %52 = vector.shape_cast %51 : vector<128xf32> to vector<128x1xf32>
    %53 = vector.broadcast %52 : vector<128x1xf32> to vector<128x128xf32>
    %54 = arith.subf %50, %53 : vector<128x128xf32>
    %55 = math.exp %54 : vector<128x128xf32>
    %cst_30 = arith.constant dense<0.000000e+00> : vector<128xf32>
    %56 = vector.multi_reduction <add>, %55, %cst_30 [1] : vector<128x128xf32> to vector<128xf32>
    %57 = vector.shape_cast %56 : vector<128xf32> to vector<128x1xf32>
    %58 = tpu.reciprocal %57 {approx = true} : vector<128x1xf32> -> vector<128x1xf32>
    %59 = vector.broadcast %58 : vector<128x1xf32> to vector<128x128xf32>
    %60 = arith.mulf %55, %59 : vector<128x128xf32>
    %61 = arith.truncf %60 : vector<128x128xf32> to vector<128x128xbf16>
    %62 = vector.extract_strided_slice %44 {offsets = [0, 0], sizes = [128, 32], strides = [1, 1]} : vector<128x128xbf16> to vector<128x32xbf16>
    %cst_31 = arith.constant dense<0.000000e+00> : vector<128x32xf32>
    %63 = tpu.matmul %61, %62, %cst_31 {dimension_numbers = #tpu.dot_dimension_numbers<[1], [0], [0], [1], [0, 0, 1, 1], [], []>} : vector<128x128xbf16>, vector<128x32xbf16>, vector<128x32xf32> -> vector<128x32xf32>
    %64 = vector.extract_strided_slice %42 {offsets = [0, 32], sizes = [128, 32], strides = [1, 1]} : vector<128x128xbf16> to vector<128x32xbf16>
    %65 = vector.extract_strided_slice %43 {offsets = [0, 32], sizes = [128, 32], strides = [1, 1]} : vector<128x128xbf16> to vector<128x32xbf16>
    %cst_32 = arith.constant dense<0.000000e+00> : vector<128x128xf32>
    %66 = tpu.matmul %64, %65, %cst_32 {dimension_numbers = #tpu.dot_dimension_numbers<[1], [1], [0], [0], [0, 0, 1, 0], [], []>} : vector<128x32xbf16>, vector<128x32xbf16>, vector<128x128xf32> -> vector<128x128xf32>
    %cst_33 = arith.constant 0.176776692 : f32
    %67 = vector.broadcast %cst_33 : f32 to vector<128x128xf32>
    %68 = arith.mulf %66, %67 : vector<128x128xf32>
    %69 = arith.addf %68, %11 : vector<128x128xf32>
    %cst_34 = arith.constant dense<0xFF800000> : vector<128xf32>
    %70 = vector.multi_reduction <maximumf>, %69, %cst_34 [1] : vector<128x128xf32> to vector<128xf32>
    %71 = vector.shape_cast %70 : vector<128xf32> to vector<128x1xf32>
    %72 = vector.broadcast %71 : vector<128x1xf32> to vector<128x128xf32>
    %73 = arith.subf %69, %72 : vector<128x128xf32>
    %74 = math.exp %73 : vector<128x128xf32>
    %cst_35 = arith.constant dense<0.000000e+00> : vector<128xf32>
    %75 = vector.multi_reduction <add>, %74, %cst_35 [1] : vector<128x128xf32> to vector<128xf32>
    %76 = vector.shape_cast %75 : vector<128xf32> to vector<128x1xf32>
    %77 = tpu.reciprocal %76 {approx = true} : vector<128x1xf32> -> vector<128x1xf32>
    %78 = vector.broadcast %77 : vector<128x1xf32> to vector<128x128xf32>
    %79 = arith.mulf %74, %78 : vector<128x128xf32>
    %80 = arith.truncf %79 : vector<128x128xf32> to vector<128x128xbf16>
    %81 = vector.extract_strided_slice %44 {offsets = [0, 32], sizes = [128, 32], strides = [1, 1]} : vector<128x128xbf16> to vector<128x32xbf16>
    %cst_36 = arith.constant dense<0.000000e+00> : vector<128x32xf32>
    %82 = tpu.matmul %80, %81, %cst_36 {dimension_numbers = #tpu.dot_dimension_numbers<[1], [0], [0], [1], [0, 0, 1, 1], [], []>} : vector<128x128xbf16>, vector<128x32xbf16>, vector<128x32xf32> -> vector<128x32xf32>
    %83 = vector.extract_strided_slice %42 {offsets = [0, 64], sizes = [128, 32], strides = [1, 1]} : vector<128x128xbf16> to vector<128x32xbf16>
    %84 = vector.extract_strided_slice %43 {offsets = [0, 64], sizes = [128, 32], strides = [1, 1]} : vector<128x128xbf16> to vector<128x32xbf16>
    %cst_37 = arith.constant dense<0.000000e+00> : vector<128x128xf32>
    %85 = tpu.matmul %83, %84, %cst_37 {dimension_numbers = #tpu.dot_dimension_numbers<[1], [1], [0], [0], [0, 0, 1, 0], [], []>} : vector<128x32xbf16>, vector<128x32xbf16>, vector<128x128xf32> -> vector<128x128xf32>
    %cst_38 = arith.constant 0.176776692 : f32
    %86 = vector.broadcast %cst_38 : f32 to vector<128x128xf32>
    %87 = arith.mulf %85, %86 : vector<128x128xf32>
    %88 = arith.addf %87, %11 : vector<128x128xf32>
    %cst_39 = arith.constant dense<0xFF800000> : vector<128xf32>
    %89 = vector.multi_reduction <maximumf>, %88, %cst_39 [1] : vector<128x128xf32> to vector<128xf32>
    %90 = vector.shape_cast %89 : vector<128xf32> to vector<128x1xf32>
    %91 = vector.broadcast %90 : vector<128x1xf32> to vector<128x128xf32>
    %92 = arith.subf %88, %91 : vector<128x128xf32>
    %93 = math.exp %92 : vector<128x128xf32>
    %cst_40 = arith.constant dense<0.000000e+00> : vector<128xf32>
    %94 = vector.multi_reduction <add>, %93, %cst_40 [1] : vector<128x128xf32> to vector<128xf32>
    %95 = vector.shape_cast %94 : vector<128xf32> to vector<128x1xf32>
    %96 = tpu.reciprocal %95 {approx = true} : vector<128x1xf32> -> vector<128x1xf32>
    %97 = vector.broadcast %96 : vector<128x1xf32> to vector<128x128xf32>
    %98 = arith.mulf %93, %97 : vector<128x128xf32>
    %99 = arith.truncf %98 : vector<128x128xf32> to vector<128x128xbf16>
    %100 = vector.extract_strided_slice %44 {offsets = [0, 64], sizes = [128, 32], strides = [1, 1]} : vector<128x128xbf16> to vector<128x32xbf16>
    %cst_41 = arith.constant dense<0.000000e+00> : vector<128x32xf32>
    %101 = tpu.matmul %99, %100, %cst_41 {dimension_numbers = #tpu.dot_dimension_numbers<[1], [0], [0], [1], [0, 0, 1, 1], [], []>} : vector<128x128xbf16>, vector<128x32xbf16>, vector<128x32xf32> -> vector<128x32xf32>
    %102 = vector.extract_strided_slice %42 {offsets = [0, 96], sizes = [128, 32], strides = [1, 1]} : vector<128x128xbf16> to vector<128x32xbf16>
    %103 = vector.extract_strided_slice %43 {offsets = [0, 96], sizes = [128, 32], strides = [1, 1]} : vector<128x128xbf16> to vector<128x32xbf16>
    %cst_42 = arith.constant dense<0.000000e+00> : vector<128x128xf32>
    %104 = tpu.matmul %102, %103, %cst_42 {dimension_numbers = #tpu.dot_dimension_numbers<[1], [1], [0], [0], [0, 0, 1, 0], [], []>} : vector<128x32xbf16>, vector<128x32xbf16>, vector<128x128xf32> -> vector<128x128xf32>
    %cst_43 = arith.constant 0.176776692 : f32
    %105 = vector.broadcast %cst_43 : f32 to vector<128x128xf32>
    %106 = arith.mulf %104, %105 : vector<128x128xf32>
    %107 = arith.addf %106, %11 : vector<128x128xf32>
    %cst_44 = arith.constant dense<0xFF800000> : vector<128xf32>
    %108 = vector.multi_reduction <maximumf>, %107, %cst_44 [1] : vector<128x128xf32> to vector<128xf32>
    %109 = vector.shape_cast %108 : vector<128xf32> to vector<128x1xf32>
    %110 = vector.broadcast %109 : vector<128x1xf32> to vector<128x128xf32>
    %111 = arith.subf %107, %110 : vector<128x128xf32>
    %112 = math.exp %111 : vector<128x128xf32>
    %cst_45 = arith.constant dense<0.000000e+00> : vector<128xf32>
    %113 = vector.multi_reduction <add>, %112, %cst_45 [1] : vector<128x128xf32> to vector<128xf32>
    %114 = vector.shape_cast %113 : vector<128xf32> to vector<128x1xf32>
    %115 = tpu.reciprocal %114 {approx = true} : vector<128x1xf32> -> vector<128x1xf32>
    %116 = vector.broadcast %115 : vector<128x1xf32> to vector<128x128xf32>
    %117 = arith.mulf %112, %116 : vector<128x128xf32>
    %118 = arith.truncf %117 : vector<128x128xf32> to vector<128x128xbf16>
    %119 = vector.extract_strided_slice %44 {offsets = [0, 96], sizes = [128, 32], strides = [1, 1]} : vector<128x128xbf16> to vector<128x32xbf16>
    %cst_46 = arith.constant dense<0.000000e+00> : vector<128x32xf32>
    %120 = tpu.matmul %118, %119, %cst_46 {dimension_numbers = #tpu.dot_dimension_numbers<[1], [0], [0], [1], [0, 0, 1, 1], [], []>} : vector<128x128xbf16>, vector<128x32xbf16>, vector<128x32xf32> -> vector<128x32xf32>
    %121 = tpu.concatenate %63, %82, %101, %120 in 1 : vector<128x32xf32>, vector<128x32xf32>, vector<128x32xf32>, vector<128x32xf32> -> vector<128x128xf32>
    %122 = arith.truncf %121 : vector<128x128xf32> to vector<128x128xbf16>
    %c0_47 = arith.constant 0 : index
    %c0_48 = arith.constant 0 : index
    %123 = vector.load %arg7[%c0_47, %c0_48] : memref<128x128xbf16, #tpu.memory_space<vmem>>, vector<128x128xbf16>
    %cst_49 = arith.constant dense<0.000000e+00> : vector<128x128xf32>
    %124 = tpu.matmul %122, %123, %cst_49 {dimension_numbers = #tpu.dot_dimension_numbers<[1], [0], [0], [1], [0, 0, 1, 1], [], []>} : vector<128x128xbf16>, vector<128x128xbf16>, vector<128x128xf32> -> vector<128x128xf32>
    %125 = arith.addf %1, %124 : vector<128x128xf32>
    %c0_50 = arith.constant 0 : index
    %c0_51 = arith.constant 0 : index
    %126 = vector.load %arg14[%c0_50, %c0_51] : memref<1x128xf32, #tpu.memory_space<vmem>>, vector<1x128xf32>
    %c0_52 = arith.constant 0 : index
    %c0_53 = arith.constant 0 : index
    %127 = vector.load %arg15[%c0_52, %c0_53] : memref<1x128xf32, #tpu.memory_space<vmem>>, vector<1x128xf32>
    %cst_54 = arith.constant dense<0.000000e+00> : vector<128xf32>
    %128 = vector.multi_reduction <add>, %125, %cst_54 [1] : vector<128x128xf32> to vector<128xf32>
    %129 = vector.shape_cast %128 : vector<128xf32> to vector<128x1xf32>
    %cst_55 = arith.constant 1.280000e+02 : f32
    %130 = vector.broadcast %cst_55 : f32 to vector<128x1xf32>
    %131 = arith.divf %129, %130 : vector<128x1xf32>
    %132 = vector.broadcast %131 : vector<128x1xf32> to vector<128x128xf32>
    %133 = arith.subf %125, %132 : vector<128x128xf32>
    %134 = arith.mulf %133, %133 : vector<128x128xf32>
    %cst_56 = arith.constant dense<0.000000e+00> : vector<128xf32>
    %135 = vector.multi_reduction <add>, %134, %cst_56 [1] : vector<128x128xf32> to vector<128xf32>
    %136 = vector.shape_cast %135 : vector<128xf32> to vector<128x1xf32>
    %cst_57 = arith.constant 0.00787401571 : f32
    %137 = vector.broadcast %cst_57 : f32 to vector<128x1xf32>
    %138 = arith.mulf %136, %137 : vector<128x1xf32>
    %139 = math.sqrt %138 : vector<128x1xf32>
    %cst_58 = arith.constant 9.99999997E-7 : f32
    %140 = vector.broadcast %cst_58 : f32 to vector<128x1xf32>
    %141 = arith.addf %139, %140 : vector<128x1xf32>
    %142 = tpu.reciprocal %141 {approx = true} : vector<128x1xf32> -> vector<128x1xf32>
    %143 = vector.broadcast %126 : vector<1x128xf32> to vector<128x128xf32>
    %144 = arith.mulf %143, %133 : vector<128x128xf32>
    %145 = vector.broadcast %142 : vector<128x1xf32> to vector<128x128xf32>
    %146 = arith.mulf %144, %145 : vector<128x128xf32>
    %147 = vector.broadcast %127 : vector<1x128xf32> to vector<128x128xf32>
    %148 = arith.addf %146, %147 : vector<128x128xf32>
    %149 = arith.truncf %148 : vector<128x128xf32> to vector<128x128xbf16>
    %c0_59 = arith.constant 0 : index
    %c0_60 = arith.constant 0 : index
    %150 = vector.load %arg10[%c0_59, %c0_60] : memref<128x256xbf16, #tpu.memory_space<vmem>>, vector<128x256xbf16>
    %cst_61 = arith.constant dense<0.000000e+00> : vector<128x256xf32>
    %151 = tpu.matmul %149, %150, %cst_61 {dimension_numbers = #tpu.dot_dimension_numbers<[1], [0], [0], [1], [0, 0, 1, 1], [], []>} : vector<128x128xbf16>, vector<128x256xbf16>, vector<128x256xf32> -> vector<128x256xf32>
    %c0_62 = arith.constant 0 : index
    %c0_63 = arith.constant 0 : index
    %152 = vector.load %arg11[%c0_62, %c0_63] : memref<1x256xf32, #tpu.memory_space<vmem>>, vector<1x256xf32>
    %153 = vector.broadcast %152 : vector<1x256xf32> to vector<128x256xf32>
    %154 = arith.addf %151, %153 : vector<128x256xf32>
    %cst_64 = arith.constant 0.000000e+00 : f32
    %155 = vector.broadcast %cst_64 : f32 to vector<128x256xf32>
    %156 = arith.maximumf %154, %155 : vector<128x256xf32>
    %157 = arith.truncf %156 : vector<128x256xf32> to vector<128x256xbf16>
    %c0_65 = arith.constant 0 : index
    %c0_66 = arith.constant 0 : index
    %158 = vector.load %arg12[%c0_65, %c0_66] : memref<256x128xbf16, #tpu.memory_space<vmem>>, vector<256x128xbf16>
    %cst_67 = arith.constant dense<0.000000e+00> : vector<128x128xf32>
    %159 = tpu.matmul %157, %158, %cst_67 {dimension_numbers = #tpu.dot_dimension_numbers<[1], [0], [0], [1], [0, 0, 1, 1], [], []>} : vector<128x256xbf16>, vector<256x128xbf16>, vector<128x128xf32> -> vector<128x128xf32>
    %c0_68 = arith.constant 0 : index
    %c0_69 = arith.constant 0 : index
    %160 = vector.load %arg13[%c0_68, %c0_69] : memref<1x128xf32, #tpu.memory_space<vmem>>, vector<1x128xf32>
    %161 = vector.broadcast %160 : vector<1x128xf32> to vector<128x128xf32>
    %162 = arith.addf %159, %161 : vector<128x128xf32>
    %163 = arith.addf %125, %162 : vector<128x128xf32>
    %164 = vector.shape_cast %163 : vector<128x128xf32> to vector<4x32x128xf32>
    %c0_70 = arith.constant 0 : index
    %c0_71 = arith.constant 0 : index
    %c0_72 = arith.constant 0 : index
    %165 = vector.load %arg16[%c0_70, %c0_71, %c0_72] : memref<4x32x128xf32, #tpu.memory_space<vmem>>, vector<4x32x128xf32>
    tpu.vector_store %arg16[%c0_70, %c0_71, %c0_72], %164 {strides = array<i32>} : memref<4x32x128xf32, #tpu.memory_space<vmem>>, vector<4x32x128xf32>,
    return
  }
  func.func @transform_0(%arg0: i32) -> (i32, i32, i32) {
    %c0_i32 = arith.constant 0 : i32
    %c0_i32_0 = arith.constant 0 : i32
    %c0_i32_1 = arith.constant 0 : i32
    return %arg0, %c0_i32, %c0_i32_0 : i32, i32, i32
  }
  func.func @transform_1(%arg0: i32) -> (i32, i32, i32) {
    %c0_i32 = arith.constant 0 : i32
    %c0_i32_0 = arith.constant 0 : i32
    %c0_i32_1 = arith.constant 0 : i32
    return %arg0, %c0_i32, %c0_i32_0 : i32, i32, i32
  }
  func.func @transform_2(%arg0: i32) -> (i32, i32, i32) {
    %c0_i32 = arith.constant 0 : i32
    %c0_i32_0 = arith.constant 0 : i32
    %c0_i32_1 = arith.constant 0 : i32
    return %arg0, %c0_i32, %c0_i32_0 : i32, i32, i32
  }
  func.func @transform_3(%arg0: i32) -> (i32, i32) {
    %c0_i32 = arith.constant 0 : i32
    %c0_i32_0 = arith.constant 0 : i32
    %c0_i32_1 = arith.constant 0 : i32
    return %c0_i32, %c0_i32_0 : i32, i32
  }
  func.func @transform_4(%arg0: i32) -> (i32, i32) {
    %c0_i32 = arith.constant 0 : i32
    %c0_i32_0 = arith.constant 0 : i32
    %c0_i32_1 = arith.constant 0 : i32
    return %c0_i32, %c0_i32_0 : i32, i32
  }
  func.func @transform_5(%arg0: i32) -> (i32, i32) {
    %c0_i32 = arith.constant 0 : i32
    %c0_i32_0 = arith.constant 0 : i32
    %c0_i32_1 = arith.constant 0 : i32
    return %c0_i32, %c0_i32_0 : i32, i32
  }
  func.func @transform_6(%arg0: i32) -> (i32, i32) {
    %c0_i32 = arith.constant 0 : i32
    %c0_i32_0 = arith.constant 0 : i32
    %c0_i32_1 = arith.constant 0 : i32
    return %c0_i32, %c0_i32_0 : i32, i32
  }
  func.func @transform_7(%arg0: i32) -> (i32, i32) {
    %c0_i32 = arith.constant 0 : i32
    %c0_i32_0 = arith.constant 0 : i32
    %c0_i32_1 = arith.constant 0 : i32
    return %c0_i32, %c0_i32_0 : i32, i32
  }
  func.func @transform_8(%arg0: i32) -> (i32, i32) {
    %c0_i32 = arith.constant 0 : i32
    %c0_i32_0 = arith.constant 0 : i32
    %c0_i32_1 = arith.constant 0 : i32
    return %c0_i32, %c0_i32_0 : i32, i32
  }
  func.func @transform_9(%arg0: i32) -> (i32, i32) {
    %c0_i32 = arith.constant 0 : i32
    %c0_i32_0 = arith.constant 0 : i32
    %c0_i32_1 = arith.constant 0 : i32
    return %c0_i32, %c0_i32_0 : i32, i32
  }
  func.func @transform_10(%arg0: i32) -> (i32, i32) {
    %c0_i32 = arith.constant 0 : i32
    %c0_i32_0 = arith.constant 0 : i32
    %c0_i32_1 = arith.constant 0 : i32
    return %c0_i32, %c0_i32_0 : i32, i32
  }
  func.func @transform_11(%arg0: i32) -> (i32, i32) {
    %c0_i32 = arith.constant 0 : i32
    %c0_i32_0 = arith.constant 0 : i32
    %c0_i32_1 = arith.constant 0 : i32
    return %c0_i32, %c0_i32_0 : i32, i32
  }
  func.func @transform_12(%arg0: i32) -> (i32, i32) {
    %c0_i32 = arith.constant 0 : i32
    %c0_i32_0 = arith.constant 0 : i32
    %c0_i32_1 = arith.constant 0 : i32
    return %c0_i32, %c0_i32_0 : i32, i32
  }
  func.func @transform_13(%arg0: i32) -> (i32, i32) {
    %c0_i32 = arith.constant 0 : i32
    %c0_i32_0 = arith.constant 0 : i32
    %c0_i32_1 = arith.constant 0 : i32
    return %c0_i32, %c0_i32_0 : i32, i32
  }
  func.func @transform_14(%arg0: i32) -> (i32, i32) {
    %c0_i32 = arith.constant 0 : i32
    %c0_i32_0 = arith.constant 0 : i32
    %c0_i32_1 = arith.constant 0 : i32
    return %c0_i32, %c0_i32_0 : i32, i32
  }
  func.func @transform_15(%arg0: i32) -> (i32, i32, i32) {
    %c0_i32 = arith.constant 0 : i32
    %c0_i32_0 = arith.constant 0 : i32
    %c0_i32_1 = arith.constant 0 : i32
    return %arg0, %c0_i32, %c0_i32_0 : i32, i32, i32
  }
}

</mosaic_0001>

<llo_original>
// kernel: tpu_custom_call.1
$region0: #{tpu_custom_call.1}
  #allocation0 [shape = 'u32[]', space=smem, size = 0x4, offset = 0x4, fixed_abs, tag = 'smem constant byte address 0x4 - core index']
  #allocation1 [shape = 'u32[144,128]{1,0:T(1,128)}', space=vmem, size = 0x12000, scoped, tag = 'internal scratch']
  %s0 = inlined_call_operand.vmem [shape: f32[8,32,128], index: 0, kind: input, shape index: {}]
  %s1 = inlined_call_operand.vmem [shape: s32[2,128,1], index: 1, kind: input, shape index: {}]
  %s2 = inlined_call_operand.vmem [shape: s32[2,1,128], index: 2, kind: input, shape index: {}]
  %s3 = inlined_call_operand.hbm [shape: bf16[128,128], index: 3, kind: input, shape index: {}]
  %s4 = inlined_call_operand.hbm [shape: bf16[128,128], index: 4, kind: input, shape index: {}]
  %s5 = inlined_call_operand.hbm [shape: bf16[128,128], index: 5, kind: input, shape index: {}]
  %s6 = inlined_call_operand.hbm [shape: bf16[128,128], index: 6, kind: input, shape index: {}]
  %s7 = inlined_call_operand.vmem [shape: f32[1,128], index: 7, kind: input, shape index: {}]
  %s8 = inlined_call_operand.vmem [shape: f32[1,128], index: 8, kind: input, shape index: {}]
  %s9 = inlined_call_operand.hbm [shape: bf16[128,256], index: 9, kind: input, shape index: {}]
  %s10 = inlined_call_operand.vmem [shape: f32[1,256], index: 10, kind: input, shape index: {}]
  %s11 = inlined_call_operand.hbm [shape: bf16[256,128], index: 11, kind: input, shape index: {}]
  %s12 = inlined_call_operand.vmem [shape: f32[1,128], index: 12, kind: input, shape index: {}]
  %s13 = inlined_call_operand.vmem [shape: f32[1,128], index: 13, kind: input, shape index: {}]
  %s14 = inlined_call_operand.vmem [shape: f32[1,128], index: 14, kind: input, shape index: {}]
  %s15 = inlined_call_operand.hbm [shape: f32[8,32,128], index: 15, kind: output, shape index: {}]
  %s16 = sld [smem:[#allocation0]]
  $region117: #{tpu_custom_call.1} parent=0
    _
  %s18 = ssub.s32 1, %s16
  %s19 = scalar_select 0, %s18, %s16
  $region1: #{tpu_custom_call.1} parent=0
    #allocation2 [shape = 'u8[32768]{0}', space=vmem, size = 0x8000, scoped, tag = 'input window, operand 3, single buffered']
    #allocation3 [shape = 's32[2]{0}', space=sflag, size = 0x8, scoped, tag = 'scoped memory for tpu_custom_call.1']
    #allocation4 [shape = 's32[2]{0}', space=sflag, size = 0x8, scoped, tag = 'scoped memory for tpu_custom_call.1']
    #allocation5 [shape = 'u8[32768]{0}', space=vmem, size = 0x8000, scoped, tag = 'input window, operand 4, single buffered']
    #allocation6 [shape = 's32[1]{0}', space=sflag, size = 0x4, scoped, tag = 'scoped memory for tpu_custom_call.1']
    #allocation7 [shape = 'u8[32768]{0}', space=vmem, size = 0x8000, scoped, tag = 'input window, operand 5, single buffered']
    #allocation8 [shape = 'u8[32768]{0}', space=vmem, size = 0x8000, scoped, tag = 'input window, operand 6, single buffered']
    #allocation9 [shape = 's32[1]{0}', space=sflag, size = 0x4, scoped, tag = 'scoped memory for tpu_custom_call.1']
    #allocation10 [shape = 'u8[65536]{0}', space=vmem, size = 0x10000, scoped, tag = 'input window, operand 9, single buffered']
    #allocation11 [shape = 'u8[65536]{0}', space=vmem, size = 0x10000, scoped, tag = 'input window, operand 11, single buffered']
    #allocation12 [shape = 's32[1]{0}', space=sflag, size = 0x4, scoped, tag = 'scoped memory for tpu_custom_call.1']
    #allocation13 [shape = 'u8[131072]{0}', space=vmem, size = 0x20000, scoped, tag = 'output window, operand 0']
    %20 = vsyncpa [#allocation3], 0
    %21 = vsyncpa [#allocation6], 0
    %22 = vsyncpa [#allocation9], 0
    %23 = vsyncpa [#allocation12], 0
    %24 = vsyncpa [#allocation4], 0
    %s25 = scalar_lea.sflag [#allocation4], 1
    %26 = vsyncpa %s25, 0
    loop: start=0, step=1, limit=4
    $region2: #{tpu_custom_call.1} parent=1 // loop_pre_header
      _
    $region3: #{tpu_custom_call.1} parent=1 // loop_header
      %s28 = sphi 0, %s32
      %p29 = scmp.ge.s32.totalorder %s28, 4
      %s38 = sphi 0, %s40
      %s41 = sphi 0, %s38
      %s42 = sphi 0, %s41
      %s58 = sphi 0, %s42
      %s64 = sphi 0, %s66
      %s67 = sphi 0, %s64
      %s68 = sphi 0, %s67
      %s84 = sphi 0, %s68
      %s90 = sphi 0, %s92
      %s93 = sphi 0, %s90
      %s94 = sphi 0, %s93
      %s110 = sphi 0, %s94
      %s114 = sphi 0, %s114
      %s116 = sphi 0, %s114
      %s117 = sphi 0, %s116
      %s131 = sphi 0, %s117
      %s135 = sphi 0, %s135
      %s137 = sphi 0, %s135
      %s138 = sphi 0, %s137
      %s152 = sphi 0, %s138
      %s156 = sphi 0, %s156
      %s158 = sphi 0, %s156
      %s159 = sphi 0, %s158
      %s173 = sphi 0, %s159
      %s177 = sphi 0, %s177
      %s179 = sphi 0, %s177
      %s180 = sphi 0, %s179
      %s194 = sphi 0, %s180
      %s198 = sphi 0, %s198
      %s200 = sphi 0, %s198
      %s201 = sphi 0, %s200
      %s215 = sphi 0, %s201
      %s219 = sphi 0, %s219
      %s221 = sphi 0, %s219
      %s222 = sphi 0, %s221
      %s236 = sphi 0, %s222
      %s240 = sphi 0, %s240
      %s242 = sphi 0, %s240
      %s243 = sphi 0, %s242
      %s257 = sphi 0, %s243
      %s261 = sphi 0, %s261
      %s263 = sphi 0, %s261
      %s264 = sphi 0, %s263
      %s278 = sphi 0, %s264
      %s282 = sphi 0, %s282
      %s284 = sphi 0, %s282
      %s285 = sphi 0, %s284
      %s299 = sphi 0, %s285
      %s303 = sphi 0, %s303
      %s305 = sphi 0, %s303
      %s306 = sphi 0, %s305
      %s320 = sphi 0, %s306
      %s324 = sphi 0, %s324
      %s326 = sphi 0, %s324
      %s327 = sphi 0, %s326
      %s341 = sphi 0, %s327
      %s345 = sphi 0, %s345
      %s347 = sphi 0, %s345
      %s348 = sphi 0, %s347
      %s362 = sphi 0, %s348
      %s368 = sphi 0, %s370
      %s371 = sphi 0, %s368
      %s372 = sphi 0, %s371
      %s388 = sphi 0, %s372
    $region4: #{tpu_custom_call.1} parent=1 // loop_header_branch
      %31 = sbr.rel (%p29) target = $region8
    $region5: #{tpu_custom_call.1} parent=1 // loop_body
      %s33 = ssub.s32 %s28, 1
      %s34 = ssub.s32 %s28, 2
      %s35 = sadd.s32 %s28, 1
      %s36 = ssub.s32 %s28, %s35
      %p37 = scmp.eq.s32.totalorder %s36, 0
      %s39 = sadd.s32 %s38, 1
      %s40 = scalar_select %p37, %s38, %s39
      %p43 = pneg %p37
      %p44 = scmp.eq.s32.totalorder %s28, 1
      %p45 = por %p43, %p44
      %p46 = scmp.ne.s32.totalorder %s38, %s41
      %p47 = scmp.eq.s32.totalorder %s28, 0
      %p48 = por %p46, %p47
      %p49 = scmp.ne.s32.totalorder %s38, %s41
      %p50 = scmp.eq.s32.totalorder %s33, 1
      %p51 = por %p49, %p50
      %p52 = scmp.ne.s32.totalorder %s41, %s42
      %p53 = scmp.eq.s32.totalorder %s33, 0
      %p54 = por %p52, %p53
      %p55 = scmp.ne.s32.totalorder %s41, %s42
      %p56 = scmp.eq.s32.totalorder %s34, 1
      %p57 = por %p55, %p56
      %p59 = scmp.ne.s32.totalorder %s42, %s58
      %p60 = scmp.eq.s32.totalorder %s34, 0
      %p61 = por %p59, %p60
      %s62 = ssub.s32 %s28, %s35
      %p63 = scmp.eq.s32.totalorder %s62, 0
      %s65 = sadd.s32 %s64, 1
      %s66 = scalar_select %p63, %s64, %s65
      %p69 = pneg %p63
      %p70 = scmp.eq.s32.totalorder %s28, 1
      %p71 = por %p69, %p70
      %p72 = scmp.ne.s32.totalorder %s64, %s67
      %p73 = scmp.eq.s32.totalorder %s28, 0
      %p74 = por %p72, %p73
      %p75 = scmp.ne.s32.totalorder %s64, %s67
      %p76 = scmp.eq.s32.totalorder %s33, 1
      %p77 = por %p75, %p76
      %p78 = scmp.ne.s32.totalorder %s67, %s68
      %p79 = scmp.eq.s32.totalorder %s33, 0
      %p80 = por %p78, %p79
      %p81 = scmp.ne.s32.totalorder %s67, %s68
      %p82 = scmp.eq.s32.totalorder %s34, 1
      %p83 = por %p81, %p82
      %p85 = scmp.ne.s32.totalorder %s68, %s84
      %p86 = scmp.eq.s32.totalorder %s34, 0
      %p87 = por %p85, %p86
      %s88 = ssub.s32 %s28, %s35
      %p89 = scmp.eq.s32.totalorder %s88, 0
      %s91 = sadd.s32 %s90, 1
      %s92 = scalar_select %p89, %s90, %s91
      %p95 = pneg %p89
      %p96 = scmp.eq.s32.totalorder %s28, 1
      %p97 = por %p95, %p96
      %p98 = scmp.ne.s32.totalorder %s90, %s93
      %p99 = scmp.eq.s32.totalorder %s28, 0
      %p100 = por %p98, %p99
      %p101 = scmp.ne.s32.totalorder %s90, %s93
      %p102 = scmp.eq.s32.totalorder %s33, 1
      %p103 = por %p101, %p102
      %p104 = scmp.ne.s32.totalorder %s93, %s94
      %p105 = scmp.eq.s32.totalorder %s33, 0
      %p106 = por %p104, %p105
      %p107 = scmp.ne.s32.totalorder %s93, %s94
      %p108 = scmp.eq.s32.totalorder %s34, 1
      %p109 = por %p107, %p108
      %p111 = scmp.ne.s32.totalorder %s94, %s110
      %p112 = scmp.eq.s32.totalorder %s34, 0
      %p113 = por %p111, %p112
      %s115 = sadd.s32 %s114, 1
      %p118 = scmp.eq.s32.totalorder %s28, 1
      %p119 = scmp.ne.s32.totalorder %s114, %s116
      %p120 = scmp.eq.s32.totalorder %s28, 0
      %p121 = por %p119, %p120
      %p122 = scmp.ne.s32.totalorder %s114, %s116
      %p123 = scmp.eq.s32.totalorder %s33, 1
      %p124 = por %p122, %p123
      %p125 = scmp.ne.s32.totalorder %s116, %s117
      %p126 = scmp.eq.s32.totalorder %s33, 0
      %p127 = por %p125, %p126
      %p128 = scmp.ne.s32.totalorder %s116, %s117
      %p129 = scmp.eq.s32.totalorder %s34, 1
      %p130 = por %p128, %p129
      %p132 = scmp.ne.s32.totalorder %s117, %s131
      %p133 = scmp.eq.s32.totalorder %s34, 0
      %p134 = por %p132, %p133
      %s136 = sadd.s32 %s135, 1
      %p139 = scmp.eq.s32.totalorder %s28, 1
      %p140 = scmp.ne.s32.totalorder %s135, %s137
      %p141 = scmp.eq.s32.totalorder %s28, 0
      %p142 = por %p140, %p141
      %p143 = scmp.ne.s32.totalorder %s135, %s137
      %p144 = scmp.eq.s32.totalorder %s33, 1
      %p145 = por %p143, %p144
      %p146 = scmp.ne.s32.totalorder %s137, %s138
      %p147 = scmp.eq.s32.totalorder %s33, 0
      %p148 = por %p146, %p147
      %p149 = scmp.ne.s32.totalorder %s137, %s138
      %p150 = scmp.eq.s32.totalorder %s34, 1
      %p151 = por %p149, %p150
      %p153 = scmp.ne.s32.totalorder %s138, %s152
      %p154 = scmp.eq.s32.totalorder %s34, 0
      %p155 = por %p153, %p154
      %s157 = sadd.s32 %s156, 1
      %p160 = scmp.eq.s32.totalorder %s28, 1
      %p161 = scmp.ne.s32.totalorder %s156, %s158
      %p162 = scmp.eq.s32.totalorder %s28, 0
      %p163 = por %p161, %p162
      %p164 = scmp.ne.s32.totalorder %s156, %s158
      %p165 = scmp.eq.s32.totalorder %s33, 1
      %p166 = por %p164, %p165
      %p167 = scmp.ne.s32.totalorder %s158, %s159
      %p168 = scmp.eq.s32.totalorder %s33, 0
      %p169 = por %p167, %p168
      %p170 = scmp.ne.s32.totalorder %s158, %s159
      %p171 = scmp.eq.s32.totalorder %s34, 1
      %p172 = por %p170, %p171
      %p174 = scmp.ne.s32.totalorder %s159, %s173
      %p175 = scmp.eq.s32.totalorder %s34, 0
      %p176 = por %p174, %p175
      %s178 = sadd.s32 %s177, 1
      %p181 = scmp.eq.s32.totalorder %s28, 1
      %p182 = scmp.ne.s32.totalorder %s177, %s179
      %p183 = scmp.eq.s32.totalorder %s28, 0
      %p184 = por %p182, %p183
      %p185 = scmp.ne.s32.totalorder %s177, %s179
      %p186 = scmp.eq.s32.totalorder %s33, 1
      %p187 = por %p185, %p186
      %p188 = scmp.ne.s32.totalorder %s179, %s180
      %p189 = scmp.eq.s32.totalorder %s33, 0
      %p190 = por %p188, %p189
      %p191 = scmp.ne.s32.totalorder %s179, %s180
      %p192 = scmp.eq.s32.totalorder %s34, 1
      %p193 = por %p191, %p192
      %p195 = scmp.ne.s32.totalorder %s180, %s194
      %p196 = scmp.eq.s32.totalorder %s34, 0
      %p197 = por %p195, %p196
      %s199 = sadd.s32 %s198, 1
      %p202 = scmp.eq.s32.totalorder %s28, 1
      %p203 = scmp.ne.s32.totalorder %s198, %s200
      %p204 = scmp.eq.s32.totalorder %s28, 0
      %p205 = por %p203, %p204
      %p206 = scmp.ne.s32.totalorder %s198, %s200
      %p207 = scmp.eq.s32.totalorder %s33, 1
      %p208 = por %p206, %p207
      %p209 = scmp.ne.s32.totalorder %s200, %s201
      %p210 = scmp.eq.s32.totalorder %s33, 0
      %p211 = por %p209, %p210
      %p212 = scmp.ne.s32.totalorder %s200, %s201
      %p213 = scmp.eq.s32.totalorder %s34, 1
      %p214 = por %p212, %p213
      %p216 = scmp.ne.s32.totalorder %s201, %s215
      %p217 = scmp.eq.s32.totalorder %s34, 0
      %p218 = por %p216, %p217
      %s220 = sadd.s32 %s219, 1
      %p223 = scmp.eq.s32.totalorder %s28, 1
      %p224 = scmp.ne.s32.totalorder %s219, %s221
      %p225 = scmp.eq.s32.totalorder %s28, 0
      %p226 = por %p224, %p225
      %p227 = scmp.ne.s32.totalorder %s219, %s221
      %p228 = scmp.eq.s32.totalorder %s33, 1
      %p229 = por %p227, %p228
      %p230 = scmp.ne.s32.totalorder %s221, %s222
      %p231 = scmp.eq.s32.totalorder %s33, 0
      %p232 = por %p230, %p231
      %p233 = scmp.ne.s32.totalorder %s221, %s222
      %p234 = scmp.eq.s32.totalorder %s34, 1
      %p235 = por %p233, %p234
      %p237 = scmp.ne.s32.totalorder %s222, %s236
      %p238 = scmp.eq.s32.totalorder %s34, 0
      %p239 = por %p237, %p238
      %s241 = sadd.s32 %s240, 1
      %p244 = scmp.eq.s32.totalorder %s28, 1
      %p245 = scmp.ne.s32.totalorder %s240, %s242
      %p246 = scmp.eq.s32.totalorder %s28, 0
      %p247 = por %p245, %p246
      %p248 = scmp.ne.s32.totalorder %s240, %s242
      %p249 = scmp.eq.s32.totalorder %s33, 1
      %p250 = por %p248, %p249
      %p251 = scmp.ne.s32.totalorder %s242, %s243
      %p252 = scmp.eq.s32.totalorder %s33, 0
      %p253 = por %p251, %p252
      %p254 = scmp.ne.s32.totalorder %s242, %s243
      %p255 = scmp.eq.s32.totalorder %s34, 1
      %p256 = por %p254, %p255
      %p258 = scmp.ne.s32.totalorder %s243, %s257
      %p259 = scmp.eq.s32.totalorder %s34, 0
      %p260 = por %p258, %p259
      %s262 = sadd.s32 %s261, 1
      %p265 = scmp.eq.s32.totalorder %s28, 1
      %p266 = scmp.ne.s32.totalorder %s261, %s263
      %p267 = scmp.eq.s32.totalorder %s28, 0
      %p268 = por %p266, %p267
      %p269 = scmp.ne.s32.totalorder %s261, %s263
      %p270 = scmp.eq.s32.totalorder %s33, 1
      %p271 = por %p269, %p270
      %p272 = scmp.ne.s32.totalorder %s263, %s264
      %p273 = scmp.eq.s32.totalorder %s33, 0
      %p274 = por %p272, %p273
      %p275 = scmp.ne.s32.totalorder %s263, %s264
      %p276 = scmp.eq.s32.totalorder %s34, 1
      %p277 = por %p275, %p276
      %p279 = scmp.ne.s32.totalorder %s264, %s278
      %p280 = scmp.eq.s32.totalorder %s34, 0
      %p281 = por %p279, %p280
      %s283 = sadd.s32 %s282, 1
      %p286 = scmp.eq.s32.totalorder %s28, 1
      %p287 = scmp.ne.s32.totalorder %s282, %s284
      %p288 = scmp.eq.s32.totalorder %s28, 0
      %p289 = por %p287, %p288
      %p290 = scmp.ne.s32.totalorder %s282, %s284
      %p291 = scmp.eq.s32.totalorder %s33, 1
      %p292 = por %p290, %p291
      %p293 = scmp.ne.s32.totalorder %s284, %s285
      %p294 = scmp.eq.s32.totalorder %s33, 0
      %p295 = por %p293, %p294
      %p296 = scmp.ne.s32.totalorder %s284, %s285
      %p297 = scmp.eq.s32.totalorder %s34, 1
      %p298 = por %p296, %p297
      %p300 = scmp.ne.s32.totalorder %s285, %s299
      %p301 = scmp.eq.s32.totalorder %s34, 0
      %p302 = por %p300, %p301
      %s304 = sadd.s32 %s303, 1
      %p307 = scmp.eq.s32.totalorder %s28, 1
      %p308 = scmp.ne.s32.totalorder %s303, %s305
      %p309 = scmp.eq.s32.totalorder %s28, 0
      %p310 = por %p308, %p309
      %p311 = scmp.ne.s32.totalorder %s303, %s305
      %p312 = scmp.eq.s32.totalorder %s33, 1
      %p313 = por %p311, %p312
      %p314 = scmp.ne.s32.totalorder %s305, %s306
      %p315 = scmp.eq.s32.totalorder %s33, 0
      %p316 = por %p314, %p315
      %p317 = scmp.ne.s32.totalorder %s305, %s306
      %p318 = scmp.eq.s32.totalorder %s34, 1
      %p319 = por %p317, %p318
      %p321 = scmp.ne.s32.totalorder %s306, %s320
      %p322 = scmp.eq.s32.totalorder %s34, 0
      %p323 = por %p321, %p322
      %s325 = sadd.s32 %s324, 1
      %p328 = scmp.eq.s32.totalorder %s28, 1
      %p329 = scmp.ne.s32.totalorder %s324, %s326
      %p330 = scmp.eq.s32.totalorder %s28, 0
      %p331 = por %p329, %p330
      %p332 = scmp.ne.s32.totalorder %s324, %s326
      %p333 = scmp.eq.s32.totalorder %s33, 1
      %p334 = por %p332, %p333
      %p335 = scmp.ne.s32.totalorder %s326, %s327
      %p336 = scmp.eq.s32.totalorder %s33, 0
      %p337 = por %p335, %p336
      %p338 = scmp.ne.s32.totalorder %s326, %s327
      %p339 = scmp.eq.s32.totalorder %s34, 1
      %p340 = por %p338, %p339
      %p342 = scmp.ne.s32.totalorder %s327, %s341
      %p343 = scmp.eq.s32.totalorder %s34, 0
      %p344 = por %p342, %p343
      %s346 = sadd.s32 %s345, 1
      %p349 = scmp.eq.s32.totalorder %s28, 1
      %p350 = scmp.ne.s32.totalorder %s345, %s347
      %p351 = scmp.eq.s32.totalorder %s28, 0
      %p352 = por %p350, %p351
      %p353 = scmp.ne.s32.totalorder %s345, %s347
      %p354 = scmp.eq.s32.totalorder %s33, 1
      %p355 = por %p353, %p354
      %p356 = scmp.ne.s32.totalorder %s347, %s348
      %p357 = scmp.eq.s32.totalorder %s33, 0
      %p358 = por %p356, %p357
      %p359 = scmp.ne.s32.totalorder %s347, %s348
      %p360 = scmp.eq.s32.totalorder %s34, 1
      %p361 = por %p359, %p360
      %p363 = scmp.ne.s32.totalorder %s348, %s362
      %p364 = scmp.eq.s32.totalorder %s34, 0
      %p365 = por %p363, %p364
      %s366 = ssub.s32 %s28, %s35
      %p367 = scmp.eq.s32.totalorder %s366, 0
      %s369 = sadd.s32 %s368, 1
      %s370 = scalar_select %p367, %s368, %s369
      %p373 = pneg %p367
      %p374 = scmp.eq.s32.totalorder %s28, 1
      %p375 = por %p373, %p374
      %p376 = scmp.ne.s32.totalorder %s368, %s371
      %p377 = scmp.eq.s32.totalorder %s28, 0
      %p378 = por %p376, %p377
      %p379 = scmp.ne.s32.totalorder %s368, %s371
      %p380 = scmp.eq.s32.totalorder %s33, 1
      %p381 = por %p379, %p380
      %p382 = scmp.ne.s32.totalorder %s371, %s372
      %p383 = scmp.eq.s32.totalorder %s33, 0
      %p384 = por %p382, %p383
      %p385 = scmp.ne.s32.totalorder %s371, %s372
      %p386 = scmp.eq.s32.totalorder %s34, 1
      %p387 = por %p385, %p386
      %p389 = scmp.ne.s32.totalorder %s372, %s388
      %p390 = scmp.eq.s32.totalorder %s34, 0
      %p391 = por %p389, %p390
      %p392 = scmp.le.s32.totalorder 1, %s28
      %p393 = scmp.lt.s32.totalorder %s28, 3
      %p394 = pnand %p392, %p393
      %p395 = pneg %p394
      // Predicated region
      $region9: #{tpu_custom_call.1} parent=5 // pred_check
        _
      $region10: #{tpu_custom_call.1} parent=5 // pred_check_branch
        %397 = sbr.rel (%p394) target = $region12
      $region11: #{tpu_custom_call.1} parent=5 // pred_region
        %s398 = ssub.s32 %s28, 1
        // Predicated region
        $region13: #{tpu_custom_call.1} parent=11 // pred_check
          %p399 = pneg %p127
        $region14: #{tpu_custom_call.1} parent=11 // pred_check_branch
          %401 = sbr.rel (%p399) target = $region16
        $region15: #{tpu_custom_call.1} parent=11 // pred_region
          %s403 = ssub.s32 1024, 1024
          %404 = vsyncadd [#allocation3], %s403
          %s405 = sshll.u32 [#allocation2], 4
          %s406 = int_to_ptr.vmem [resolvable:$true] %s405
          %411 = dma.hbm_to_vmem [thread:$0]  %s3, 1024, %s406, [#allocation3], 64, 64, 4
        $region16: #{tpu_custom_call.1} parent=11 // pred_fallthru
          _
        // Predicated region
        $region17: #{tpu_custom_call.1} parent=11 // pred_check
          %p412 = pneg %p148
        $region18: #{tpu_custom_call.1} parent=11 // pred_check_branch
          %414 = sbr.rel (%p412) target = $region20
        $region19: #{tpu_custom_call.1} parent=11 // pred_region
          %s416 = ssub.s32 1024, 1024
          %417 = vsyncadd [#allocation6], %s416
          %s418 = sshll.u32 [#allocation5], 4
          %s419 = int_to_ptr.vmem [resolvable:$true] %s418
          %424 = dma.hbm_to_vmem [thread:$0]  %s4, 1024, %s419, [#allocation6], 64, 64, 4
        $region20: #{tpu_custom_call.1} parent=11 // pred_fallthru
          _
        // Predicated region
        $region21: #{tpu_custom_call.1} parent=11 // pred_check
          %p425 = pneg %p169
        $region22: #{tpu_custom_call.1} parent=11 // pred_check_branch
          %427 = sbr.rel (%p425) target = $region24
        $region23: #{tpu_custom_call.1} parent=11 // pred_region
          %s429 = ssub.s32 1024, 1024
          %430 = vsyncadd [#allocation6], %s429
          %s431 = sshll.u32 [#allocation7], 4
          %s432 = int_to_ptr.vmem [resolvable:$true] %s431
          %437 = dma.hbm_to_vmem [thread:$0]  %s5, 1024, %s432, [#allocation6], 64, 64, 4
        $region24: #{tpu_custom_call.1} parent=11 // pred_fallthru
          _
        // Predicated region
        $region25: #{tpu_custom_call.1} parent=11 // pred_check
          %p438 = pneg %p190
        $region26: #{tpu_custom_call.1} parent=11 // pred_check_branch
          %440 = sbr.rel (%p438) target = $region28
        $region27: #{tpu_custom_call.1} parent=11 // pred_region
          %s442 = ssub.s32 1024, 1024
          %443 = vsyncadd [#allocation9], %s442
          %s444 = sshll.u32 [#allocation8], 4
          %s445 = int_to_ptr.vmem [resolvable:$true] %s444
          %450 = dma.hbm_to_vmem [thread:$0]  %s6, 1024, %s445, [#allocation9], 64, 64, 4
        $region28: #{tpu_custom_call.1} parent=11 // pred_fallthru
          _
        // Predicated region
        $region29: #{tpu_custom_call.1} parent=11 // pred_check
          %p451 = pneg %p211
        $region30: #{tpu_custom_call.1} parent=11 // pred_check_branch
          %453 = sbr.rel (%p451) target = $region32
        $region31: #{tpu_custom_call.1} parent=11 // pred_region
          _
        $region32: #{tpu_custom_call.1} parent=11 // pred_fallthru
          _
        // Predicated region
        $region33: #{tpu_custom_call.1} parent=11 // pred_check
          %p454 = pneg %p232
        $region34: #{tpu_custom_call.1} parent=11 // pred_check_branch
          %456 = sbr.rel (%p454) target = $region36
        $region35: #{tpu_custom_call.1} parent=11 // pred_region
          _
        $region36: #{tpu_custom_call.1} parent=11 // pred_fallthru
          _
        // Predicated region
        $region37: #{tpu_custom_call.1} parent=11 // pred_check
          %p457 = pneg %p253
        $region38: #{tpu_custom_call.1} parent=11 // pred_check_branch
          %459 = sbr.rel (%p457) target = $region40
        $region39: #{tpu_custom_call.1} parent=11 // pred_region
          %s461 = ssub.s32 2048, 2048
          %462 = vsyncadd [#allocation9], %s461
          %s463 = sshll.u32 [#allocation10], 4
          %s464 = int_to_ptr.vmem [resolvable:$true] %s463
          %469 = dma.hbm_to_vmem [thread:$0]  %s9, 2048, %s464, [#allocation9], 128, 128, 8
        $region40: #{tpu_custom_call.1} parent=11 // pred_fallthru
          _
        // Predicated region
        $region41: #{tpu_custom_call.1} parent=11 // pred_check
          %p470 = pneg %p274
        $region42: #{tpu_custom_call.1} parent=11 // pred_check_branch
          %472 = sbr.rel (%p470) target = $region44
        $region43: #{tpu_custom_call.1} parent=11 // pred_region
          _
        $region44: #{tpu_custom_call.1} parent=11 // pred_fallthru
          _
        // Predicated region
        $region45: #{tpu_custom_call.1} parent=11 // pred_check
          %p473 = pneg %p295
        $region46: #{tpu_custom_call.1} parent=11 // pred_check_branch
          %475 = sbr.rel (%p473) target = $region48
        $region47: #{tpu_custom_call.1} parent=11 // pred_region
          %s477 = ssub.s32 2048, 2048
          %478 = vsyncadd [#allocation12], %s477
          %s479 = sshll.u32 [#allocation11], 4
          %s480 = int_to_ptr.vmem [resolvable:$true] %s479
          %485 = dma.hbm_to_vmem [thread:$0]  %s11, 2048, %s480, [#allocation12], 64, 64, 4
        $region48: #{tpu_custom_call.1} parent=11 // pred_fallthru
          _
        // Predicated region
        $region49: #{tpu_custom_call.1} parent=11 // pred_check
          %p486 = pneg %p316
        $region50: #{tpu_custom_call.1} parent=11 // pred_check_branch
          %488 = sbr.rel (%p486) target = $region52
        $region51: #{tpu_custom_call.1} parent=11 // pred_region
          _
        $region52: #{tpu_custom_call.1} parent=11 // pred_fallthru
          _
        // Predicated region
        $region53: #{tpu_custom_call.1} parent=11 // pred_check
          %p489 = pneg %p337
        $region54: #{tpu_custom_call.1} parent=11 // pred_check_branch
          %491 = sbr.rel (%p489) target = $region56
        $region55: #{tpu_custom_call.1} parent=11 // pred_region
          _
        $region56: #{tpu_custom_call.1} parent=11 // pred_fallthru
          _
        // Predicated region
        $region57: #{tpu_custom_call.1} parent=11 // pred_check
          %p492 = pneg %p358
        $region58: #{tpu_custom_call.1} parent=11 // pred_check_branch
          %494 = sbr.rel (%p492) target = $region60
        $region59: #{tpu_custom_call.1} parent=11 // pred_region
          _
        $region60: #{tpu_custom_call.1} parent=11 // pred_fallthru
          _
      $region12: #{tpu_custom_call.1} parent=5 // pred_fallthru
        _
      %p495 = scmp.lt.s32.totalorder %s28, 2
      // Predicated region
      $region61: #{tpu_custom_call.1} parent=5 // pred_check
        %p496 = pneg %p495
      $region62: #{tpu_custom_call.1} parent=5 // pred_check_branch
        %498 = sbr.rel (%p496) target = $region64
      $region63: #{tpu_custom_call.1} parent=5 // pred_region
        // Predicated region
        $region65: #{tpu_custom_call.1} parent=63 // pred_check
          %p499 = pneg %p48
        $region66: #{tpu_custom_call.1} parent=63 // pred_check_branch
          %501 = sbr.rel (%p499) target = $region68
        $region67: #{tpu_custom_call.1} parent=63 // pred_region
          %s502 = smul.u32 4, %s28
          %p503 = scmp.lt.s32.totalorder %s502, 7
          %s504 = scalar_select %p503, %s502, 7
          %s505 = smul.addr %s504, 4
          %s506 = smul.addr %s505, 8
          %s507 = scalar_lea.vmem %s0, %s506
          %s508 = smul.u32 4, %s28
        $region68: #{tpu_custom_call.1} parent=63 // pred_fallthru
          _
        // Predicated region
        $region69: #{tpu_custom_call.1} parent=63 // pred_check
          %p509 = pneg %p74
        $region70: #{tpu_custom_call.1} parent=63 // pred_check_branch
          %511 = sbr.rel (%p509) target = $region72
        $region71: #{tpu_custom_call.1} parent=63 // pred_region
          %p512 = scmp.lt.s32.totalorder %s28, 1
          %s513 = scalar_select %p512, %s28, 1
          %s514 = smul.addr %s513, 16
          %s515 = smul.addr %s514, 8
          %s516 = scalar_lea.vmem %s1, %s515
        $region72: #{tpu_custom_call.1} parent=63 // pred_fallthru
          _
        // Predicated region
        $region73: #{tpu_custom_call.1} parent=63 // pred_check
          %p517 = pneg %p100
        $region74: #{tpu_custom_call.1} parent=63 // pred_check_branch
          %519 = sbr.rel (%p517) target = $region76
        $region75: #{tpu_custom_call.1} parent=63 // pred_region
          %p520 = scmp.lt.s32.totalorder %s28, 1
          %s521 = scalar_select %p520, %s28, 1
          %s522 = scalar_lea.vmem %s2, %s521
        $region76: #{tpu_custom_call.1} parent=63 // pred_fallthru
          _
      $region64: #{tpu_custom_call.1} parent=5 // pred_fallthru
        _
      %p523 = scmp.le.s32.totalorder 1, %s28
      %p524 = scmp.lt.s32.totalorder %s28, 3
      %p525 = pnand %p523, %p524
      %p526 = pneg %p525
      // Predicated region
      $region77: #{tpu_custom_call.1} parent=5 // pred_check
        _
      $region78: #{tpu_custom_call.1} parent=5 // pred_check_branch
        %528 = sbr.rel (%p525) target = $region80
      $region79: #{tpu_custom_call.1} parent=5 // pred_region
        %s529 = ssub.s32 %s28, 1
        // Predicated region
        $region81: #{tpu_custom_call.1} parent=79 // pred_check
          %p530 = pneg %p127
        $region82: #{tpu_custom_call.1} parent=79 // pred_check_branch
          %532 = sbr.rel (%p530) target = $region84
        $region83: #{tpu_custom_call.1} parent=79 // pred_region
          %533 = dma.done [#allocation3], 1024
        $region84: #{tpu_custom_call.1} parent=79 // pred_fallthru
          _
        // Predicated region
        $region85: #{tpu_custom_call.1} parent=79 // pred_check
          %p534 = pneg %p148
        $region86: #{tpu_custom_call.1} parent=79 // pred_check_branch
          %536 = sbr.rel (%p534) target = $region88
        $region87: #{tpu_custom_call.1} parent=79 // pred_region
          %537 = dma.done [#allocation6], 1024
        $region88: #{tpu_custom_call.1} parent=79 // pred_fallthru
          _
        // Predicated region
        $region89: #{tpu_custom_call.1} parent=79 // pred_check
          %p538 = pneg %p169
        $region90: #{tpu_custom_call.1} parent=79 // pred_check_branch
          %540 = sbr.rel (%p538) target = $region92
        $region91: #{tpu_custom_call.1} parent=79 // pred_region
          %541 = dma.done [#allocation6], 1024
        $region92: #{tpu_custom_call.1} parent=79 // pred_fallthru
          _
        // Predicated region
        $region93: #{tpu_custom_call.1} parent=79 // pred_check
          %p542 = pneg %p190
        $region94: #{tpu_custom_call.1} parent=79 // pred_check_branch
          %544 = sbr.rel (%p542) target = $region96
        $region95: #{tpu_custom_call.1} parent=79 // pred_region
          %545 = dma.done [#allocation9], 1024
        $region96: #{tpu_custom_call.1} parent=79 // pred_fallthru
          _
        // Predicated region
        $region97: #{tpu_custom_call.1} parent=79 // pred_check
          %p546 = pneg %p253
        $region98: #{tpu_custom_call.1} parent=79 // pred_check_branch
          %548 = sbr.rel (%p546) target = $region100
        $region99: #{tpu_custom_call.1} parent=79 // pred_region
          %549 = dma.done [#allocation9], 2048
        $region100: #{tpu_custom_call.1} parent=79 // pred_fallthru
          _
        // Predicated region
        $region101: #{tpu_custom_call.1} parent=79 // pred_check
          %p550 = pneg %p295
        $region102: #{tpu_custom_call.1} parent=79 // pred_check_branch
          %552 = sbr.rel (%p550) target = $region104
        $region103: #{tpu_custom_call.1} parent=79 // pred_region
          %553 = dma.done [#allocation12], 2048
        $region104: #{tpu_custom_call.1} parent=79 // pred_fallthru
          _
        %s554 = smul.u32 4, %s33
        %p555 = scmp.lt.s32.totalorder %s554, 7
        %s556 = scalar_select %p555, %s554, 7
        %s557 = smul.addr %s556, 4
        %s558 = smul.addr %s557, 8
        %s559 = scalar_lea.vmem %s0, %s558
        %p560 = pneg %p54
        %p561 = pneg %p51
        %p562 = scmp.lt.s32.totalorder %s33, 1
        %s563 = scalar_select %p562, %s33, 1
        %s564 = smul.addr %s563, 16
        %s565 = smul.addr %s564, 8
        %s566 = scalar_lea.vmem %s1, %s565
        %p567 = pneg %p80
        %p568 = pneg %p77
        %p569 = scmp.lt.s32.totalorder %s33, 1
        %s570 = scalar_select %p569, %s33, 1
        %s571 = scalar_lea.vmem %s2, %s570
        %p572 = pneg %p106
        %p573 = pneg %p103
        %p574 = pneg %p127
        %p575 = pneg %p124
        %p576 = pneg %p148
        %p577 = pneg %p145
        %p578 = pneg %p169
        %p579 = pneg %p166
        %p580 = pneg %p190
        %p581 = pneg %p187
        %p582 = pneg %p211
        %p583 = pneg %p208
        %p584 = pneg %p232
        %p585 = pneg %p229
        %p586 = pneg %p253
        %p587 = pneg %p250
        %p588 = pneg %p274
        %p589 = pneg %p271
        %p590 = pneg %p295
        %p591 = pneg %p292
        %p592 = pneg %p316
        %p593 = pneg %p313
        %p594 = pneg %p337
        %p595 = pneg %p334
        %p596 = pneg %p358
        %p597 = pneg %p355
        %p598 = pneg %p384
        %p599 = pneg %p381
        %s600 = sand.u32 %s371, 1
        %s601 = scalar_lea.sflag [#allocation4], %s600
        %s602 = sand.u32 %s371, 1
        %s603 = smul.addr %s602, 128
        %s604 = scalar_lea.vmem [#allocation13], %s603
        %s605 = smul.u32 4, %s33
        %p606 = scmp.lt.s32.totalorder %s605, 7
        %s607 = scalar_select %p606, %s605, 7
        %s608 = smul.addr %s607, 4
        %s609 = smul.addr %s608, 8
        %s610 = scalar_lea.vmem %s0, %s609
        %s611 = smul.u32 4, %s33
        %p612 = scmp.lt.s32.totalorder %s33, 1
        %s613 = scalar_select %p612, %s33, 1
        %s614 = smul.addr %s613, 16
        %s615 = smul.addr %s614, 8
        %s616 = scalar_lea.vmem %s1, %s615
        %p617 = scmp.lt.s32.totalorder %s33, 1
        %s618 = scalar_select %p617, %s33, 1
        %s619 = scalar_lea.vmem %s2, %s618
        %s620 = smul.u32 4, %s33
        %v622 = vld [vmem:[%s610] sm:$0xff]
        %v623 = vld [vmem:[%s610 + $0x8] sm:$0xff]
        %v624 = vld [vmem:[%s610 + $0x10] sm:$0xff]
        %v625 = vld [vmem:[%s610 + $0x18] sm:$0xff]
        %v626 = vld [vmem:[%s610 + $0x20] sm:$0xff]
        %v627 = vld [vmem:[%s610 + $0x28] sm:$0xff]
        %v628 = vld [vmem:[%s610 + $0x30] sm:$0xff]
        %v629 = vld [vmem:[%s610 + $0x38] sm:$0xff]
        %v630 = vld [vmem:[%s610 + $0x40] sm:$0xff]
        %v631 = vld [vmem:[%s610 + $0x48] sm:$0xff]
        %v632 = vld [vmem:[%s610 + $0x50] sm:$0xff]
        %v633 = vld [vmem:[%s610 + $0x58] sm:$0xff]
        %v634 = vld [vmem:[%s610 + $0x60] sm:$0xff]
        %v635 = vld [vmem:[%s610 + $0x68] sm:$0xff]
        %v636 = vld [vmem:[%s610 + $0x70] sm:$0xff]
        %v637 = vld [vmem:[%s610 + $0x78] sm:$0xff]
        %v638 = vld [vmem:[%s616] sm:$0xff]
        %v639 = vld [vmem:[%s616 + $0x8] sm:$0xff]
        %v640 = vld [vmem:[%s616 + $0x10] sm:$0xff]
        %v641 = vld [vmem:[%s616 + $0x18] sm:$0xff]
        %v642 = vld [vmem:[%s616 + $0x20] sm:$0xff]
        %v643 = vld [vmem:[%s616 + $0x28] sm:$0xff]
        %v644 = vld [vmem:[%s616 + $0x30] sm:$0xff]
        %v645 = vld [vmem:[%s616 + $0x38] sm:$0xff]
        %v646 = vld [vmem:[%s616 + $0x40] sm:$0xff]
        %v647 = vld [vmem:[%s616 + $0x48] sm:$0xff]
        %v648 = vld [vmem:[%s616 + $0x50] sm:$0xff]
        %v649 = vld [vmem:[%s616 + $0x58] sm:$0xff]
        %v650 = vld [vmem:[%s616 + $0x60] sm:$0xff]
        %v651 = vld [vmem:[%s616 + $0x68] sm:$0xff]
        %v652 = vld [vmem:[%s616 + $0x70] sm:$0xff]
        %v653 = vld [vmem:[%s616 + $0x78] sm:$0xff]
        %v654 = vld [vmem:[%s619] sm:$0x1]
        %655 = vset.pattern.permute.xlu0 0
        %656 = vperm.xlu0 %655, %v638
        %v657 = vpop.permute.xlu0 %656
        %658 = vset.pattern.permute.xlu0 0
        %659 = vperm.xlu0 %658, %v639
        %v660 = vpop.permute.xlu0 %659
        %661 = vset.pattern.permute.xlu0 0
        %662 = vperm.xlu0 %661, %v640
        %v663 = vpop.permute.xlu0 %662
        %664 = vset.pattern.permute.xlu0 0
        %665 = vperm.xlu0 %664, %v641
        %v666 = vpop.permute.xlu0 %665
        %667 = vset.pattern.permute.xlu0 0
        %668 = vperm.xlu0 %667, %v642
        %v669 = vpop.permute.xlu0 %668
        %670 = vset.pattern.permute.xlu0 0
        %671 = vperm.xlu0 %670, %v643
        %v672 = vpop.permute.xlu0 %671
        %673 = vset.pattern.permute.xlu0 0
        %674 = vperm.xlu0 %673, %v644
        %v675 = vpop.permute.xlu0 %674
        %676 = vset.pattern.permute.xlu0 0
        %677 = vperm.xlu0 %676, %v645
        %v678 = vpop.permute.xlu0 %677
        %679 = vset.pattern.permute.xlu0 0
        %680 = vperm.xlu0 %679, %v646
        %v681 = vpop.permute.xlu0 %680
        %682 = vset.pattern.permute.xlu0 0
        %683 = vperm.xlu0 %682, %v647
        %v684 = vpop.permute.xlu0 %683
        %685 = vset.pattern.permute.xlu0 0
        %686 = vperm.xlu0 %685, %v648
        %v687 = vpop.permute.xlu0 %686
        %688 = vset.pattern.permute.xlu0 0
        %689 = vperm.xlu0 %688, %v649
        %v690 = vpop.permute.xlu0 %689
        %691 = vset.pattern.permute.xlu0 0
        %692 = vperm.xlu0 %691, %v650
        %v693 = vpop.permute.xlu0 %692
        %694 = vset.pattern.permute.xlu0 0
        %695 = vperm.xlu0 %694, %v651
        %v696 = vpop.permute.xlu0 %695
        %697 = vset.pattern.permute.xlu0 0
        %698 = vperm.xlu0 %697, %v652
        %v699 = vpop.permute.xlu0 %698
        %700 = vset.pattern.permute.xlu0 0
        %701 = vperm.xlu0 %700, %v653
        %v702 = vpop.permute.xlu0 %701
        %v703 = vlaneseq
        %v704 = vshrl.u32 %v703, 7
        %v705 = vsub.s32 0, %v704
        %v706 = vrot.slane %v654, %v705
        %vm707 = vcmp.eq.s32.totalorder %v657, %v706
        %vm708 = vcmp.eq.s32.totalorder %v660, %v706
        %vm709 = vcmp.eq.s32.totalorder %v663, %v706
        %vm710 = vcmp.eq.s32.totalorder %v666, %v706
        %vm711 = vcmp.eq.s32.totalorder %v669, %v706
        %vm712 = vcmp.eq.s32.totalorder %v672, %v706
        %vm713 = vcmp.eq.s32.totalorder %v675, %v706
        %vm714 = vcmp.eq.s32.totalorder %v678, %v706
        %vm715 = vcmp.eq.s32.totalorder %v681, %v706
        %vm716 = vcmp.eq.s32.totalorder %v684, %v706
        %vm717 = vcmp.eq.s32.totalorder %v687, %v706
        %vm718 = vcmp.eq.s32.totalorder %v690, %v706
        %vm719 = vcmp.eq.s32.totalorder %v693, %v706
        %vm720 = vcmp.eq.s32.totalorder %v696, %v706
        %vm721 = vcmp.eq.s32.totalorder %v699, %v706
        %vm722 = vcmp.eq.s32.totalorder %v702, %v706
        %v723 = vsel %vm707, 0.0, -1e+09
        %v724 = vsel %vm708, 0.0, -1e+09
        %v725 = vsel %vm709, 0.0, -1e+09
        %v726 = vsel %vm710, 0.0, -1e+09
        %v727 = vsel %vm711, 0.0, -1e+09
        %v728 = vsel %vm712, 0.0, -1e+09
        %v729 = vsel %vm713, 0.0, -1e+09
        %v730 = vsel %vm714, 0.0, -1e+09
        %v731 = vsel %vm715, 0.0, -1e+09
        %v732 = vsel %vm716, 0.0, -1e+09
        %v733 = vsel %vm717, 0.0, -1e+09
        %v734 = vsel %vm718, 0.0, -1e+09
        %v735 = vsel %vm719, 0.0, -1e+09
        %v736 = vsel %vm720, 0.0, -1e+09
        %v737 = vsel %vm721, 0.0, -1e+09
        %v738 = vsel %vm722, 0.0, -1e+09
        %v739 = vld [vmem:[%s7] sm:$0x1]
        %v740 = vld [vmem:[%s8] sm:$0x1]
        %741 = vadd.xlane.f32.xlu0 %v622
        %v742 = vpop.xlane.xlu0 %741
        %743 = vadd.xlane.f32.xlu0 %v623
        %v744 = vpop.xlane.xlu0 %743
        %745 = vadd.xlane.f32.xlu0 %v624
        %v746 = vpop.xlane.xlu0 %745
        %747 = vadd.xlane.f32.xlu0 %v625
        %v748 = vpop.xlane.xlu0 %747
        %749 = vadd.xlane.f32.xlu0 %v626
        %v750 = vpop.xlane.xlu0 %749
        %751 = vadd.xlane.f32.xlu0 %v627
        %v752 = vpop.xlane.xlu0 %751
        %753 = vadd.xlane.f32.xlu0 %v628
        %v754 = vpop.xlane.xlu0 %753
        %755 = vadd.xlane.f32.xlu0 %v629
        %v756 = vpop.xlane.xlu0 %755
        %757 = vadd.xlane.f32.xlu0 %v630
        %v758 = vpop.xlane.xlu0 %757
        %759 = vadd.xlane.f32.xlu0 %v631
        %v760 = vpop.xlane.xlu0 %759
        %761 = vadd.xlane.f32.xlu0 %v632
        %v762 = vpop.xlane.xlu0 %761
        %763 = vadd.xlane.f32.xlu0 %v633
        %v764 = vpop.xlane.xlu0 %763
        %765 = vadd.xlane.f32.xlu0 %v634
        %v766 = vpop.xlane.xlu0 %765
        %767 = vadd.xlane.f32.xlu0 %v635
        %v768 = vpop.xlane.xlu0 %767
        %769 = vadd.xlane.f32.xlu0 %v636
        %v770 = vpop.xlane.xlu0 %769
        %771 = vadd.xlane.f32.xlu0 %v637
        %v772 = vpop.xlane.xlu0 %771
        %v773 = vrcp.pop 128.0
        %v774 = vmul.f32 %v742, %v773
        %v775 = vmul.f32 %v744, %v773
        %v776 = vmul.f32 %v746, %v773
        %v777 = vmul.f32 %v748, %v773
        %v778 = vmul.f32 %v750, %v773
        %v779 = vmul.f32 %v752, %v773
        %v780 = vmul.f32 %v754, %v773
        %v781 = vmul.f32 %v756, %v773
        %v782 = vmul.f32 %v758, %v773
        %v783 = vmul.f32 %v760, %v773
        %v784 = vmul.f32 %v762, %v773
        %v785 = vmul.f32 %v764, %v773
        %v786 = vmul.f32 %v766, %v773
        %v787 = vmul.f32 %v768, %v773
        %v788 = vmul.f32 %v770, %v773
        %v789 = vmul.f32 %v772, %v773
        %v790 = vsub.f32 %v622, %v774
        %v791 = vsub.f32 %v623, %v775
        %v792 = vsub.f32 %v624, %v776
        %v793 = vsub.f32 %v625, %v777
        %v794 = vsub.f32 %v626, %v778
        %v795 = vsub.f32 %v627, %v779
        %v796 = vsub.f32 %v628, %v780
        %v797 = vsub.f32 %v629, %v781
        %v798 = vsub.f32 %v630, %v782
        %v799 = vsub.f32 %v631, %v783
        %v800 = vsub.f32 %v632, %v784
        %v801 = vsub.f32 %v633, %v785
        %v802 = vsub.f32 %v634, %v786
        %v803 = vsub.f32 %v635, %v787
        %v804 = vsub.f32 %v636, %v788
        %v805 = vsub.f32 %v637, %v789
        %v806 = vmul.f32 %v790, %v790
        %v807 = vmul.f32 %v791, %v791
        %v808 = vmul.f32 %v792, %v792
        %v809 = vmul.f32 %v793, %v793
        %v810 = vmul.f32 %v794, %v794
        %v811 = vmul.f32 %v795, %v795
        %v812 = vmul.f32 %v796, %v796
        %v813 = vmul.f32 %v797, %v797
        %v814 = vmul.f32 %v798, %v798
        %v815 = vmul.f32 %v799, %v799
        %v816 = vmul.f32 %v800, %v800
        %v817 = vmul.f32 %v801, %v801
        %v818 = vmul.f32 %v802, %v802
        %v819 = vmul.f32 %v803, %v803
        %v820 = vmul.f32 %v804, %v804
        %v821 = vmul.f32 %v805, %v805
        %822 = vadd.xlane.f32.xlu0 %v806
        %v823 = vpop.xlane.xlu0 %822
        %824 = vadd.xlane.f32.xlu0 %v807
        %v825 = vpop.xlane.xlu0 %824
        %826 = vadd.xlane.f32.xlu0 %v808
        %v827 = vpop.xlane.xlu0 %826
        %828 = vadd.xlane.f32.xlu0 %v809
        %v829 = vpop.xlane.xlu0 %828
        %830 = vadd.xlane.f32.xlu0 %v810
        %v831 = vpop.xlane.xlu0 %830
        %832 = vadd.xlane.f32.xlu0 %v811
        %v833 = vpop.xlane.xlu0 %832
        %834 = vadd.xlane.f32.xlu0 %v812
        %v835 = vpop.xlane.xlu0 %834
        %836 = vadd.xlane.f32.xlu0 %v813
        %v837 = vpop.xlane.xlu0 %836
        %838 = vadd.xlane.f32.xlu0 %v814
        %v839 = vpop.xlane.xlu0 %838
        %840 = vadd.xlane.f32.xlu0 %v815
        %v841 = vpop.xlane.xlu0 %840
        %842 = vadd.xlane.f32.xlu0 %v816
        %v843 = vpop.xlane.xlu0 %842
        %844 = vadd.xlane.f32.xlu0 %v817
        %v845 = vpop.xlane.xlu0 %844
        %846 = vadd.xlane.f32.xlu0 %v818
        %v847 = vpop.xlane.xlu0 %846
        %848 = vadd.xlane.f32.xlu0 %v819
        %v849 = vpop.xlane.xlu0 %848
        %850 = vadd.xlane.f32.xlu0 %v820
        %v851 = vpop.xlane.xlu0 %850
        %852 = vadd.xlane.f32.xlu0 %v821
        %v853 = vpop.xlane.xlu0 %852
        %v854 = vmul.f32 %v823, 0.007874016
        %v855 = vmul.f32 %v825, 0.007874016
        %v856 = vmul.f32 %v827, 0.007874016
        %v857 = vmul.f32 %v829, 0.007874016
        %v858 = vmul.f32 %v831, 0.007874016
        %v859 = vmul.f32 %v833, 0.007874016
        %v860 = vmul.f32 %v835, 0.007874016
        %v861 = vmul.f32 %v837, 0.007874016
        %v862 = vmul.f32 %v839, 0.007874016
        %v863 = vmul.f32 %v841, 0.007874016
        %v864 = vmul.f32 %v843, 0.007874016
        %v865 = vmul.f32 %v845, 0.007874016
        %v866 = vmul.f32 %v847, 0.007874016
        %v867 = vmul.f32 %v849, 0.007874016
        %v868 = vmul.f32 %v851, 0.007874016
        %v869 = vmul.f32 %v853, 0.007874016
        %v870 = vrsqrt.pop %v854
        %v871 = vmul.f32 %v854, %v870
        %vm872 = vcmp.eq.f32.partialorder %v854, inf
        %v873 = vsel %vm872, %v854, %v871
        %vm874 = vcmp.eq.f32.partialorder %v854, 0.0
        %v875 = vand.u32 %v854, 2147483648
        %v876 = vsel %vm874, %v875, %v873
        %v877 = vrsqrt.pop %v855
        %v878 = vmul.f32 %v855, %v877
        %vm879 = vcmp.eq.f32.partialorder %v855, inf
        %v880 = vsel %vm879, %v855, %v878
        %vm881 = vcmp.eq.f32.partialorder %v855, 0.0
        %v882 = vand.u32 %v855, 2147483648
        %v883 = vsel %vm881, %v882, %v880
        %v884 = vrsqrt.pop %v856
        %v885 = vmul.f32 %v856, %v884
        %vm886 = vcmp.eq.f32.partialorder %v856, inf
        %v887 = vsel %vm886, %v856, %v885
        %vm888 = vcmp.eq.f32.partialorder %v856, 0.0
        %v889 = vand.u32 %v856, 2147483648
        %v890 = vsel %vm888, %v889, %v887
        %v891 = vrsqrt.pop %v857
        %v892 = vmul.f32 %v857, %v891
        %vm893 = vcmp.eq.f32.partialorder %v857, inf
        %v894 = vsel %vm893, %v857, %v892
        %vm895 = vcmp.eq.f32.partialorder %v857, 0.0
        %v896 = vand.u32 %v857, 2147483648
        %v897 = vsel %vm895, %v896, %v894
        %v898 = vrsqrt.pop %v858
        %v899 = vmul.f32 %v858, %v898
        %vm900 = vcmp.eq.f32.partialorder %v858, inf
        %v901 = vsel %vm900, %v858, %v899
        %vm902 = vcmp.eq.f32.partialorder %v858, 0.0
        %v903 = vand.u32 %v858, 2147483648
        %v904 = vsel %vm902, %v903, %v901
        %v905 = vrsqrt.pop %v859
        %v906 = vmul.f32 %v859, %v905
        %vm907 = vcmp.eq.f32.partialorder %v859, inf
        %v908 = vsel %vm907, %v859, %v906
        %vm909 = vcmp.eq.f32.partialorder %v859, 0.0
        %v910 = vand.u32 %v859, 2147483648
        %v911 = vsel %vm909, %v910, %v908
        %v912 = vrsqrt.pop %v860
        %v913 = vmul.f32 %v860, %v912
        %vm914 = vcmp.eq.f32.partialorder %v860, inf
        %v915 = vsel %vm914, %v860, %v913
        %vm916 = vcmp.eq.f32.partialorder %v860, 0.0
        %v917 = vand.u32 %v860, 2147483648
        %v918 = vsel %vm916, %v917, %v915
        %v919 = vrsqrt.pop %v861
        %v920 = vmul.f32 %v861, %v919
        %vm921 = vcmp.eq.f32.partialorder %v861, inf
        %v922 = vsel %vm921, %v861, %v920
        %vm923 = vcmp.eq.f32.partialorder %v861, 0.0
        %v924 = vand.u32 %v861, 2147483648
        %v925 = vsel %vm923, %v924, %v922
        %v926 = vrsqrt.pop %v862
        %v927 = vmul.f32 %v862, %v926
        %vm928 = vcmp.eq.f32.partialorder %v862, inf
        %v929 = vsel %vm928, %v862, %v927
        %vm930 = vcmp.eq.f32.partialorder %v862, 0.0
        %v931 = vand.u32 %v862, 2147483648
        %v932 = vsel %vm930, %v931, %v929
        %v933 = vrsqrt.pop %v863
        %v934 = vmul.f32 %v863, %v933
        %vm935 = vcmp.eq.f32.partialorder %v863, inf
        %v936 = vsel %vm935, %v863, %v934
        %vm937 = vcmp.eq.f32.partialorder %v863, 0.0
        %v938 = vand.u32 %v863, 2147483648
        %v939 = vsel %vm937, %v938, %v936
        %v940 = vrsqrt.pop %v864
        %v941 = vmul.f32 %v864, %v940
        %vm942 = vcmp.eq.f32.partialorder %v864, inf
        %v943 = vsel %vm942, %v864, %v941
        %vm944 = vcmp.eq.f32.partialorder %v864, 0.0
        %v945 = vand.u32 %v864, 2147483648
        %v946 = vsel %vm944, %v945, %v943
        %v947 = vrsqrt.pop %v865
        %v948 = vmul.f32 %v865, %v947
        %vm949 = vcmp.eq.f32.partialorder %v865, inf
        %v950 = vsel %vm949, %v865, %v948
        %vm951 = vcmp.eq.f32.partialorder %v865, 0.0
        %v952 = vand.u32 %v865, 2147483648
        %v953 = vsel %vm951, %v952, %v950
        %v954 = vrsqrt.pop %v866
        %v955 = vmul.f32 %v866, %v954
        %vm956 = vcmp.eq.f32.partialorder %v866, inf
        %v957 = vsel %vm956, %v866, %v955
        %vm958 = vcmp.eq.f32.partialorder %v866, 0.0
        %v959 = vand.u32 %v866, 2147483648
        %v960 = vsel %vm958, %v959, %v957
        %v961 = vrsqrt.pop %v867
        %v962 = vmul.f32 %v867, %v961
        %vm963 = vcmp.eq.f32.partialorder %v867, inf
        %v964 = vsel %vm963, %v867, %v962
        %vm965 = vcmp.eq.f32.partialorder %v867, 0.0
        %v966 = vand.u32 %v867, 2147483648
        %v967 = vsel %vm965, %v966, %v964
        %v968 = vrsqrt.pop %v868
        %v969 = vmul.f32 %v868, %v968
        %vm970 = vcmp.eq.f32.partialorder %v868, inf
        %v971 = vsel %vm970, %v868, %v969
        %vm972 = vcmp.eq.f32.partialorder %v868, 0.0
        %v973 = vand.u32 %v868, 2147483648
        %v974 = vsel %vm972, %v973, %v971
        %v975 = vrsqrt.pop %v869
        %v976 = vmul.f32 %v869, %v975
        %vm977 = vcmp.eq.f32.partialorder %v869, inf
        %v978 = vsel %vm977, %v869, %v976
        %vm979 = vcmp.eq.f32.partialorder %v869, 0.0
        %v980 = vand.u32 %v869, 2147483648
        %v981 = vsel %vm979, %v980, %v978
        %v982 = vadd.f32 %v876, 1e-06
        %v983 = vadd.f32 %v883, 1e-06
        %v984 = vadd.f32 %v890, 1e-06
        %v985 = vadd.f32 %v897, 1e-06
        %v986 = vadd.f32 %v904, 1e-06
        %v987 = vadd.f32 %v911, 1e-06
        %v988 = vadd.f32 %v918, 1e-06
        %v989 = vadd.f32 %v925, 1e-06
        %v990 = vadd.f32 %v932, 1e-06
        %v991 = vadd.f32 %v939, 1e-06
        %v992 = vadd.f32 %v946, 1e-06
        %v993 = vadd.f32 %v953, 1e-06
        %v994 = vadd.f32 %v960, 1e-06
        %v995 = vadd.f32 %v967, 1e-06
        %v996 = vadd.f32 %v974, 1e-06
        %v997 = vadd.f32 %v981, 1e-06
        %v998 = vrcp.pop %v982
        %v999 = vrcp.pop %v983
        %v1000 = vrcp.pop %v984
        %v1001 = vrcp.pop %v985
        %v1002 = vrcp.pop %v986
        %v1003 = vrcp.pop %v987
        %v1004 = vrcp.pop %v988
        %v1005 = vrcp.pop %v989
        %v1006 = vrcp.pop %v990
        %v1007 = vrcp.pop %v991
        %v1008 = vrcp.pop %v992
        %v1009 = vrcp.pop %v993
        %v1010 = vrcp.pop %v994
        %v1011 = vrcp.pop %v995
        %v1012 = vrcp.pop %v996
        %v1013 = vrcp.pop %v997
        %v1015 = vlaneseq
        %v1016 = vshrl.u32 %v1015, 7
        %v1017 = vsub.s32 0, %v1016
        %v1018 = vrot.slane %v739, %v1017
        %v1020 = vmul.f32 %v1018, %v790
        %v1021 = vmul.f32 %v1018, %v791
        %v1022 = vmul.f32 %v1018, %v792
        %v1023 = vmul.f32 %v1018, %v793
        %v1024 = vmul.f32 %v1018, %v794
        %v1025 = vmul.f32 %v1018, %v795
        %v1026 = vmul.f32 %v1018, %v796
        %v1027 = vmul.f32 %v1018, %v797
        %v1028 = vmul.f32 %v1018, %v798
        %v1029 = vmul.f32 %v1018, %v799
        %v1030 = vmul.f32 %v1018, %v800
        %v1031 = vmul.f32 %v1018, %v801
        %v1032 = vmul.f32 %v1018, %v802
        %v1033 = vmul.f32 %v1018, %v803
        %v1034 = vmul.f32 %v1018, %v804
        %v1035 = vmul.f32 %v1018, %v805
        %v1036 = vmul.f32 %v1020, %v998
        %v1037 = vmul.f32 %v1021, %v999
        %v1038 = vmul.f32 %v1022, %v1000
        %v1039 = vmul.f32 %v1023, %v1001
        %v1040 = vmul.f32 %v1024, %v1002
        %v1041 = vmul.f32 %v1025, %v1003
        %v1042 = vmul.f32 %v1026, %v1004
        %v1043 = vmul.f32 %v1027, %v1005
        %v1044 = vmul.f32 %v1028, %v1006
        %v1045 = vmul.f32 %v1029, %v1007
        %v1046 = vmul.f32 %v1030, %v1008
        %v1047 = vmul.f32 %v1031, %v1009
        %v1048 = vmul.f32 %v1032, %v1010
        %v1049 = vmul.f32 %v1033, %v1011
        %v1050 = vmul.f32 %v1034, %v1012
        %v1051 = vmul.f32 %v1035, %v1013
        %v1053 = vlaneseq
        %v1054 = vshrl.u32 %v1053, 7
        %v1055 = vsub.s32 0, %v1054
        %v1056 = vrot.slane %v740, %v1055
        %v1058 = vadd.f32 %v1036, %v1056
        %v1059 = vadd.f32 %v1037, %v1056
        %v1060 = vadd.f32 %v1038, %v1056
        %v1061 = vadd.f32 %v1039, %v1056
        %v1062 = vadd.f32 %v1040, %v1056
        %v1063 = vadd.f32 %v1041, %v1056
        %v1064 = vadd.f32 %v1042, %v1056
        %v1065 = vadd.f32 %v1043, %v1056
        %v1066 = vadd.f32 %v1044, %v1056
        %v1067 = vadd.f32 %v1045, %v1056
        %v1068 = vadd.f32 %v1046, %v1056
        %v1069 = vadd.f32 %v1047, %v1056
        %v1070 = vadd.f32 %v1048, %v1056
        %v1071 = vadd.f32 %v1049, %v1056
        %v1072 = vadd.f32 %v1050, %v1056
        %v1073 = vadd.f32 %v1051, %v1056
        %v1074 = vpack.c.bf16 %v1059, %v1058
        %v1075 = vpack.c.bf16 %v1061, %v1060
        %v1076 = vpack.c.bf16 %v1063, %v1062
        %v1077 = vpack.c.bf16 %v1065, %v1064
        %v1078 = vpack.c.bf16 %v1067, %v1066
        %v1079 = vpack.c.bf16 %v1069, %v1068
        %v1080 = vpack.c.bf16 %v1071, %v1070
        %v1081 = vpack.c.bf16 %v1073, %v1072
        %v1082 = vld [vmem:[#allocation2] sm:$0xf]
        %v1083 = vld [vmem:[#allocation2 + $0x4] sm:$0xf]
        %v1084 = vld [vmem:[#allocation2 + $0x8] sm:$0xf]
        %v1085 = vld [vmem:[#allocation2 + $0xc] sm:$0xf]
        %v1086 = vld [vmem:[#allocation2 + $0x10] sm:$0xf]
        %v1087 = vld [vmem:[#allocation2 + $0x14] sm:$0xf]
        %v1088 = vld [vmem:[#allocation2 + $0x18] sm:$0xf]
        %v1089 = vld [vmem:[#allocation2 + $0x1c] sm:$0xf]
        %v1090 = vld [vmem:[#allocation2 + $0x20] sm:$0xf]
        %v1091 = vld [vmem:[#allocation2 + $0x24] sm:$0xf]
        %v1092 = vld [vmem:[#allocation2 + $0x28] sm:$0xf]
        %v1093 = vld [vmem:[#allocation2 + $0x2c] sm:$0xf]
        %v1094 = vld [vmem:[#allocation2 + $0x30] sm:$0xf]
        %v1095 = vld [vmem:[#allocation2 + $0x34] sm:$0xf]
        %v1096 = vld [vmem:[#allocation2 + $0x38] sm:$0xf]
        %v1097 = vld [vmem:[#allocation2 + $0x3c] sm:$0xf]
        %v1114 = vunpack.c.l.b16 %v1082
        %v1115 = vunpack.c.l.b16 %v1083
        %v1116 = vunpack.c.l.b16 %v1084
        %v1117 = vunpack.c.l.b16 %v1085
        %v1118 = vunpack.c.l.b16 %v1086
        %v1119 = vunpack.c.l.b16 %v1087
        %v1120 = vunpack.c.l.b16 %v1088
        %v1121 = vunpack.c.l.b16 %v1089
        %v1122 = vunpack.c.l.b16 %v1090
        %v1123 = vunpack.c.l.b16 %v1091
        %v1124 = vunpack.c.l.b16 %v1092
        %v1125 = vunpack.c.l.b16 %v1093
        %v1126 = vunpack.c.l.b16 %v1094
        %v1127 = vunpack.c.l.b16 %v1095
        %v1128 = vunpack.c.l.b16 %v1096
        %v1129 = vunpack.c.l.b16 %v1097
        %v1130 = vpack.c.b16 %v1115, %v1114
        %v1131 = vpack.c.b16 %v1117, %v1116
        %v1132 = vpack.c.b16 %v1119, %v1118
        %v1133 = vpack.c.b16 %v1121, %v1120
        %v1134 = vpack.c.b16 %v1123, %v1122
        %v1135 = vpack.c.b16 %v1125, %v1124
        %v1136 = vpack.c.b16 %v1127, %v1126
        %v1137 = vpack.c.b16 %v1129, %v1128
        %1146 = vmatprep.subr.bf16.mxu0 0
        %1147 = vmatpush1.bf16.msra.mxu0 %v1137
        %1148 = vmatprep.subr.bf16.mxu0 0
        %1149 = vmatpush1.bf16.msra.mxu0 %v1136
        %1150 = vmatprep.subr.bf16.mxu0 0
        %1151 = vmatpush1.bf16.msra.mxu0 %v1135
        %1152 = vmatprep.subr.bf16.mxu0 0
        %1153 = vmatpush1.bf16.msra.mxu0 %v1134
        %1154 = vmatprep.subr.bf16.mxu0 0
        %1155 = vmatpush1.bf16.msra.mxu0 %v1133
        %1156 = vmatprep.subr.bf16.mxu0 0
        %1157 = vmatpush1.bf16.msra.mxu0 %v1132
        %1158 = vmatprep.subr.bf16.mxu0 0
        %1159 = vmatpush1.bf16.msra.mxu0 %v1131
        %1160 = vmatprep.subr.bf16.mxu0 0
        %1161 = vmatpush1.bf16.msra.mxu0 %v1130
        %1162 = vmatprep.subr.bf16.mxu0 0
        %1163 = vmatpush2.bf16.msra.mxu0 0
        %1164 = vmatprep.subr.bf16.mxu0 0
        %1165 = vmatpush2.bf16.msra.mxu0 0
        %1166 = vmatprep.subr.bf16.mxu0 0
        %1167 = vmatpush2.bf16.msra.mxu0 0
        %1168 = vmatprep.subr.bf16.mxu0 0
        %1169 = vmatpush2.bf16.msra.mxu0 0
        %1170 = vmatprep.subr.bf16.mxu0 0
        %1171 = vmatpush2.bf16.msra.mxu0 0
        %1172 = vmatprep.subr.bf16.mxu0 0
        %1173 = vmatpush2.bf16.msra.mxu0 0
        %1174 = vmatprep.subr.bf16.mxu0 0
        %1175 = vmatpush2.bf16.msra.mxu0 0
        %1176 = vmatprep.subr.bf16.mxu0 0
        %1177 = vmatpush2.bf16.msra.mxu0 0
        %1178 = vmatprep.mubr.bf16.mxu0 0
        %1179 = vmatmul.mubr.bf16.gmra.mxu0 %v1074
        %v1180 = vpop.f32.mrf.mxu0
        %v1181 = vadd.f32 0.0, %v1180
        %v1182 = vpop.f32.mrf.mxu0
        %v1183 = vpop.f32.mrf.mxu0
        %v1184 = vadd.f32 0.0, %v1183
        %v1185 = vpop.f32.mrf.mxu0
        %1186 = vmatprep.mubr.bf16.mxu0 0
        %1187 = vmatmul.mubr.bf16.gmra.mxu0 %v1075
        %v1188 = vpop.f32.mrf.mxu0
        %v1189 = vadd.f32 0.0, %v1188
        %v1190 = vpop.f32.mrf.mxu0
        %v1191 = vpop.f32.mrf.mxu0
        %v1192 = vadd.f32 0.0, %v1191
        %v1193 = vpop.f32.mrf.mxu0
        %1194 = vmatprep.mubr.bf16.mxu0 0
        %1195 = vmatmul.mubr.bf16.gmra.mxu0 %v1076
        %v1196 = vpop.f32.mrf.mxu0
        %v1197 = vadd.f32 0.0, %v1196
        %v1198 = vpop.f32.mrf.mxu0
        %v1199 = vpop.f32.mrf.mxu0
        %v1200 = vadd.f32 0.0, %v1199
        %v1201 = vpop.f32.mrf.mxu0
        %1202 = vmatprep.mubr.bf16.mxu0 0
        %1203 = vmatmul.mubr.bf16.gmra.mxu0 %v1077
        %v1204 = vpop.f32.mrf.mxu0
        %v1205 = vadd.f32 0.0, %v1204
        %v1206 = vpop.f32.mrf.mxu0
        %v1207 = vpop.f32.mrf.mxu0
        %v1208 = vadd.f32 0.0, %v1207
        %v1209 = vpop.f32.mrf.mxu0
        %1210 = vmatprep.mubr.bf16.mxu0 0
        %1211 = vmatmul.mubr.bf16.gmra.mxu0 %v1078
        %v1212 = vpop.f32.mrf.mxu0
        %v1213 = vadd.f32 0.0, %v1212
        %v1214 = vpop.f32.mrf.mxu0
        %v1215 = vpop.f32.mrf.mxu0
        %v1216 = vadd.f32 0.0, %v1215
        %v1217 = vpop.f32.mrf.mxu0
        %1218 = vmatprep.mubr.bf16.mxu0 0
        %1219 = vmatmul.mubr.bf16.gmra.mxu0 %v1079
        %v1220 = vpop.f32.mrf.mxu0
        %v1221 = vadd.f32 0.0, %v1220
        %v1222 = vpop.f32.mrf.mxu0
        %v1223 = vpop.f32.mrf.mxu0
        %v1224 = vadd.f32 0.0, %v1223
        %v1225 = vpop.f32.mrf.mxu0
        %1226 = vmatprep.mubr.bf16.mxu0 0
        %1227 = vmatmul.mubr.bf16.gmra.mxu0 %v1080
        %v1228 = vpop.f32.mrf.mxu0
        %v1229 = vadd.f32 0.0, %v1228
        %v1230 = vpop.f32.mrf.mxu0
        %v1231 = vpop.f32.mrf.mxu0
        %v1232 = vadd.f32 0.0, %v1231
        %v1233 = vpop.f32.mrf.mxu0
        %1234 = vmatprep.mubr.bf16.mxu0 0
        %1235 = vmatmul.mubr.bf16.gmra.mxu0 %v1081
        %v1236 = vpop.f32.mrf.mxu0
        %v1237 = vadd.f32 0.0, %v1236
        %v1238 = vpop.f32.mrf.mxu0
        %v1239 = vpop.f32.mrf.mxu0
        %v1240 = vadd.f32 0.0, %v1239
        %v1241 = vpop.f32.mrf.mxu0
        %1242 = vdwg.mxu0
        %v1243 = vld [vmem:[#allocation5] sm:$0xf]
        %v1244 = vld [vmem:[#allocation5 + $0x4] sm:$0xf]
        %v1245 = vld [vmem:[#allocation5 + $0x8] sm:$0xf]
        %v1246 = vld [vmem:[#allocation5 + $0xc] sm:$0xf]
        %v1247 = vld [vmem:[#allocation5 + $0x10] sm:$0xf]
        %v1248 = vld [vmem:[#allocation5 + $0x14] sm:$0xf]
        %v1249 = vld [vmem:[#allocation5 + $0x18] sm:$0xf]
        %v1250 = vld [vmem:[#allocation5 + $0x1c] sm:$0xf]
        %v1251 = vld [vmem:[#allocation5 + $0x20] sm:$0xf]
        %v1252 = vld [vmem:[#allocation5 + $0x24] sm:$0xf]
        %v1253 = vld [vmem:[#allocation5 + $0x28] sm:$0xf]
        %v1254 = vld [vmem:[#allocation5 + $0x2c] sm:$0xf]
        %v1255 = vld [vmem:[#allocation5 + $0x30] sm:$0xf]
        %v1256 = vld [vmem:[#allocation5 + $0x34] sm:$0xf]
        %v1257 = vld [vmem:[#allocation5 + $0x38] sm:$0xf]
        %v1258 = vld [vmem:[#allocation5 + $0x3c] sm:$0xf]
        %v1275 = vunpack.c.l.b16 %v1243
        %v1276 = vunpack.c.l.b16 %v1244
        %v1277 = vunpack.c.l.b16 %v1245
        %v1278 = vunpack.c.l.b16 %v1246
        %v1279 = vunpack.c.l.b16 %v1247
        %v1280 = vunpack.c.l.b16 %v1248
        %v1281 = vunpack.c.l.b16 %v1249
        %v1282 = vunpack.c.l.b16 %v1250
        %v1283 = vunpack.c.l.b16 %v1251
        %v1284 = vunpack.c.l.b16 %v1252
        %v1285 = vunpack.c.l.b16 %v1253
        %v1286 = vunpack.c.l.b16 %v1254
        %v1287 = vunpack.c.l.b16 %v1255
        %v1288 = vunpack.c.l.b16 %v1256
        %v1289 = vunpack.c.l.b16 %v1257
        %v1290 = vunpack.c.l.b16 %v1258
        %v1291 = vpack.c.b16 %v1276, %v1275
        %v1292 = vpack.c.b16 %v1278, %v1277
        %v1293 = vpack.c.b16 %v1280, %v1279
        %v1294 = vpack.c.b16 %v1282, %v1281
        %v1295 = vpack.c.b16 %v1284, %v1283
        %v1296 = vpack.c.b16 %v1286, %v1285
        %v1297 = vpack.c.b16 %v1288, %v1287
        %v1298 = vpack.c.b16 %v1290, %v1289
        %1307 = vmatprep.subr.bf16.mxu0 0
        %1308 = vmatpush1.bf16.msra.mxu0 %v1298
        %1309 = vmatprep.subr.bf16.mxu0 0
        %1310 = vmatpush1.bf16.msra.mxu0 %v1297
        %1311 = vmatprep.subr.bf16.mxu0 0
        %1312 = vmatpush1.bf16.msra.mxu0 %v1296
        %1313 = vmatprep.subr.bf16.mxu0 0
        %1314 = vmatpush1.bf16.msra.mxu0 %v1295
        %1315 = vmatprep.subr.bf16.mxu0 0
        %1316 = vmatpush1.bf16.msra.mxu0 %v1294
        %1317 = vmatprep.subr.bf16.mxu0 0
        %1318 = vmatpush1.bf16.msra.mxu0 %v1293
        %1319 = vmatprep.subr.bf16.mxu0 0
        %1320 = vmatpush1.bf16.msra.mxu0 %v1292
        %1321 = vmatprep.subr.bf16.mxu0 0
        %1322 = vmatpush1.bf16.msra.mxu0 %v1291
        %1323 = vmatprep.subr.bf16.mxu0 0
        %1324 = vmatpush2.bf16.msra.mxu0 0
        %1325 = vmatprep.subr.bf16.mxu0 0
        %1326 = vmatpush2.bf16.msra.mxu0 0
        %1327 = vmatprep.subr.bf16.mxu0 0
        %1328 = vmatpush2.bf16.msra.mxu0 0
        %1329 = vmatprep.subr.bf16.mxu0 0
        %1330 = vmatpush2.bf16.msra.mxu0 0
        %1331 = vmatprep.subr.bf16.mxu0 0
        %1332 = vmatpush2.bf16.msra.mxu0 0
        %1333 = vmatprep.subr.bf16.mxu0 0
        %1334 = vmatpush2.bf16.msra.mxu0 0
        %1335 = vmatprep.subr.bf16.mxu0 0
        %1336 = vmatpush2.bf16.msra.mxu0 0
        %1337 = vmatprep.subr.bf16.mxu0 0
        %1338 = vmatpush2.bf16.msra.mxu0 0
        %1339 = vmatprep.mubr.bf16.mxu0 0
        %1340 = vmatmul.mubr.bf16.gmra.mxu0 %v1074
        %v1341 = vpop.f32.mrf.mxu0
        %v1342 = vadd.f32 0.0, %v1341
        %v1343 = vpop.f32.mrf.mxu0
        %v1344 = vpop.f32.mrf.mxu0
        %v1345 = vadd.f32 0.0, %v1344
        %v1346 = vpop.f32.mrf.mxu0
        %1347 = vmatprep.mubr.bf16.mxu0 0
        %1348 = vmatmul.mubr.bf16.gmra.mxu0 %v1075
        %v1349 = vpop.f32.mrf.mxu0
        %v1350 = vadd.f32 0.0, %v1349
        %v1351 = vpop.f32.mrf.mxu0
        %v1352 = vpop.f32.mrf.mxu0
        %v1353 = vadd.f32 0.0, %v1352
        %v1354 = vpop.f32.mrf.mxu0
        %1355 = vmatprep.mubr.bf16.mxu0 0
        %1356 = vmatmul.mubr.bf16.gmra.mxu0 %v1076
        %v1357 = vpop.f32.mrf.mxu0
        %v1358 = vadd.f32 0.0, %v1357
        %v1359 = vpop.f32.mrf.mxu0
        %v1360 = vpop.f32.mrf.mxu0
        %v1361 = vadd.f32 0.0, %v1360
        %v1362 = vpop.f32.mrf.mxu0
        %1363 = vmatprep.mubr.bf16.mxu0 0
        %1364 = vmatmul.mubr.bf16.gmra.mxu0 %v1077
        %v1365 = vpop.f32.mrf.mxu0
        %v1366 = vadd.f32 0.0, %v1365
        %v1367 = vpop.f32.mrf.mxu0
        %v1368 = vpop.f32.mrf.mxu0
        %v1369 = vadd.f32 0.0, %v1368
        %v1370 = vpop.f32.mrf.mxu0
        %1371 = vmatprep.mubr.bf16.mxu0 0
        %1372 = vmatmul.mubr.bf16.gmra.mxu0 %v1078
        %v1373 = vpop.f32.mrf.mxu0
        %v1374 = vadd.f32 0.0, %v1373
        %v1375 = vpop.f32.mrf.mxu0
        %v1376 = vpop.f32.mrf.mxu0
        %v1377 = vadd.f32 0.0, %v1376
        %v1378 = vpop.f32.mrf.mxu0
        %1379 = vmatprep.mubr.bf16.mxu0 0
        %1380 = vmatmul.mubr.bf16.gmra.mxu0 %v1079
        %v1381 = vpop.f32.mrf.mxu0
        %v1382 = vadd.f32 0.0, %v1381
        %v1383 = vpop.f32.mrf.mxu0
        %v1384 = vpop.f32.mrf.mxu0
        %v1385 = vadd.f32 0.0, %v1384
        %v1386 = vpop.f32.mrf.mxu0
        %1387 = vmatprep.mubr.bf16.mxu0 0
        %1388 = vmatmul.mubr.bf16.gmra.mxu0 %v1080
        %v1389 = vpop.f32.mrf.mxu0
        %v1390 = vadd.f32 0.0, %v1389
        %v1391 = vpop.f32.mrf.mxu0
        %v1392 = vpop.f32.mrf.mxu0
        %v1393 = vadd.f32 0.0, %v1392
        %v1394 = vpop.f32.mrf.mxu0
        %1395 = vmatprep.mubr.bf16.mxu0 0
        %1396 = vmatmul.mubr.bf16.gmra.mxu0 %v1081
        %v1397 = vpop.f32.mrf.mxu0
        %v1398 = vadd.f32 0.0, %v1397
        %v1399 = vpop.f32.mrf.mxu0
        %v1400 = vpop.f32.mrf.mxu0
        %v1401 = vadd.f32 0.0, %v1400
        %v1402 = vpop.f32.mrf.mxu0
        %1403 = vdwg.mxu0
        %v1404 = vld [vmem:[#allocation7] sm:$0xf]
        %v1405 = vld [vmem:[#allocation7 + $0x4] sm:$0xf]
        %v1406 = vld [vmem:[#allocation7 + $0x8] sm:$0xf]
        %v1407 = vld [vmem:[#allocation7 + $0xc] sm:$0xf]
        %v1408 = vld [vmem:[#allocation7 + $0x10] sm:$0xf]
        %v1409 = vld [vmem:[#allocation7 + $0x14] sm:$0xf]
        %v1410 = vld [vmem:[#allocation7 + $0x18] sm:$0xf]
        %v1411 = vld [vmem:[#allocation7 + $0x1c] sm:$0xf]
        %v1412 = vld [vmem:[#allocation7 + $0x20] sm:$0xf]
        %v1413 = vld [vmem:[#allocation7 + $0x24] sm:$0xf]
        %v1414 = vld [vmem:[#allocation7 + $0x28] sm:$0xf]
        %v1415 = vld [vmem:[#allocation7 + $0x2c] sm:$0xf]
        %v1416 = vld [vmem:[#allocation7 + $0x30] sm:$0xf]
        %v1417 = vld [vmem:[#allocation7 + $0x34] sm:$0xf]
        %v1418 = vld [vmem:[#allocation7 + $0x38] sm:$0xf]
        %v1419 = vld [vmem:[#allocation7 + $0x3c] sm:$0xf]
        %v1436 = vunpack.c.l.b16 %v1404
        %v1437 = vunpack.c.l.b16 %v1405
        %v1438 = vunpack.c.l.b16 %v1406
        %v1439 = vunpack.c.l.b16 %v1407
        %v1440 = vunpack.c.l.b16 %v1408
        %v1441 = vunpack.c.l.b16 %v1409
        %v1442 = vunpack.c.l.b16 %v1410
        %v1443 = vunpack.c.l.b16 %v1411
        %v1444 = vunpack.c.l.b16 %v1412
        %v1445 = vunpack.c.l.b16 %v1413
        %v1446 = vunpack.c.l.b16 %v1414
        %v1447 = vunpack.c.l.b16 %v1415
        %v1448 = vunpack.c.l.b16 %v1416
        %v1449 = vunpack.c.l.b16 %v1417
        %v1450 = vunpack.c.l.b16 %v1418
        %v1451 = vunpack.c.l.b16 %v1419
        %v1452 = vpack.c.b16 %v1437, %v1436
        %v1453 = vpack.c.b16 %v1439, %v1438
        %v1454 = vpack.c.b16 %v1441, %v1440
        %v1455 = vpack.c.b16 %v1443, %v1442
        %v1456 = vpack.c.b16 %v1445, %v1444
        %v1457 = vpack.c.b16 %v1447, %v1446
        %v1458 = vpack.c.b16 %v1449, %v1448
        %v1459 = vpack.c.b16 %v1451, %v1450
        %1468 = vmatprep.subr.bf16.mxu0 0
        %1469 = vmatpush1.bf16.msra.mxu0 %v1459
        %1470 = vmatprep.subr.bf16.mxu0 0
        %1471 = vmatpush1.bf16.msra.mxu0 %v1458
        %1472 = vmatprep.subr.bf16.mxu0 0
        %1473 = vmatpush1.bf16.msra.mxu0 %v1457
        %1474 = vmatprep.subr.bf16.mxu0 0
        %1475 = vmatpush1.bf16.msra.mxu0 %v1456
        %1476 = vmatprep.subr.bf16.mxu0 0
        %1477 = vmatpush1.bf16.msra.mxu0 %v1455
        %1478 = vmatprep.subr.bf16.mxu0 0
        %1479 = vmatpush1.bf16.msra.mxu0 %v1454
        %1480 = vmatprep.subr.bf16.mxu0 0
        %1481 = vmatpush1.bf16.msra.mxu0 %v1453
        %1482 = vmatprep.subr.bf16.mxu0 0
        %1483 = vmatpush1.bf16.msra.mxu0 %v1452
        %1484 = vmatprep.subr.bf16.mxu0 0
        %1485 = vmatpush2.bf16.msra.mxu0 0
        %1486 = vmatprep.subr.bf16.mxu0 0
        %1487 = vmatpush2.bf16.msra.mxu0 0
        %1488 = vmatprep.subr.bf16.mxu0 0
        %1489 = vmatpush2.bf16.msra.mxu0 0
        %1490 = vmatprep.subr.bf16.mxu0 0
        %1491 = vmatpush2.bf16.msra.mxu0 0
        %1492 = vmatprep.subr.bf16.mxu0 0
        %1493 = vmatpush2.bf16.msra.mxu0 0
        %1494 = vmatprep.subr.bf16.mxu0 0
        %1495 = vmatpush2.bf16.msra.mxu0 0
        %1496 = vmatprep.subr.bf16.mxu0 0
        %1497 = vmatpush2.bf16.msra.mxu0 0
        %1498 = vmatprep.subr.bf16.mxu0 0
        %1499 = vmatpush2.bf16.msra.mxu0 0
        %1500 = vmatprep.mubr.bf16.mxu0 0
        %1501 = vmatmul.mubr.bf16.gmra.mxu0 %v1074
        %v1502 = vpop.f32.mrf.mxu0
        %v1503 = vadd.f32 0.0, %v1502
        %v1504 = vpop.f32.mrf.mxu0
        %v1505 = vpop.f32.mrf.mxu0
        %v1506 = vadd.f32 0.0, %v1505
        %v1507 = vpop.f32.mrf.mxu0
        %1508 = vmatprep.mubr.bf16.mxu0 0
        %1509 = vmatmul.mubr.bf16.gmra.mxu0 %v1075
        %v1510 = vpop.f32.mrf.mxu0
        %v1511 = vadd.f32 0.0, %v1510
        %v1512 = vpop.f32.mrf.mxu0
        %v1513 = vpop.f32.mrf.mxu0
        %v1514 = vadd.f32 0.0, %v1513
        %v1515 = vpop.f32.mrf.mxu0
        %1516 = vmatprep.mubr.bf16.mxu0 0
        %1517 = vmatmul.mubr.bf16.gmra.mxu0 %v1076
        %v1518 = vpop.f32.mrf.mxu0
        %v1519 = vadd.f32 0.0, %v1518
        %v1520 = vpop.f32.mrf.mxu0
        %v1521 = vpop.f32.mrf.mxu0
        %v1522 = vadd.f32 0.0, %v1521
        %v1523 = vpop.f32.mrf.mxu0
        %1524 = vmatprep.mubr.bf16.mxu0 0
        %1525 = vmatmul.mubr.bf16.gmra.mxu0 %v1077
        %v1526 = vpop.f32.mrf.mxu0
        %v1527 = vadd.f32 0.0, %v1526
        %v1528 = vpop.f32.mrf.mxu0
        %v1529 = vpop.f32.mrf.mxu0
        %v1530 = vadd.f32 0.0, %v1529
        %v1531 = vpop.f32.mrf.mxu0
        %1532 = vmatprep.mubr.bf16.mxu0 0
        %1533 = vmatmul.mubr.bf16.gmra.mxu0 %v1078
        %v1534 = vpop.f32.mrf.mxu0
        %v1535 = vadd.f32 0.0, %v1534
        %v1536 = vpop.f32.mrf.mxu0
        %v1537 = vpop.f32.mrf.mxu0
        %v1538 = vadd.f32 0.0, %v1537
        %v1539 = vpop.f32.mrf.mxu0
        %1540 = vmatprep.mubr.bf16.mxu0 0
        %1541 = vmatmul.mubr.bf16.gmra.mxu0 %v1079
        %v1542 = vpop.f32.mrf.mxu0
        %v1543 = vadd.f32 0.0, %v1542
        %v1544 = vpop.f32.mrf.mxu0
        %v1545 = vpop.f32.mrf.mxu0
        %v1546 = vadd.f32 0.0, %v1545
        %v1547 = vpop.f32.mrf.mxu0
        %1548 = vmatprep.mubr.bf16.mxu0 0
        %1549 = vmatmul.mubr.bf16.gmra.mxu0 %v1080
        %v1550 = vpop.f32.mrf.mxu0
        %v1551 = vadd.f32 0.0, %v1550
        %v1552 = vpop.f32.mrf.mxu0
        %v1553 = vpop.f32.mrf.mxu0
        %v1554 = vadd.f32 0.0, %v1553
        %v1555 = vpop.f32.mrf.mxu0
        %1556 = vmatprep.mubr.bf16.mxu0 0
        %1557 = vmatmul.mubr.bf16.gmra.mxu0 %v1081
        %v1558 = vpop.f32.mrf.mxu0
        %v1559 = vadd.f32 0.0, %v1558
        %v1560 = vpop.f32.mrf.mxu0
        %v1561 = vpop.f32.mrf.mxu0
        %v1562 = vadd.f32 0.0, %v1561
        %v1563 = vpop.f32.mrf.mxu0
        %1564 = vdwg.mxu0
        %v1565 = vpack.c.bf16 %v1184, %v1181
        %v1566 = vpack.c.bf16 %v1192, %v1189
        %v1567 = vpack.c.bf16 %v1200, %v1197
        %v1568 = vpack.c.bf16 %v1208, %v1205
        %v1569 = vpack.c.bf16 %v1216, %v1213
        %v1570 = vpack.c.bf16 %v1224, %v1221
        %v1571 = vpack.c.bf16 %v1232, %v1229
        %v1572 = vpack.c.bf16 %v1240, %v1237
        %v1573 = vpack.c.bf16 %v1345, %v1342
        %v1574 = vpack.c.bf16 %v1353, %v1350
        %v1575 = vpack.c.bf16 %v1361, %v1358
        %v1576 = vpack.c.bf16 %v1369, %v1366
        %v1577 = vpack.c.bf16 %v1377, %v1374
        %v1578 = vpack.c.bf16 %v1385, %v1382
        %v1579 = vpack.c.bf16 %v1393, %v1390
        %v1580 = vpack.c.bf16 %v1401, %v1398
        %v1581 = vpack.c.bf16 %v1506, %v1503
        %v1582 = vpack.c.bf16 %v1514, %v1511
        %v1583 = vpack.c.bf16 %v1522, %v1519
        %v1584 = vpack.c.bf16 %v1530, %v1527
        %v1585 = vpack.c.bf16 %v1538, %v1535
        %v1586 = vpack.c.bf16 %v1546, %v1543
        %v1587 = vpack.c.bf16 %v1554, %v1551
        %v1588 = vpack.c.bf16 %v1562, %v1559
        %vm1589 = vcmask 261120
        %v1591 = vsel %vm1589, %v1565, 0
        %v1594 = vsel %vm1589, %v1566, 0
        %v1597 = vsel %vm1589, %v1567, 0
        %v1600 = vsel %vm1589, %v1568, 0
        %v1603 = vsel %vm1589, %v1569, 0
        %v1606 = vsel %vm1589, %v1570, 0
        %v1609 = vsel %vm1589, %v1571, 0
        %v1612 = vsel %vm1589, %v1572, 0
        %v1615 = vsel %vm1589, %v1573, 0
        %v1618 = vsel %vm1589, %v1574, 0
        %v1621 = vsel %vm1589, %v1575, 0
        %v1624 = vsel %vm1589, %v1576, 0
        %v1627 = vsel %vm1589, %v1577, 0
        %v1630 = vsel %vm1589, %v1578, 0
        %v1633 = vsel %vm1589, %v1579, 0
        %v1636 = vsel %vm1589, %v1580, 0
        %1638 = vmatprep.subr.bf16.mxu0 0
        %1639 = vmatpush1.bf16.xpose.msra.mxu0 %v1636
        %1640 = vmatprep.subr.bf16.mxu0 0
        %1641 = vmatpush1.bf16.xpose.msra.mxu0 %v1633
        %1642 = vmatprep.subr.bf16.mxu0 0
        %1643 = vmatpush1.bf16.xpose.msra.mxu0 %v1630
        %1644 = vmatprep.subr.bf16.mxu0 0
        %1645 = vmatpush1.bf16.xpose.msra.mxu0 %v1627
        %1646 = vmatprep.subr.bf16.mxu0 0
        %1647 = vmatpush1.bf16.xpose.msra.mxu0 %v1624
        %1648 = vmatprep.subr.bf16.mxu0 0
        %1649 = vmatpush1.bf16.xpose.msra.mxu0 %v1621
        %1650 = vmatprep.subr.bf16.mxu0 0
        %1651 = vmatpush1.bf16.xpose.msra.mxu0 %v1618
        %1652 = vmatprep.subr.bf16.mxu0 0
        %1653 = vmatpush1.bf16.xpose.msra.mxu0 %v1615
        %1654 = vmatprep.subr.bf16.mxu0 0
        %1655 = vmatpush2.bf16.xpose.msra.mxu0 0
        %1656 = vmatprep.subr.bf16.mxu0 0
        %1657 = vmatpush2.bf16.xpose.msra.mxu0 0
        %1658 = vmatprep.subr.bf16.mxu0 0
        %1659 = vmatpush2.bf16.xpose.msra.mxu0 0
        %1660 = vmatprep.subr.bf16.mxu0 0
        %1661 = vmatpush2.bf16.xpose.msra.mxu0 0
        %1662 = vmatprep.subr.bf16.mxu0 0
        %1663 = vmatpush2.bf16.xpose.msra.mxu0 0
        %1664 = vmatprep.subr.bf16.mxu0 0
        %1665 = vmatpush2.bf16.xpose.msra.mxu0 0
        %1666 = vmatprep.subr.bf16.mxu0 0
        %1667 = vmatpush2.bf16.xpose.msra.mxu0 0
        %1668 = vmatprep.subr.bf16.mxu0 0
        %1669 = vmatpush2.bf16.xpose.msra.mxu0 0
        %1670 = vmatprep.mubr.bf16.mxu0 0
        %1671 = vmatmul.mubr.bf16.gmra.mxu0 %v1591
        %v1672 = vpop.f32.mrf.mxu0
        %v1673 = vadd.f32 0.0, %v1672
        %v1674 = vpop.f32.mrf.mxu0
        %v1675 = vpop.f32.mrf.mxu0
        %v1676 = vadd.f32 0.0, %v1675
        %v1677 = vpop.f32.mrf.mxu0
        %1678 = vmatprep.mubr.bf16.mxu0 0
        %1679 = vmatmul.mubr.bf16.gmra.mxu0 %v1594
        %v1680 = vpop.f32.mrf.mxu0
        %v1681 = vadd.f32 0.0, %v1680
        %v1682 = vpop.f32.mrf.mxu0
        %v1683 = vpop.f32.mrf.mxu0
        %v1684 = vadd.f32 0.0, %v1683
        %v1685 = vpop.f32.mrf.mxu0
        %1686 = vmatprep.mubr.bf16.mxu0 0
        %1687 = vmatmul.mubr.bf16.gmra.mxu0 %v1597
        %v1688 = vpop.f32.mrf.mxu0
        %v1689 = vadd.f32 0.0, %v1688
        %v1690 = vpop.f32.mrf.mxu0
        %v1691 = vpop.f32.mrf.mxu0
        %v1692 = vadd.f32 0.0, %v1691
        %v1693 = vpop.f32.mrf.mxu0
        %1694 = vmatprep.mubr.bf16.mxu0 0
        %1695 = vmatmul.mubr.bf16.gmra.mxu0 %v1600
        %v1696 = vpop.f32.mrf.mxu0
        %v1697 = vadd.f32 0.0, %v1696
        %v1698 = vpop.f32.mrf.mxu0
        %v1699 = vpop.f32.mrf.mxu0
        %v1700 = vadd.f32 0.0, %v1699
        %v1701 = vpop.f32.mrf.mxu0
        %1702 = vmatprep.mubr.bf16.mxu0 0
        %1703 = vmatmul.mubr.bf16.gmra.mxu0 %v1603
        %v1704 = vpop.f32.mrf.mxu0
        %v1705 = vadd.f32 0.0, %v1704
        %v1706 = vpop.f32.mrf.mxu0
        %v1707 = vpop.f32.mrf.mxu0
        %v1708 = vadd.f32 0.0, %v1707
        %v1709 = vpop.f32.mrf.mxu0
        %1710 = vmatprep.mubr.bf16.mxu0 0
        %1711 = vmatmul.mubr.bf16.gmra.mxu0 %v1606
        %v1712 = vpop.f32.mrf.mxu0
        %v1713 = vadd.f32 0.0, %v1712
        %v1714 = vpop.f32.mrf.mxu0
        %v1715 = vpop.f32.mrf.mxu0
        %v1716 = vadd.f32 0.0, %v1715
        %v1717 = vpop.f32.mrf.mxu0
        %1718 = vmatprep.mubr.bf16.mxu0 0
        %1719 = vmatmul.mubr.bf16.gmra.mxu0 %v1609
        %v1720 = vpop.f32.mrf.mxu0
        %v1721 = vadd.f32 0.0, %v1720
        %v1722 = vpop.f32.mrf.mxu0
        %v1723 = vpop.f32.mrf.mxu0
        %v1724 = vadd.f32 0.0, %v1723
        %v1725 = vpop.f32.mrf.mxu0
        %1726 = vmatprep.mubr.bf16.mxu0 0
        %1727 = vmatmul.mubr.bf16.gmra.mxu0 %v1612
        %v1728 = vpop.f32.mrf.mxu0
        %v1729 = vadd.f32 0.0, %v1728
        %v1730 = vpop.f32.mrf.mxu0
        %v1731 = vpop.f32.mrf.mxu0
        %v1732 = vadd.f32 0.0, %v1731
        %v1733 = vpop.f32.mrf.mxu0
        %1734 = vdwg.mxu0
        %v1735 = vmul.f32 %v1673, 0.17677669
        %v1736 = vmul.f32 %v1676, 0.17677669
        %v1737 = vmul.f32 %v1681, 0.17677669
        %v1738 = vmul.f32 %v1684, 0.17677669
        %v1739 = vmul.f32 %v1689, 0.17677669
        %v1740 = vmul.f32 %v1692, 0.17677669
        %v1741 = vmul.f32 %v1697, 0.17677669
        %v1742 = vmul.f32 %v1700, 0.17677669
        %v1743 = vmul.f32 %v1705, 0.17677669
        %v1744 = vmul.f32 %v1708, 0.17677669
        %v1745 = vmul.f32 %v1713, 0.17677669
        %v1746 = vmul.f32 %v1716, 0.17677669
        %v1747 = vmul.f32 %v1721, 0.17677669
        %v1748 = vmul.f32 %v1724, 0.17677669
        %v1749 = vmul.f32 %v1729, 0.17677669
        %v1750 = vmul.f32 %v1732, 0.17677669
        %v1751 = vadd.f32 %v1735, %v723
        %v1752 = vadd.f32 %v1736, %v724
        %v1753 = vadd.f32 %v1737, %v725
        %v1754 = vadd.f32 %v1738, %v726
        %v1755 = vadd.f32 %v1739, %v727
        %v1756 = vadd.f32 %v1740, %v728
        %v1757 = vadd.f32 %v1741, %v729
        %v1758 = vadd.f32 %v1742, %v730
        %v1759 = vadd.f32 %v1743, %v731
        %v1760 = vadd.f32 %v1744, %v732
        %v1761 = vadd.f32 %v1745, %v733
        %v1762 = vadd.f32 %v1746, %v734
        %v1763 = vadd.f32 %v1747, %v735
        %v1764 = vadd.f32 %v1748, %v736
        %v1765 = vadd.f32 %v1749, %v737
        %v1766 = vadd.f32 %v1750, %v738
        %1767 = vmax.xlane.f32.xlu0 %v1751
        %v1768 = vpop.xlane.xlu0 %1767
        %1769 = vmax.xlane.f32.xlu0 %v1752
        %v1770 = vpop.xlane.xlu0 %1769
        %1771 = vmax.xlane.f32.xlu0 %v1753
        %v1772 = vpop.xlane.xlu0 %1771
        %1773 = vmax.xlane.f32.xlu0 %v1754
        %v1774 = vpop.xlane.xlu0 %1773
        %1775 = vmax.xlane.f32.xlu0 %v1755
        %v1776 = vpop.xlane.xlu0 %1775
        %1777 = vmax.xlane.f32.xlu0 %v1756
        %v1778 = vpop.xlane.xlu0 %1777
        %1779 = vmax.xlane.f32.xlu0 %v1757
        %v1780 = vpop.xlane.xlu0 %1779
        %1781 = vmax.xlane.f32.xlu0 %v1758
        %v1782 = vpop.xlane.xlu0 %1781
        %1783 = vmax.xlane.f32.xlu0 %v1759
        %v1784 = vpop.xlane.xlu0 %1783
        %1785 = vmax.xlane.f32.xlu0 %v1760
        %v1786 = vpop.xlane.xlu0 %1785
        %1787 = vmax.xlane.f32.xlu0 %v1761
        %v1788 = vpop.xlane.xlu0 %1787
        %1789 = vmax.xlane.f32.xlu0 %v1762
        %v1790 = vpop.xlane.xlu0 %1789
        %1791 = vmax.xlane.f32.xlu0 %v1763
        %v1792 = vpop.xlane.xlu0 %1791
        %1793 = vmax.xlane.f32.xlu0 %v1764
        %v1794 = vpop.xlane.xlu0 %1793
        %1795 = vmax.xlane.f32.xlu0 %v1765
        %v1796 = vpop.xlane.xlu0 %1795
        %1797 = vmax.xlane.f32.xlu0 %v1766
        %v1798 = vpop.xlane.xlu0 %1797
        %v1799 = vsub.f32 %v1751, %v1768
        %v1800 = vsub.f32 %v1752, %v1770
        %v1801 = vsub.f32 %v1753, %v1772
        %v1802 = vsub.f32 %v1754, %v1774
        %v1803 = vsub.f32 %v1755, %v1776
        %v1804 = vsub.f32 %v1756, %v1778
        %v1805 = vsub.f32 %v1757, %v1780
        %v1806 = vsub.f32 %v1758, %v1782
        %v1807 = vsub.f32 %v1759, %v1784
        %v1808 = vsub.f32 %v1760, %v1786
        %v1809 = vsub.f32 %v1761, %v1788
        %v1810 = vsub.f32 %v1762, %v1790
        %v1811 = vsub.f32 %v1763, %v1792
        %v1812 = vsub.f32 %v1764, %v1794
        %v1813 = vsub.f32 %v1765, %v1796
        %v1814 = vsub.f32 %v1766, %v1798
        %v1815 = vmul.f32 %v1799, 1.442695
        %v1816 = vpow.pop %v1815
        %v1817 = vmul.f32 %v1800, 1.442695
        %v1818 = vpow.pop %v1817
        %v1819 = vmul.f32 %v1801, 1.442695
        %v1820 = vpow.pop %v1819
        %v1821 = vmul.f32 %v1802, 1.442695
        %v1822 = vpow.pop %v1821
        %v1823 = vmul.f32 %v1803, 1.442695
        %v1824 = vpow.pop %v1823
        %v1825 = vmul.f32 %v1804, 1.442695
        %v1826 = vpow.pop %v1825
        %v1827 = vmul.f32 %v1805, 1.442695
        %v1828 = vpow.pop %v1827
        %v1829 = vmul.f32 %v1806, 1.442695
        %v1830 = vpow.pop %v1829
        %v1831 = vmul.f32 %v1807, 1.442695
        %v1832 = vpow.pop %v1831
        %v1833 = vmul.f32 %v1808, 1.442695
        %v1834 = vpow.pop %v1833
        %v1835 = vmul.f32 %v1809, 1.442695
        %v1836 = vpow.pop %v1835
        %v1837 = vmul.f32 %v1810, 1.442695
        %v1838 = vpow.pop %v1837
        %v1839 = vmul.f32 %v1811, 1.442695
        %v1840 = vpow.pop %v1839
        %v1841 = vmul.f32 %v1812, 1.442695
        %v1842 = vpow.pop %v1841
        %v1843 = vmul.f32 %v1813, 1.442695
        %v1844 = vpow.pop %v1843
        %v1845 = vmul.f32 %v1814, 1.442695
        %v1846 = vpow.pop %v1845
        %1847 = vadd.xlane.f32.xlu0 %v1816
        %v1848 = vpop.xlane.xlu0 %1847
        %1849 = vadd.xlane.f32.xlu0 %v1818
        %v1850 = vpop.xlane.xlu0 %1849
        %1851 = vadd.xlane.f32.xlu0 %v1820
        %v1852 = vpop.xlane.xlu0 %1851
        %1853 = vadd.xlane.f32.xlu0 %v1822
        %v1854 = vpop.xlane.xlu0 %1853
        %1855 = vadd.xlane.f32.xlu0 %v1824
        %v1856 = vpop.xlane.xlu0 %1855
        %1857 = vadd.xlane.f32.xlu0 %v1826
        %v1858 = vpop.xlane.xlu0 %1857
        %1859 = vadd.xlane.f32.xlu0 %v1828
        %v1860 = vpop.xlane.xlu0 %1859
        %1861 = vadd.xlane.f32.xlu0 %v1830
        %v1862 = vpop.xlane.xlu0 %1861
        %1863 = vadd.xlane.f32.xlu0 %v1832
        %v1864 = vpop.xlane.xlu0 %1863
        %1865 = vadd.xlane.f32.xlu0 %v1834
        %v1866 = vpop.xlane.xlu0 %1865
        %1867 = vadd.xlane.f32.xlu0 %v1836
        %v1868 = vpop.xlane.xlu0 %1867
        %1869 = vadd.xlane.f32.xlu0 %v1838
        %v1870 = vpop.xlane.xlu0 %1869
        %1871 = vadd.xlane.f32.xlu0 %v1840
        %v1872 = vpop.xlane.xlu0 %1871
        %1873 = vadd.xlane.f32.xlu0 %v1842
        %v1874 = vpop.xlane.xlu0 %1873
        %1875 = vadd.xlane.f32.xlu0 %v1844
        %v1876 = vpop.xlane.xlu0 %1875
        %1877 = vadd.xlane.f32.xlu0 %v1846
        %v1878 = vpop.xlane.xlu0 %1877
        %v1879 = vrcp.pop %v1848
        %v1880 = vrcp.pop %v1850
        %v1881 = vrcp.pop %v1852
        %v1882 = vrcp.pop %v1854
        %v1883 = vrcp.pop %v1856
        %v1884 = vrcp.pop %v1858
        %v1885 = vrcp.pop %v1860
        %v1886 = vrcp.pop %v1862
        %v1887 = vrcp.pop %v1864
        %v1888 = vrcp.pop %v1866
        %v1889 = vrcp.pop %v1868
        %v1890 = vrcp.pop %v1870
        %v1891 = vrcp.pop %v1872
        %v1892 = vrcp.pop %v1874
        %v1893 = vrcp.pop %v1876
        %v1894 = vrcp.pop %v1878
        %v1895 = vmul.f32 %v1816, %v1879
        %v1896 = vmul.f32 %v1818, %v1880
        %v1897 = vmul.f32 %v1820, %v1881
        %v1898 = vmul.f32 %v1822, %v1882
        %v1899 = vmul.f32 %v1824, %v1883
        %v1900 = vmul.f32 %v1826, %v1884
        %v1901 = vmul.f32 %v1828, %v1885
        %v1902 = vmul.f32 %v1830, %v1886
        %v1903 = vmul.f32 %v1832, %v1887
        %v1904 = vmul.f32 %v1834, %v1888
        %v1905 = vmul.f32 %v1836, %v1889
        %v1906 = vmul.f32 %v1838, %v1890
        %v1907 = vmul.f32 %v1840, %v1891
        %v1908 = vmul.f32 %v1842, %v1892
        %v1909 = vmul.f32 %v1844, %v1893
        %v1910 = vmul.f32 %v1846, %v1894
        %v1911 = vpack.c.bf16 %v1896, %v1895
        %v1912 = vpack.c.bf16 %v1898, %v1897
        %v1913 = vpack.c.bf16 %v1900, %v1899
        %v1914 = vpack.c.bf16 %v1902, %v1901
        %v1915 = vpack.c.bf16 %v1904, %v1903
        %v1916 = vpack.c.bf16 %v1906, %v1905
        %v1917 = vpack.c.bf16 %v1908, %v1907
        %v1918 = vpack.c.bf16 %v1910, %v1909
        %1919 = vmatprep.subr.bf16.mxu0 0
        %1920 = vmatpush1.bf16.msra.mxu0 %v1588
        %1921 = vmatprep.subr.bf16.mxu0 0
        %1922 = vmatpush1.bf16.msra.mxu0 %v1587
        %1923 = vmatprep.subr.bf16.mxu0 0
        %1924 = vmatpush1.bf16.msra.mxu0 %v1586
        %1925 = vmatprep.subr.bf16.mxu0 0
        %1926 = vmatpush1.bf16.msra.mxu0 %v1585
        %1927 = vmatprep.subr.bf16.mxu0 0
        %1928 = vmatpush1.bf16.msra.mxu0 %v1584
        %1929 = vmatprep.subr.bf16.mxu0 0
        %1930 = vmatpush1.bf16.msra.mxu0 %v1583
        %1931 = vmatprep.subr.bf16.mxu0 0
        %1932 = vmatpush1.bf16.msra.mxu0 %v1582
        %1933 = vmatprep.subr.bf16.mxu0 0
        %1934 = vmatpush1.bf16.msra.mxu0 %v1581
        %1935 = vmatprep.subr.bf16.mxu0 0
        %1936 = vmatpush2.bf16.msra.mxu0 0
        %1937 = vmatprep.subr.bf16.mxu0 0
        %1938 = vmatpush2.bf16.msra.mxu0 0
        %1939 = vmatprep.subr.bf16.mxu0 0
        %1940 = vmatpush2.bf16.msra.mxu0 0
        %1941 = vmatprep.subr.bf16.mxu0 0
        %1942 = vmatpush2.bf16.msra.mxu0 0
        %1943 = vmatprep.subr.bf16.mxu0 0
        %1944 = vmatpush2.bf16.msra.mxu0 0
        %1945 = vmatprep.subr.bf16.mxu0 0
        %1946 = vmatpush2.bf16.msra.mxu0 0
        %1947 = vmatprep.subr.bf16.mxu0 0
        %1948 = vmatpush2.bf16.msra.mxu0 0
        %1949 = vmatprep.subr.bf16.mxu0 0
        %1950 = vmatpush2.bf16.msra.mxu0 0
        %1951 = vmatprep.mubr.bf16.mxu0 0
        %1952 = vmatmul.mubr.bf16.gmra.mxu0 %v1911
        %v1953 = vpop.f32.mrf.mxu0
        %v1954 = vadd.f32 0.0, %v1953
        %v1955 = vpop.f32.mrf.mxu0
        %v1956 = vpop.f32.mrf.mxu0
        %v1957 = vadd.f32 0.0, %v1956
        %v1958 = vpop.f32.mrf.mxu0
        %1959 = vmatprep.mubr.bf16.mxu0 0
        %1960 = vmatmul.mubr.bf16.gmra.mxu0 %v1912
        %v1961 = vpop.f32.mrf.mxu0
        %v1962 = vadd.f32 0.0, %v1961
        %v1963 = vpop.f32.mrf.mxu0
        %v1964 = vpop.f32.mrf.mxu0
        %v1965 = vadd.f32 0.0, %v1964
        %v1966 = vpop.f32.mrf.mxu0
        %1967 = vmatprep.mubr.bf16.mxu0 0
        %1968 = vmatmul.mubr.bf16.gmra.mxu0 %v1913
        %v1969 = vpop.f32.mrf.mxu0
        %v1970 = vadd.f32 0.0, %v1969
        %v1971 = vpop.f32.mrf.mxu0
        %v1972 = vpop.f32.mrf.mxu0
        %v1973 = vadd.f32 0.0, %v1972
        %v1974 = vpop.f32.mrf.mxu0
        %1975 = vmatprep.mubr.bf16.mxu0 0
        %1976 = vmatmul.mubr.bf16.gmra.mxu0 %v1914
        %v1977 = vpop.f32.mrf.mxu0
        %v1978 = vadd.f32 0.0, %v1977
        %v1979 = vpop.f32.mrf.mxu0
        %v1980 = vpop.f32.mrf.mxu0
        %v1981 = vadd.f32 0.0, %v1980
        %v1982 = vpop.f32.mrf.mxu0
        %1983 = vmatprep.mubr.bf16.mxu0 0
        %1984 = vmatmul.mubr.bf16.gmra.mxu0 %v1915
        %v1985 = vpop.f32.mrf.mxu0
        %v1986 = vadd.f32 0.0, %v1985
        %v1987 = vpop.f32.mrf.mxu0
        %v1988 = vpop.f32.mrf.mxu0
        %v1989 = vadd.f32 0.0, %v1988
        %v1990 = vpop.f32.mrf.mxu0
        %1991 = vmatprep.mubr.bf16.mxu0 0
        %1992 = vmatmul.mubr.bf16.gmra.mxu0 %v1916
        %v1993 = vpop.f32.mrf.mxu0
        %v1994 = vadd.f32 0.0, %v1993
        %v1995 = vpop.f32.mrf.mxu0
        %v1996 = vpop.f32.mrf.mxu0
        %v1997 = vadd.f32 0.0, %v1996
        %v1998 = vpop.f32.mrf.mxu0
        %1999 = vmatprep.mubr.bf16.mxu0 0
        %2000 = vmatmul.mubr.bf16.gmra.mxu0 %v1917
        %v2001 = vpop.f32.mrf.mxu0
        %v2002 = vadd.f32 0.0, %v2001
        %v2003 = vpop.f32.mrf.mxu0
        %v2004 = vpop.f32.mrf.mxu0
        %v2005 = vadd.f32 0.0, %v2004
        %v2006 = vpop.f32.mrf.mxu0
        %2007 = vmatprep.mubr.bf16.mxu0 0
        %2008 = vmatmul.mubr.bf16.gmra.mxu0 %v1918
        %v2009 = vpop.f32.mrf.mxu0
        %v2010 = vadd.f32 0.0, %v2009
        %v2011 = vpop.f32.mrf.mxu0
        %v2012 = vpop.f32.mrf.mxu0
        %v2013 = vadd.f32 0.0, %v2012
        %v2014 = vpop.f32.mrf.mxu0
        %2015 = vdwg.mxu0
        %2024 = vrot.lane.b32.xlu0 %v1565, 96
        %v2025 = vpop.permute.xlu0 %2024
        %2026 = vrot.lane.b32.xlu0 %v1566, 96
        %v2027 = vpop.permute.xlu0 %2026
        %2028 = vrot.lane.b32.xlu0 %v1567, 96
        %v2029 = vpop.permute.xlu0 %2028
        %2030 = vrot.lane.b32.xlu0 %v1568, 96
        %v2031 = vpop.permute.xlu0 %2030
        %2032 = vrot.lane.b32.xlu0 %v1569, 96
        %v2033 = vpop.permute.xlu0 %2032
        %2034 = vrot.lane.b32.xlu0 %v1570, 96
        %v2035 = vpop.permute.xlu0 %2034
        %2036 = vrot.lane.b32.xlu0 %v1571, 96
        %v2037 = vpop.permute.xlu0 %2036
        %2038 = vrot.lane.b32.xlu0 %v1572, 96
        %v2039 = vpop.permute.xlu0 %2038
        %2048 = vrot.lane.b32.xlu0 %v1573, 96
        %v2049 = vpop.permute.xlu0 %2048
        %2050 = vrot.lane.b32.xlu0 %v1574, 96
        %v2051 = vpop.permute.xlu0 %2050
        %2052 = vrot.lane.b32.xlu0 %v1575, 96
        %v2053 = vpop.permute.xlu0 %2052
        %2054 = vrot.lane.b32.xlu0 %v1576, 96
        %v2055 = vpop.permute.xlu0 %2054
        %2056 = vrot.lane.b32.xlu0 %v1577, 96
        %v2057 = vpop.permute.xlu0 %2056
        %2058 = vrot.lane.b32.xlu0 %v1578, 96
        %v2059 = vpop.permute.xlu0 %2058
        %2060 = vrot.lane.b32.xlu0 %v1579, 96
        %v2061 = vpop.permute.xlu0 %2060
        %2062 = vrot.lane.b32.xlu0 %v1580, 96
        %v2063 = vpop.permute.xlu0 %2062
        %v2065 = vsel %vm1589, %v2025, 0
        %v2068 = vsel %vm1589, %v2027, 0
        %v2071 = vsel %vm1589, %v2029, 0
        %v2074 = vsel %vm1589, %v2031, 0
        %v2077 = vsel %vm1589, %v2033, 0
        %v2080 = vsel %vm1589, %v2035, 0
        %v2083 = vsel %vm1589, %v2037, 0
        %v2086 = vsel %vm1589, %v2039, 0
        %v2089 = vsel %vm1589, %v2049, 0
        %v2092 = vsel %vm1589, %v2051, 0
        %v2095 = vsel %vm1589, %v2053, 0
        %v2098 = vsel %vm1589, %v2055, 0
        %v2101 = vsel %vm1589, %v2057, 0
        %v2104 = vsel %vm1589, %v2059, 0
        %v2107 = vsel %vm1589, %v2061, 0
        %v2110 = vsel %vm1589, %v2063, 0
        %2112 = vmatprep.subr.bf16.mxu0 0
        %2113 = vmatpush1.bf16.xpose.msra.mxu0 %v2110
        %2114 = vmatprep.subr.bf16.mxu0 0
        %2115 = vmatpush1.bf16.xpose.msra.mxu0 %v2107
        %2116 = vmatprep.subr.bf16.mxu0 0
        %2117 = vmatpush1.bf16.xpose.msra.mxu0 %v2104
        %2118 = vmatprep.subr.bf16.mxu0 0
        %2119 = vmatpush1.bf16.xpose.msra.mxu0 %v2101
        %2120 = vmatprep.subr.bf16.mxu0 0
        %2121 = vmatpush1.bf16.xpose.msra.mxu0 %v2098
        %2122 = vmatprep.subr.bf16.mxu0 0
        %2123 = vmatpush1.bf16.xpose.msra.mxu0 %v2095
        %2124 = vmatprep.subr.bf16.mxu0 0
        %2125 = vmatpush1.bf16.xpose.msra.mxu0 %v2092
        %2126 = vmatprep.subr.bf16.mxu0 0
        %2127 = vmatpush1.bf16.xpose.msra.mxu0 %v2089
        %2128 = vmatprep.subr.bf16.mxu0 0
        %2129 = vmatpush2.bf16.xpose.msra.mxu0 0
        %2130 = vmatprep.subr.bf16.mxu0 0
        %2131 = vmatpush2.bf16.xpose.msra.mxu0 0
        %2132 = vmatprep.subr.bf16.mxu0 0
        %2133 = vmatpush2.bf16.xpose.msra.mxu0 0
        %2134 = vmatprep.subr.bf16.mxu0 0
        %2135 = vmatpush2.bf16.xpose.msra.mxu0 0
        %2136 = vmatprep.subr.bf16.mxu0 0
        %2137 = vmatpush2.bf16.xpose.msra.mxu0 0
        %2138 = vmatprep.subr.bf16.mxu0 0
        %2139 = vmatpush2.bf16.xpose.msra.mxu0 0
        %2140 = vmatprep.subr.bf16.mxu0 0
        %2141 = vmatpush2.bf16.xpose.msra.mxu0 0
        %2142 = vmatprep.subr.bf16.mxu0 0
        %2143 = vmatpush2.bf16.xpose.msra.mxu0 0
        %2144 = vmatprep.mubr.bf16.mxu0 0
        %2145 = vmatmul.mubr.bf16.gmra.mxu0 %v2065
        %v2146 = vpop.f32.mrf.mxu0
        %v2147 = vadd.f32 0.0, %v2146
        %v2148 = vpop.f32.mrf.mxu0
        %v2149 = vpop.f32.mrf.mxu0
        %v2150 = vadd.f32 0.0, %v2149
        %v2151 = vpop.f32.mrf.mxu0
        %2152 = vmatprep.mubr.bf16.mxu0 0
        %2153 = vmatmul.mubr.bf16.gmra.mxu0 %v2068
        %v2154 = vpop.f32.mrf.mxu0
        %v2155 = vadd.f32 0.0, %v2154
        %v2156 = vpop.f32.mrf.mxu0
        %v2157 = vpop.f32.mrf.mxu0
        %v2158 = vadd.f32 0.0, %v2157
        %v2159 = vpop.f32.mrf.mxu0
        %2160 = vmatprep.mubr.bf16.mxu0 0
        %2161 = vmatmul.mubr.bf16.gmra.mxu0 %v2071
        %v2162 = vpop.f32.mrf.mxu0
        %v2163 = vadd.f32 0.0, %v2162
        %v2164 = vpop.f32.mrf.mxu0
        %v2165 = vpop.f32.mrf.mxu0
        %v2166 = vadd.f32 0.0, %v2165
        %v2167 = vpop.f32.mrf.mxu0
        %2168 = vmatprep.mubr.bf16.mxu0 0
        %2169 = vmatmul.mubr.bf16.gmra.mxu0 %v2074
        %v2170 = vpop.f32.mrf.mxu0
        %v2171 = vadd.f32 0.0, %v2170
        %v2172 = vpop.f32.mrf.mxu0
        %v2173 = vpop.f32.mrf.mxu0
        %v2174 = vadd.f32 0.0, %v2173
        %v2175 = vpop.f32.mrf.mxu0
        %2176 = vmatprep.mubr.bf16.mxu0 0
        %2177 = vmatmul.mubr.bf16.gmra.mxu0 %v2077
        %v2178 = vpop.f32.mrf.mxu0
        %v2179 = vadd.f32 0.0, %v2178
        %v2180 = vpop.f32.mrf.mxu0
        %v2181 = vpop.f32.mrf.mxu0
        %v2182 = vadd.f32 0.0, %v2181
        %v2183 = vpop.f32.mrf.mxu0
        %2184 = vmatprep.mubr.bf16.mxu0 0
        %2185 = vmatmul.mubr.bf16.gmra.mxu0 %v2080
        %v2186 = vpop.f32.mrf.mxu0
        %v2187 = vadd.f32 0.0, %v2186
        %v2188 = vpop.f32.mrf.mxu0
        %v2189 = vpop.f32.mrf.mxu0
        %v2190 = vadd.f32 0.0, %v2189
        %v2191 = vpop.f32.mrf.mxu0
        %2192 = vmatprep.mubr.bf16.mxu0 0
        %2193 = vmatmul.mubr.bf16.gmra.mxu0 %v2083
        %v2194 = vpop.f32.mrf.mxu0
        %v2195 = vadd.f32 0.0, %v2194
        %v2196 = vpop.f32.mrf.mxu0
        %v2197 = vpop.f32.mrf.mxu0
        %v2198 = vadd.f32 0.0, %v2197
        %v2199 = vpop.f32.mrf.mxu0
        %2200 = vmatprep.mubr.bf16.mxu0 0
        %2201 = vmatmul.mubr.bf16.gmra.mxu0 %v2086
        %v2202 = vpop.f32.mrf.mxu0
        %v2203 = vadd.f32 0.0, %v2202
        %v2204 = vpop.f32.mrf.mxu0
        %v2205 = vpop.f32.mrf.mxu0
        %v2206 = vadd.f32 0.0, %v2205
        %v2207 = vpop.f32.mrf.mxu0
        %2208 = vdwg.mxu0
        %v2209 = vmul.f32 %v2147, 0.17677669
        %v2210 = vmul.f32 %v2150, 0.17677669
        %v2211 = vmul.f32 %v2155, 0.17677669
        %v2212 = vmul.f32 %v2158, 0.17677669
        %v2213 = vmul.f32 %v2163, 0.17677669
        %v2214 = vmul.f32 %v2166, 0.17677669
        %v2215 = vmul.f32 %v2171, 0.17677669
        %v2216 = vmul.f32 %v2174, 0.17677669
        %v2217 = vmul.f32 %v2179, 0.17677669
        %v2218 = vmul.f32 %v2182, 0.17677669
        %v2219 = vmul.f32 %v2187, 0.17677669
        %v2220 = vmul.f32 %v2190, 0.17677669
        %v2221 = vmul.f32 %v2195, 0.17677669
        %v2222 = vmul.f32 %v2198, 0.17677669
        %v2223 = vmul.f32 %v2203, 0.17677669
        %v2224 = vmul.f32 %v2206, 0.17677669
        %v2225 = vadd.f32 %v2209, %v723
        %v2226 = vadd.f32 %v2210, %v724
        %v2227 = vadd.f32 %v2211, %v725
        %v2228 = vadd.f32 %v2212, %v726
        %v2229 = vadd.f32 %v2213, %v727
        %v2230 = vadd.f32 %v2214, %v728
        %v2231 = vadd.f32 %v2215, %v729
        %v2232 = vadd.f32 %v2216, %v730
        %v2233 = vadd.f32 %v2217, %v731
        %v2234 = vadd.f32 %v2218, %v732
        %v2235 = vadd.f32 %v2219, %v733
        %v2236 = vadd.f32 %v2220, %v734
        %v2237 = vadd.f32 %v2221, %v735
        %v2238 = vadd.f32 %v2222, %v736
        %v2239 = vadd.f32 %v2223, %v737
        %v2240 = vadd.f32 %v2224, %v738
        %2241 = vmax.xlane.f32.xlu0 %v2225
        %v2242 = vpop.xlane.xlu0 %2241
        %2243 = vmax.xlane.f32.xlu0 %v2226
        %v2244 = vpop.xlane.xlu0 %2243
        %2245 = vmax.xlane.f32.xlu0 %v2227
        %v2246 = vpop.xlane.xlu0 %2245
        %2247 = vmax.xlane.f32.xlu0 %v2228
        %v2248 = vpop.xlane.xlu0 %2247
        %2249 = vmax.xlane.f32.xlu0 %v2229
        %v2250 = vpop.xlane.xlu0 %2249
        %2251 = vmax.xlane.f32.xlu0 %v2230
        %v2252 = vpop.xlane.xlu0 %2251
        %2253 = vmax.xlane.f32.xlu0 %v2231
        %v2254 = vpop.xlane.xlu0 %2253
        %2255 = vmax.xlane.f32.xlu0 %v2232
        %v2256 = vpop.xlane.xlu0 %2255
        %2257 = vmax.xlane.f32.xlu0 %v2233
        %v2258 = vpop.xlane.xlu0 %2257
        %2259 = vmax.xlane.f32.xlu0 %v2234
        %v2260 = vpop.xlane.xlu0 %2259
        %2261 = vmax.xlane.f32.xlu0 %v2235
        %v2262 = vpop.xlane.xlu0 %2261
        %2263 = vmax.xlane.f32.xlu0 %v2236
        %v2264 = vpop.xlane.xlu0 %2263
        %2265 = vmax.xlane.f32.xlu0 %v2237
        %v2266 = vpop.xlane.xlu0 %2265
        %2267 = vmax.xlane.f32.xlu0 %v2238
        %v2268 = vpop.xlane.xlu0 %2267
        %2269 = vmax.xlane.f32.xlu0 %v2239
        %v2270 = vpop.xlane.xlu0 %2269
        %2271 = vmax.xlane.f32.xlu0 %v2240
        %v2272 = vpop.xlane.xlu0 %2271
        %v2273 = vsub.f32 %v2225, %v2242
        %v2274 = vsub.f32 %v2226, %v2244
        %v2275 = vsub.f32 %v2227, %v2246
        %v2276 = vsub.f32 %v2228, %v2248
        %v2277 = vsub.f32 %v2229, %v2250
        %v2278 = vsub.f32 %v2230, %v2252
        %v2279 = vsub.f32 %v2231, %v2254
        %v2280 = vsub.f32 %v2232, %v2256
        %v2281 = vsub.f32 %v2233, %v2258
        %v2282 = vsub.f32 %v2234, %v2260
        %v2283 = vsub.f32 %v2235, %v2262
        %v2284 = vsub.f32 %v2236, %v2264
        %v2285 = vsub.f32 %v2237, %v2266
        %v2286 = vsub.f32 %v2238, %v2268
        %v2287 = vsub.f32 %v2239, %v2270
        %v2288 = vsub.f32 %v2240, %v2272
        %v2289 = vmul.f32 %v2273, 1.442695
        %v2290 = vpow.pop %v2289
        %v2291 = vmul.f32 %v2274, 1.442695
        %v2292 = vpow.pop %v2291
        %v2293 = vmul.f32 %v2275, 1.442695
        %v2294 = vpow.pop %v2293
        %v2295 = vmul.f32 %v2276, 1.442695
        %v2296 = vpow.pop %v2295
        %v2297 = vmul.f32 %v2277, 1.442695
        %v2298 = vpow.pop %v2297
        %v2299 = vmul.f32 %v2278, 1.442695
        %v2300 = vpow.pop %v2299
        %v2301 = vmul.f32 %v2279, 1.442695
        %v2302 = vpow.pop %v2301
        %v2303 = vmul.f32 %v2280, 1.442695
        %v2304 = vpow.pop %v2303
        %v2305 = vmul.f32 %v2281, 1.442695
        %v2306 = vpow.pop %v2305
        %v2307 = vmul.f32 %v2282, 1.442695
        %v2308 = vpow.pop %v2307
        %v2309 = vmul.f32 %v2283, 1.442695
        %v2310 = vpow.pop %v2309
        %v2311 = vmul.f32 %v2284, 1.442695
        %v2312 = vpow.pop %v2311
        %v2313 = vmul.f32 %v2285, 1.442695
        %v2314 = vpow.pop %v2313
        %v2315 = vmul.f32 %v2286, 1.442695
        %v2316 = vpow.pop %v2315
        %v2317 = vmul.f32 %v2287, 1.442695
        %v2318 = vpow.pop %v2317
        %v2319 = vmul.f32 %v2288, 1.442695
        %v2320 = vpow.pop %v2319
        %2321 = vadd.xlane.f32.xlu0 %v2290
        %v2322 = vpop.xlane.xlu0 %2321
        %2323 = vadd.xlane.f32.xlu0 %v2292
        %v2324 = vpop.xlane.xlu0 %2323
        %2325 = vadd.xlane.f32.xlu0 %v2294
        %v2326 = vpop.xlane.xlu0 %2325
        %2327 = vadd.xlane.f32.xlu0 %v2296
        %v2328 = vpop.xlane.xlu0 %2327
        %2329 = vadd.xlane.f32.xlu0 %v2298
        %v2330 = vpop.xlane.xlu0 %2329
        %2331 = vadd.xlane.f32.xlu0 %v2300
        %v2332 = vpop.xlane.xlu0 %2331
        %2333 = vadd.xlane.f32.xlu0 %v2302
        %v2334 = vpop.xlane.xlu0 %2333
        %2335 = vadd.xlane.f32.xlu0 %v2304
        %v2336 = vpop.xlane.xlu0 %2335
        %2337 = vadd.xlane.f32.xlu0 %v2306
        %v2338 = vpop.xlane.xlu0 %2337
        %2339 = vadd.xlane.f32.xlu0 %v2308
        %v2340 = vpop.xlane.xlu0 %2339
        %2341 = vadd.xlane.f32.xlu0 %v2310
        %v2342 = vpop.xlane.xlu0 %2341
        %2343 = vadd.xlane.f32.xlu0 %v2312
        %v2344 = vpop.xlane.xlu0 %2343
        %2345 = vadd.xlane.f32.xlu0 %v2314
        %v2346 = vpop.xlane.xlu0 %2345
        %2347 = vadd.xlane.f32.xlu0 %v2316
        %v2348 = vpop.xlane.xlu0 %2347
        %2349 = vadd.xlane.f32.xlu0 %v2318
        %v2350 = vpop.xlane.xlu0 %2349
        %2351 = vadd.xlane.f32.xlu0 %v2320
        %v2352 = vpop.xlane.xlu0 %2351
        %v2353 = vrcp.pop %v2322
        %v2354 = vrcp.pop %v2324
        %v2355 = vrcp.pop %v2326
        %v2356 = vrcp.pop %v2328
        %v2357 = vrcp.pop %v2330
        %v2358 = vrcp.pop %v2332
        %v2359 = vrcp.pop %v2334
        %v2360 = vrcp.pop %v2336
        %v2361 = vrcp.pop %v2338
        %v2362 = vrcp.pop %v2340
        %v2363 = vrcp.pop %v2342
        %v2364 = vrcp.pop %v2344
        %v2365 = vrcp.pop %v2346
        %v2366 = vrcp.pop %v2348
        %v2367 = vrcp.pop %v2350
        %v2368 = vrcp.pop %v2352
        %v2369 = vmul.f32 %v2290, %v2353
        %v2370 = vmul.f32 %v2292, %v2354
        %v2371 = vmul.f32 %v2294, %v2355
        %v2372 = vmul.f32 %v2296, %v2356
        %v2373 = vmul.f32 %v2298, %v2357
        %v2374 = vmul.f32 %v2300, %v2358
        %v2375 = vmul.f32 %v2302, %v2359
        %v2376 = vmul.f32 %v2304, %v2360
        %v2377 = vmul.f32 %v2306, %v2361
        %v2378 = vmul.f32 %v2308, %v2362
        %v2379 = vmul.f32 %v2310, %v2363
        %v2380 = vmul.f32 %v2312, %v2364
        %v2381 = vmul.f32 %v2314, %v2365
        %v2382 = vmul.f32 %v2316, %v2366
        %v2383 = vmul.f32 %v2318, %v2367
        %v2384 = vmul.f32 %v2320, %v2368
        %v2385 = vpack.c.bf16 %v2370, %v2369
        %v2386 = vpack.c.bf16 %v2372, %v2371
        %v2387 = vpack.c.bf16 %v2374, %v2373
        %v2388 = vpack.c.bf16 %v2376, %v2375
        %v2389 = vpack.c.bf16 %v2378, %v2377
        %v2390 = vpack.c.bf16 %v2380, %v2379
        %v2391 = vpack.c.bf16 %v2382, %v2381
        %v2392 = vpack.c.bf16 %v2384, %v2383
        %2401 = vrot.lane.b32.xlu0 %v1581, 96
        %v2402 = vpop.permute.xlu0 %2401
        %2403 = vrot.lane.b32.xlu0 %v1582, 96
        %v2404 = vpop.permute.xlu0 %2403
        %2405 = vrot.lane.b32.xlu0 %v1583, 96
        %v2406 = vpop.permute.xlu0 %2405
        %2407 = vrot.lane.b32.xlu0 %v1584, 96
        %v2408 = vpop.permute.xlu0 %2407
        %2409 = vrot.lane.b32.xlu0 %v1585, 96
        %v2410 = vpop.permute.xlu0 %2409
        %2411 = vrot.lane.b32.xlu0 %v1586, 96
        %v2412 = vpop.permute.xlu0 %2411
        %2413 = vrot.lane.b32.xlu0 %v1587, 96
        %v2414 = vpop.permute.xlu0 %2413
        %2415 = vrot.lane.b32.xlu0 %v1588, 96
        %v2416 = vpop.permute.xlu0 %2415
        %2425 = vmatprep.subr.bf16.mxu0 0
        %2426 = vmatpush1.bf16.msra.mxu0 %v2416
        %2427 = vmatprep.subr.bf16.mxu0 0
        %2428 = vmatpush1.bf16.msra.mxu0 %v2414
        %2429 = vmatprep.subr.bf16.mxu0 0
        %2430 = vmatpush1.bf16.msra.mxu0 %v2412
        %2431 = vmatprep.subr.bf16.mxu0 0
        %2432 = vmatpush1.bf16.msra.mxu0 %v2410
        %2433 = vmatprep.subr.bf16.mxu0 0
        %2434 = vmatpush1.bf16.msra.mxu0 %v2408
        %2435 = vmatprep.subr.bf16.mxu0 0
        %2436 = vmatpush1.bf16.msra.mxu0 %v2406
        %2437 = vmatprep.subr.bf16.mxu0 0
        %2438 = vmatpush1.bf16.msra.mxu0 %v2404
        %2439 = vmatprep.subr.bf16.mxu0 0
        %2440 = vmatpush1.bf16.msra.mxu0 %v2402
        %2441 = vmatprep.subr.bf16.mxu0 0
        %2442 = vmatpush2.bf16.msra.mxu0 0
        %2443 = vmatprep.subr.bf16.mxu0 0
        %2444 = vmatpush2.bf16.msra.mxu0 0
        %2445 = vmatprep.subr.bf16.mxu0 0
        %2446 = vmatpush2.bf16.msra.mxu0 0
        %2447 = vmatprep.subr.bf16.mxu0 0
        %2448 = vmatpush2.bf16.msra.mxu0 0
        %2449 = vmatprep.subr.bf16.mxu0 0
        %2450 = vmatpush2.bf16.msra.mxu0 0
        %2451 = vmatprep.subr.bf16.mxu0 0
        %2452 = vmatpush2.bf16.msra.mxu0 0
        %2453 = vmatprep.subr.bf16.mxu0 0
        %2454 = vmatpush2.bf16.msra.mxu0 0
        %2455 = vmatprep.subr.bf16.mxu0 0
        %2456 = vmatpush2.bf16.msra.mxu0 0
        %2457 = vmatprep.mubr.bf16.mxu0 0
        %2458 = vmatmul.mubr.bf16.gmra.mxu0 %v2385
        %v2459 = vpop.f32.mrf.mxu0
        %v2460 = vadd.f32 0.0, %v2459
        %v2461 = vpop.f32.mrf.mxu0
        %v2462 = vpop.f32.mrf.mxu0
        %v2463 = vadd.f32 0.0, %v2462
        %v2464 = vpop.f32.mrf.mxu0
        %2465 = vmatprep.mubr.bf16.mxu0 0
        %2466 = vmatmul.mubr.bf16.gmra.mxu0 %v2386
        %v2467 = vpop.f32.mrf.mxu0
        %v2468 = vadd.f32 0.0, %v2467
        %v2469 = vpop.f32.mrf.mxu0
        %v2470 = vpop.f32.mrf.mxu0
        %v2471 = vadd.f32 0.0, %v2470
        %v2472 = vpop.f32.mrf.mxu0
        %2473 = vmatprep.mubr.bf16.mxu0 0
        %2474 = vmatmul.mubr.bf16.gmra.mxu0 %v2387
        %v2475 = vpop.f32.mrf.mxu0
        %v2476 = vadd.f32 0.0, %v2475
        %v2477 = vpop.f32.mrf.mxu0
        %v2478 = vpop.f32.mrf.mxu0
        %v2479 = vadd.f32 0.0, %v2478
        %v2480 = vpop.f32.mrf.mxu0
        %2481 = vmatprep.mubr.bf16.mxu0 0
        %2482 = vmatmul.mubr.bf16.gmra.mxu0 %v2388
        %v2483 = vpop.f32.mrf.mxu0
        %v2484 = vadd.f32 0.0, %v2483
        %v2485 = vpop.f32.mrf.mxu0
        %v2486 = vpop.f32.mrf.mxu0
        %v2487 = vadd.f32 0.0, %v2486
        %v2488 = vpop.f32.mrf.mxu0
        %2489 = vmatprep.mubr.bf16.mxu0 0
        %2490 = vmatmul.mubr.bf16.gmra.mxu0 %v2389
        %v2491 = vpop.f32.mrf.mxu0
        %v2492 = vadd.f32 0.0, %v2491
        %v2493 = vpop.f32.mrf.mxu0
        %v2494 = vpop.f32.mrf.mxu0
        %v2495 = vadd.f32 0.0, %v2494
        %v2496 = vpop.f32.mrf.mxu0
        %2497 = vmatprep.mubr.bf16.mxu0 0
        %2498 = vmatmul.mubr.bf16.gmra.mxu0 %v2390
        %v2499 = vpop.f32.mrf.mxu0
        %v2500 = vadd.f32 0.0, %v2499
        %v2501 = vpop.f32.mrf.mxu0
        %v2502 = vpop.f32.mrf.mxu0
        %v2503 = vadd.f32 0.0, %v2502
        %v2504 = vpop.f32.mrf.mxu0
        %2505 = vmatprep.mubr.bf16.mxu0 0
        %2506 = vmatmul.mubr.bf16.gmra.mxu0 %v2391
        %v2507 = vpop.f32.mrf.mxu0
        %v2508 = vadd.f32 0.0, %v2507
        %v2509 = vpop.f32.mrf.mxu0
        %v2510 = vpop.f32.mrf.mxu0
        %v2511 = vadd.f32 0.0, %v2510
        %v2512 = vpop.f32.mrf.mxu0
        %2513 = vmatprep.mubr.bf16.mxu0 0
        %2514 = vmatmul.mubr.bf16.gmra.mxu0 %v2392
        %v2515 = vpop.f32.mrf.mxu0
        %v2516 = vadd.f32 0.0, %v2515
        %v2517 = vpop.f32.mrf.mxu0
        %v2518 = vpop.f32.mrf.mxu0
        %v2519 = vadd.f32 0.0, %v2518
        %v2520 = vpop.f32.mrf.mxu0
        %2521 = vdwg.mxu0
        %2522 = vrot.lane.b32.xlu0 %v1565, 64
        %v2523 = vpop.permute.xlu0 %2522
        %2524 = vrot.lane.b32.xlu0 %v1566, 64
        %v2525 = vpop.permute.xlu0 %2524
        %2526 = vrot.lane.b32.xlu0 %v1567, 64
        %v2527 = vpop.permute.xlu0 %2526
        %2528 = vrot.lane.b32.xlu0 %v1568, 64
        %v2529 = vpop.permute.xlu0 %2528
        %2530 = vrot.lane.b32.xlu0 %v1569, 64
        %v2531 = vpop.permute.xlu0 %2530
        %2532 = vrot.lane.b32.xlu0 %v1570, 64
        %v2533 = vpop.permute.xlu0 %2532
        %2534 = vrot.lane.b32.xlu0 %v1571, 64
        %v2535 = vpop.permute.xlu0 %2534
        %2536 = vrot.lane.b32.xlu0 %v1572, 64
        %v2537 = vpop.permute.xlu0 %2536
        %2538 = vrot.lane.b32.xlu0 %v1573, 64
        %v2539 = vpop.permute.xlu0 %2538
        %2540 = vrot.lane.b32.xlu0 %v1574, 64
        %v2541 = vpop.permute.xlu0 %2540
        %2542 = vrot.lane.b32.xlu0 %v1575, 64
        %v2543 = vpop.permute.xlu0 %2542
        %2544 = vrot.lane.b32.xlu0 %v1576, 64
        %v2545 = vpop.permute.xlu0 %2544
        %2546 = vrot.lane.b32.xlu0 %v1577, 64
        %v2547 = vpop.permute.xlu0 %2546
        %2548 = vrot.lane.b32.xlu0 %v1578, 64
        %v2549 = vpop.permute.xlu0 %2548
        %2550 = vrot.lane.b32.xlu0 %v1579, 64
        %v2551 = vpop.permute.xlu0 %2550
        %2552 = vrot.lane.b32.xlu0 %v1580, 64
        %v2553 = vpop.permute.xlu0 %2552
        %v2555 = vsel %vm1589, %v2523, 0
        %v2558 = vsel %vm1589, %v2525, 0
        %v2561 = vsel %vm1589, %v2527, 0
        %v2564 = vsel %vm1589, %v2529, 0
        %v2567 = vsel %vm1589, %v2531, 0
        %v2570 = vsel %vm1589, %v2533, 0
        %v2573 = vsel %vm1589, %v2535, 0
        %v2576 = vsel %vm1589, %v2537, 0
        %v2579 = vsel %vm1589, %v2539, 0
        %v2582 = vsel %vm1589, %v2541, 0
        %v2585 = vsel %vm1589, %v2543, 0
        %v2588 = vsel %vm1589, %v2545, 0
        %v2591 = vsel %vm1589, %v2547, 0
        %v2594 = vsel %vm1589, %v2549, 0
        %v2597 = vsel %vm1589, %v2551, 0
        %v2600 = vsel %vm1589, %v2553, 0
        %2602 = vmatprep.subr.bf16.mxu0 0
        %2603 = vmatpush1.bf16.xpose.msra.mxu0 %v2600
        %2604 = vmatprep.subr.bf16.mxu0 0
        %2605 = vmatpush1.bf16.xpose.msra.mxu0 %v2597
        %2606 = vmatprep.subr.bf16.mxu0 0
        %2607 = vmatpush1.bf16.xpose.msra.mxu0 %v2594
        %2608 = vmatprep.subr.bf16.mxu0 0
        %2609 = vmatpush1.bf16.xpose.msra.mxu0 %v2591
        %2610 = vmatprep.subr.bf16.mxu0 0
        %2611 = vmatpush1.bf16.xpose.msra.mxu0 %v2588
        %2612 = vmatprep.subr.bf16.mxu0 0
        %2613 = vmatpush1.bf16.xpose.msra.mxu0 %v2585
        %2614 = vmatprep.subr.bf16.mxu0 0
        %2615 = vmatpush1.bf16.xpose.msra.mxu0 %v2582
        %2616 = vmatprep.subr.bf16.mxu0 0
        %2617 = vmatpush1.bf16.xpose.msra.mxu0 %v2579
        %2618 = vmatprep.subr.bf16.mxu0 0
        %2619 = vmatpush2.bf16.xpose.msra.mxu0 0
        %2620 = vmatprep.subr.bf16.mxu0 0
        %2621 = vmatpush2.bf16.xpose.msra.mxu0 0
        %2622 = vmatprep.subr.bf16.mxu0 0
        %2623 = vmatpush2.bf16.xpose.msra.mxu0 0
        %2624 = vmatprep.subr.bf16.mxu0 0
        %2625 = vmatpush2.bf16.xpose.msra.mxu0 0
        %2626 = vmatprep.subr.bf16.mxu0 0
        %2627 = vmatpush2.bf16.xpose.msra.mxu0 0
        %2628 = vmatprep.subr.bf16.mxu0 0
        %2629 = vmatpush2.bf16.xpose.msra.mxu0 0
        %2630 = vmatprep.subr.bf16.mxu0 0
        %2631 = vmatpush2.bf16.xpose.msra.mxu0 0
        %2632 = vmatprep.subr.bf16.mxu0 0
        %2633 = vmatpush2.bf16.xpose.msra.mxu0 0
        %2634 = vmatprep.mubr.bf16.mxu0 0
        %2635 = vmatmul.mubr.bf16.gmra.mxu0 %v2555
        %v2636 = vpop.f32.mrf.mxu0
        %v2637 = vadd.f32 0.0, %v2636
        %v2638 = vpop.f32.mrf.mxu0
        %v2639 = vpop.f32.mrf.mxu0
        %v2640 = vadd.f32 0.0, %v2639
        %v2641 = vpop.f32.mrf.mxu0
        %2642 = vmatprep.mubr.bf16.mxu0 0
        %2643 = vmatmul.mubr.bf16.gmra.mxu0 %v2558
        %v2644 = vpop.f32.mrf.mxu0
        %v2645 = vadd.f32 0.0, %v2644
        %v2646 = vpop.f32.mrf.mxu0
        %v2647 = vpop.f32.mrf.mxu0
        %v2648 = vadd.f32 0.0, %v2647
        %v2649 = vpop.f32.mrf.mxu0
        %2650 = vmatprep.mubr.bf16.mxu0 0
        %2651 = vmatmul.mubr.bf16.gmra.mxu0 %v2561
        %v2652 = vpop.f32.mrf.mxu0
        %v2653 = vadd.f32 0.0, %v2652
        %v2654 = vpop.f32.mrf.mxu0
        %v2655 = vpop.f32.mrf.mxu0
        %v2656 = vadd.f32 0.0, %v2655
        %v2657 = vpop.f32.mrf.mxu0
        %2658 = vmatprep.mubr.bf16.mxu0 0
        %2659 = vmatmul.mubr.bf16.gmra.mxu0 %v2564
        %v2660 = vpop.f32.mrf.mxu0
        %v2661 = vadd.f32 0.0, %v2660
        %v2662 = vpop.f32.mrf.mxu0
        %v2663 = vpop.f32.mrf.mxu0
        %v2664 = vadd.f32 0.0, %v2663
        %v2665 = vpop.f32.mrf.mxu0
        %2666 = vmatprep.mubr.bf16.mxu0 0
        %2667 = vmatmul.mubr.bf16.gmra.mxu0 %v2567
        %v2668 = vpop.f32.mrf.mxu0
        %v2669 = vadd.f32 0.0, %v2668
        %v2670 = vpop.f32.mrf.mxu0
        %v2671 = vpop.f32.mrf.mxu0
        %v2672 = vadd.f32 0.0, %v2671
        %v2673 = vpop.f32.mrf.mxu0
        %2674 = vmatprep.mubr.bf16.mxu0 0
        %2675 = vmatmul.mubr.bf16.gmra.mxu0 %v2570
        %v2676 = vpop.f32.mrf.mxu0
        %v2677 = vadd.f32 0.0, %v2676
        %v2678 = vpop.f32.mrf.mxu0
        %v2679 = vpop.f32.mrf.mxu0
        %v2680 = vadd.f32 0.0, %v2679
        %v2681 = vpop.f32.mrf.mxu0
        %2682 = vmatprep.mubr.bf16.mxu0 0
        %2683 = vmatmul.mubr.bf16.gmra.mxu0 %v2573
        %v2684 = vpop.f32.mrf.mxu0
        %v2685 = vadd.f32 0.0, %v2684
        %v2686 = vpop.f32.mrf.mxu0
        %v2687 = vpop.f32.mrf.mxu0
        %v2688 = vadd.f32 0.0, %v2687
        %v2689 = vpop.f32.mrf.mxu0
        %2690 = vmatprep.mubr.bf16.mxu0 0
        %2691 = vmatmul.mubr.bf16.gmra.mxu0 %v2576
        %v2692 = vpop.f32.mrf.mxu0
        %v2693 = vadd.f32 0.0, %v2692
        %v2694 = vpop.f32.mrf.mxu0
        %v2695 = vpop.f32.mrf.mxu0
        %v2696 = vadd.f32 0.0, %v2695
        %v2697 = vpop.f32.mrf.mxu0
        %2698 = vdwg.mxu0
        %v2699 = vmul.f32 %v2637, 0.17677669
        %v2700 = vmul.f32 %v2640, 0.17677669
        %v2701 = vmul.f32 %v2645, 0.17677669
        %v2702 = vmul.f32 %v2648, 0.17677669
        %v2703 = vmul.f32 %v2653, 0.17677669
        %v2704 = vmul.f32 %v2656, 0.17677669
        %v2705 = vmul.f32 %v2661, 0.17677669
        %v2706 = vmul.f32 %v2664, 0.17677669
        %v2707 = vmul.f32 %v2669, 0.17677669
        %v2708 = vmul.f32 %v2672, 0.17677669
        %v2709 = vmul.f32 %v2677, 0.17677669
        %v2710 = vmul.f32 %v2680, 0.17677669
        %v2711 = vmul.f32 %v2685, 0.17677669
        %v2712 = vmul.f32 %v2688, 0.17677669
        %v2713 = vmul.f32 %v2693, 0.17677669
        %v2714 = vmul.f32 %v2696, 0.17677669
        %v2715 = vadd.f32 %v2699, %v723
        %v2716 = vadd.f32 %v2700, %v724
        %v2717 = vadd.f32 %v2701, %v725
        %v2718 = vadd.f32 %v2702, %v726
        %v2719 = vadd.f32 %v2703, %v727
        %v2720 = vadd.f32 %v2704, %v728
        %v2721 = vadd.f32 %v2705, %v729
        %v2722 = vadd.f32 %v2706, %v730
        %v2723 = vadd.f32 %v2707, %v731
        %v2724 = vadd.f32 %v2708, %v732
        %v2725 = vadd.f32 %v2709, %v733
        %v2726 = vadd.f32 %v2710, %v734
        %v2727 = vadd.f32 %v2711, %v735
        %v2728 = vadd.f32 %v2712, %v736
        %v2729 = vadd.f32 %v2713, %v737
        %v2730 = vadd.f32 %v2714, %v738
        %2731 = vmax.xlane.f32.xlu0 %v2715
        %v2732 = vpop.xlane.xlu0 %2731
        %2733 = vmax.xlane.f32.xlu0 %v2716
        %v2734 = vpop.xlane.xlu0 %2733
        %2735 = vmax.xlane.f32.xlu0 %v2717
        %v2736 = vpop.xlane.xlu0 %2735
        %2737 = vmax.xlane.f32.xlu0 %v2718
        %v2738 = vpop.xlane.xlu0 %2737
        %2739 = vmax.xlane.f32.xlu0 %v2719
        %v2740 = vpop.xlane.xlu0 %2739
        %2741 = vmax.xlane.f32.xlu0 %v2720
        %v2742 = vpop.xlane.xlu0 %2741
        %2743 = vmax.xlane.f32.xlu0 %v2721
        %v2744 = vpop.xlane.xlu0 %2743
        %2745 = vmax.xlane.f32.xlu0 %v2722
        %v2746 = vpop.xlane.xlu0 %2745
        %2747 = vmax.xlane.f32.xlu0 %v2723
        %v2748 = vpop.xlane.xlu0 %2747
        %2749 = vmax.xlane.f32.xlu0 %v2724
        %v2750 = vpop.xlane.xlu0 %2749
        %2751 = vmax.xlane.f32.xlu0 %v2725
        %v2752 = vpop.xlane.xlu0 %2751
        %2753 = vmax.xlane.f32.xlu0 %v2726
        %v2754 = vpop.xlane.xlu0 %2753
        %2755 = vmax.xlane.f32.xlu0 %v2727
        %v2756 = vpop.xlane.xlu0 %2755
        %2757 = vmax.xlane.f32.xlu0 %v2728
        %v2758 = vpop.xlane.xlu0 %2757
        %2759 = vmax.xlane.f32.xlu0 %v2729
        %v2760 = vpop.xlane.xlu0 %2759
        %2761 = vmax.xlane.f32.xlu0 %v2730
        %v2762 = vpop.xlane.xlu0 %2761
        %v2763 = vsub.f32 %v2715, %v2732
        %v2764 = vsub.f32 %v2716, %v2734
        %v2765 = vsub.f32 %v2717, %v2736
        %v2766 = vsub.f32 %v2718, %v2738
        %v2767 = vsub.f32 %v2719, %v2740
        %v2768 = vsub.f32 %v2720, %v2742
        %v2769 = vsub.f32 %v2721, %v2744
        %v2770 = vsub.f32 %v2722, %v2746
        %v2771 = vsub.f32 %v2723, %v2748
        %v2772 = vsub.f32 %v2724, %v2750
        %v2773 = vsub.f32 %v2725, %v2752
        %v2774 = vsub.f32 %v2726, %v2754
        %v2775 = vsub.f32 %v2727, %v2756
        %v2776 = vsub.f32 %v2728, %v2758
        %v2777 = vsub.f32 %v2729, %v2760
        %v2778 = vsub.f32 %v2730, %v2762
        %v2779 = vmul.f32 %v2763, 1.442695
        %v2780 = vpow.pop %v2779
        %v2781 = vmul.f32 %v2764, 1.442695
        %v2782 = vpow.pop %v2781
        %v2783 = vmul.f32 %v2765, 1.442695
        %v2784 = vpow.pop %v2783
        %v2785 = vmul.f32 %v2766, 1.442695
        %v2786 = vpow.pop %v2785
        %v2787 = vmul.f32 %v2767, 1.442695
        %v2788 = vpow.pop %v2787
        %v2789 = vmul.f32 %v2768, 1.442695
        %v2790 = vpow.pop %v2789
        %v2791 = vmul.f32 %v2769, 1.442695
        %v2792 = vpow.pop %v2791
        %v2793 = vmul.f32 %v2770, 1.442695
        %v2794 = vpow.pop %v2793
        %v2795 = vmul.f32 %v2771, 1.442695
        %v2796 = vpow.pop %v2795
        %v2797 = vmul.f32 %v2772, 1.442695
        %v2798 = vpow.pop %v2797
        %v2799 = vmul.f32 %v2773, 1.442695
        %v2800 = vpow.pop %v2799
        %v2801 = vmul.f32 %v2774, 1.442695
        %v2802 = vpow.pop %v2801
        %v2803 = vmul.f32 %v2775, 1.442695
        %v2804 = vpow.pop %v2803
        %v2805 = vmul.f32 %v2776, 1.442695
        %v2806 = vpow.pop %v2805
        %v2807 = vmul.f32 %v2777, 1.442695
        %v2808 = vpow.pop %v2807
        %v2809 = vmul.f32 %v2778, 1.442695
        %v2810 = vpow.pop %v2809
        %2811 = vadd.xlane.f32.xlu0 %v2780
        %v2812 = vpop.xlane.xlu0 %2811
        %2813 = vadd.xlane.f32.xlu0 %v2782
        %v2814 = vpop.xlane.xlu0 %2813
        %2815 = vadd.xlane.f32.xlu0 %v2784
        %v2816 = vpop.xlane.xlu0 %2815
        %2817 = vadd.xlane.f32.xlu0 %v2786
        %v2818 = vpop.xlane.xlu0 %2817
        %2819 = vadd.xlane.f32.xlu0 %v2788
        %v2820 = vpop.xlane.xlu0 %2819
        %2821 = vadd.xlane.f32.xlu0 %v2790
        %v2822 = vpop.xlane.xlu0 %2821
        %2823 = vadd.xlane.f32.xlu0 %v2792
        %v2824 = vpop.xlane.xlu0 %2823
        %2825 = vadd.xlane.f32.xlu0 %v2794
        %v2826 = vpop.xlane.xlu0 %2825
        %2827 = vadd.xlane.f32.xlu0 %v2796
        %v2828 = vpop.xlane.xlu0 %2827
        %2829 = vadd.xlane.f32.xlu0 %v2798
        %v2830 = vpop.xlane.xlu0 %2829
        %2831 = vadd.xlane.f32.xlu0 %v2800
        %v2832 = vpop.xlane.xlu0 %2831
        %2833 = vadd.xlane.f32.xlu0 %v2802
        %v2834 = vpop.xlane.xlu0 %2833
        %2835 = vadd.xlane.f32.xlu0 %v2804
        %v2836 = vpop.xlane.xlu0 %2835
        %2837 = vadd.xlane.f32.xlu0 %v2806
        %v2838 = vpop.xlane.xlu0 %2837
        %2839 = vadd.xlane.f32.xlu0 %v2808
        %v2840 = vpop.xlane.xlu0 %2839
        %2841 = vadd.xlane.f32.xlu0 %v2810
        %v2842 = vpop.xlane.xlu0 %2841
        %v2843 = vrcp.pop %v2812
        %v2844 = vrcp.pop %v2814
        %v2845 = vrcp.pop %v2816
        %v2846 = vrcp.pop %v2818
        %v2847 = vrcp.pop %v2820
        %v2848 = vrcp.pop %v2822
        %v2849 = vrcp.pop %v2824
        %v2850 = vrcp.pop %v2826
        %v2851 = vrcp.pop %v2828
        %v2852 = vrcp.pop %v2830
        %v2853 = vrcp.pop %v2832
        %v2854 = vrcp.pop %v2834
        %v2855 = vrcp.pop %v2836
        %v2856 = vrcp.pop %v2838
        %v2857 = vrcp.pop %v2840
        %v2858 = vrcp.pop %v2842
        %v2859 = vmul.f32 %v2780, %v2843
        %v2860 = vmul.f32 %v2782, %v2844
        %v2861 = vmul.f32 %v2784, %v2845
        %v2862 = vmul.f32 %v2786, %v2846
        %v2863 = vmul.f32 %v2788, %v2847
        %v2864 = vmul.f32 %v2790, %v2848
        %v2865 = vmul.f32 %v2792, %v2849
        %v2866 = vmul.f32 %v2794, %v2850
        %v2867 = vmul.f32 %v2796, %v2851
        %v2868 = vmul.f32 %v2798, %v2852
        %v2869 = vmul.f32 %v2800, %v2853
        %v2870 = vmul.f32 %v2802, %v2854
        %v2871 = vmul.f32 %v2804, %v2855
        %v2872 = vmul.f32 %v2806, %v2856
        %v2873 = vmul.f32 %v2808, %v2857
        %v2874 = vmul.f32 %v2810, %v2858
        %v2875 = vpack.c.bf16 %v2860, %v2859
        %v2876 = vpack.c.bf16 %v2862, %v2861
        %v2877 = vpack.c.bf16 %v2864, %v2863
        %v2878 = vpack.c.bf16 %v2866, %v2865
        %v2879 = vpack.c.bf16 %v2868, %v2867
        %v2880 = vpack.c.bf16 %v2870, %v2869
        %v2881 = vpack.c.bf16 %v2872, %v2871
        %v2882 = vpack.c.bf16 %v2874, %v2873
        %2883 = vrot.lane.b32.xlu0 %v1581, 64
        %v2884 = vpop.permute.xlu0 %2883
        %2885 = vrot.lane.b32.xlu0 %v1582, 64
        %v2886 = vpop.permute.xlu0 %2885
        %2887 = vrot.lane.b32.xlu0 %v1583, 64
        %v2888 = vpop.permute.xlu0 %2887
        %2889 = vrot.lane.b32.xlu0 %v1584, 64
        %v2890 = vpop.permute.xlu0 %2889
        %2891 = vrot.lane.b32.xlu0 %v1585, 64
        %v2892 = vpop.permute.xlu0 %2891
        %2893 = vrot.lane.b32.xlu0 %v1586, 64
        %v2894 = vpop.permute.xlu0 %2893
        %2895 = vrot.lane.b32.xlu0 %v1587, 64
        %v2896 = vpop.permute.xlu0 %2895
        %2897 = vrot.lane.b32.xlu0 %v1588, 64
        %v2898 = vpop.permute.xlu0 %2897
        %2907 = vmatprep.subr.bf16.mxu0 0
        %2908 = vmatpush1.bf16.msra.mxu0 %v2898
        %2909 = vmatprep.subr.bf16.mxu0 0
        %2910 = vmatpush1.bf16.msra.mxu0 %v2896
        %2911 = vmatprep.subr.bf16.mxu0 0
        %2912 = vmatpush1.bf16.msra.mxu0 %v2894
        %2913 = vmatprep.subr.bf16.mxu0 0
        %2914 = vmatpush1.bf16.msra.mxu0 %v2892
        %2915 = vmatprep.subr.bf16.mxu0 0
        %2916 = vmatpush1.bf16.msra.mxu0 %v2890
        %2917 = vmatprep.subr.bf16.mxu0 0
        %2918 = vmatpush1.bf16.msra.mxu0 %v2888
        %2919 = vmatprep.subr.bf16.mxu0 0
        %2920 = vmatpush1.bf16.msra.mxu0 %v2886
        %2921 = vmatprep.subr.bf16.mxu0 0
        %2922 = vmatpush1.bf16.msra.mxu0 %v2884
        %2923 = vmatprep.subr.bf16.mxu0 0
        %2924 = vmatpush2.bf16.msra.mxu0 0
        %2925 = vmatprep.subr.bf16.mxu0 0
        %2926 = vmatpush2.bf16.msra.mxu0 0
        %2927 = vmatprep.subr.bf16.mxu0 0
        %2928 = vmatpush2.bf16.msra.mxu0 0
        %2929 = vmatprep.subr.bf16.mxu0 0
        %2930 = vmatpush2.bf16.msra.mxu0 0
        %2931 = vmatprep.subr.bf16.mxu0 0
        %2932 = vmatpush2.bf16.msra.mxu0 0
        %2933 = vmatprep.subr.bf16.mxu0 0
        %2934 = vmatpush2.bf16.msra.mxu0 0
        %2935 = vmatprep.subr.bf16.mxu0 0
        %2936 = vmatpush2.bf16.msra.mxu0 0
        %2937 = vmatprep.subr.bf16.mxu0 0
        %2938 = vmatpush2.bf16.msra.mxu0 0
        %2939 = vmatprep.mubr.bf16.mxu0 0
        %2940 = vmatmul.mubr.bf16.gmra.mxu0 %v2875
        %v2941 = vpop.f32.mrf.mxu0
        %v2942 = vadd.f32 0.0, %v2941
        %v2943 = vpop.f32.mrf.mxu0
        %v2944 = vpop.f32.mrf.mxu0
        %v2945 = vadd.f32 0.0, %v2944
        %v2946 = vpop.f32.mrf.mxu0
        %2947 = vmatprep.mubr.bf16.mxu0 0
        %2948 = vmatmul.mubr.bf16.gmra.mxu0 %v2876
        %v2949 = vpop.f32.mrf.mxu0
        %v2950 = vadd.f32 0.0, %v2949
        %v2951 = vpop.f32.mrf.mxu0
        %v2952 = vpop.f32.mrf.mxu0
        %v2953 = vadd.f32 0.0, %v2952
        %v2954 = vpop.f32.mrf.mxu0
        %2955 = vmatprep.mubr.bf16.mxu0 0
        %2956 = vmatmul.mubr.bf16.gmra.mxu0 %v2877
        %v2957 = vpop.f32.mrf.mxu0
        %v2958 = vadd.f32 0.0, %v2957
        %v2959 = vpop.f32.mrf.mxu0
        %v2960 = vpop.f32.mrf.mxu0
        %v2961 = vadd.f32 0.0, %v2960
        %v2962 = vpop.f32.mrf.mxu0
        %2963 = vmatprep.mubr.bf16.mxu0 0
        %2964 = vmatmul.mubr.bf16.gmra.mxu0 %v2878
        %v2965 = vpop.f32.mrf.mxu0
        %v2966 = vadd.f32 0.0, %v2965
        %v2967 = vpop.f32.mrf.mxu0
        %v2968 = vpop.f32.mrf.mxu0
        %v2969 = vadd.f32 0.0, %v2968
        %v2970 = vpop.f32.mrf.mxu0
        %2971 = vmatprep.mubr.bf16.mxu0 0
        %2972 = vmatmul.mubr.bf16.gmra.mxu0 %v2879
        %v2973 = vpop.f32.mrf.mxu0
        %v2974 = vadd.f32 0.0, %v2973
        %v2975 = vpop.f32.mrf.mxu0
        %v2976 = vpop.f32.mrf.mxu0
        %v2977 = vadd.f32 0.0, %v2976
        %v2978 = vpop.f32.mrf.mxu0
        %2979 = vmatprep.mubr.bf16.mxu0 0
        %2980 = vmatmul.mubr.bf16.gmra.mxu0 %v2880
        %v2981 = vpop.f32.mrf.mxu0
        %v2982 = vadd.f32 0.0, %v2981
        %v2983 = vpop.f32.mrf.mxu0
        %v2984 = vpop.f32.mrf.mxu0
        %v2985 = vadd.f32 0.0, %v2984
        %v2986 = vpop.f32.mrf.mxu0
        %2987 = vmatprep.mubr.bf16.mxu0 0
        %2988 = vmatmul.mubr.bf16.gmra.mxu0 %v2881
        %v2989 = vpop.f32.mrf.mxu0
        %v2990 = vadd.f32 0.0, %v2989
        %v2991 = vpop.f32.mrf.mxu0
        %v2992 = vpop.f32.mrf.mxu0
        %v2993 = vadd.f32 0.0, %v2992
        %v2994 = vpop.f32.mrf.mxu0
        %2995 = vmatprep.mubr.bf16.mxu0 0
        %2996 = vmatmul.mubr.bf16.gmra.mxu0 %v2882
        %v2997 = vpop.f32.mrf.mxu0
        %v2998 = vadd.f32 0.0, %v2997
        %v2999 = vpop.f32.mrf.mxu0
        %v3000 = vpop.f32.mrf.mxu0
        %v3001 = vadd.f32 0.0, %v3000
        %v3002 = vpop.f32.mrf.mxu0
        %3003 = vdwg.mxu0
        %3004 = vrot.lane.b32.xlu0 %v1565, 32
        %v3005 = vpop.permute.xlu0 %3004
        %3006 = vrot.lane.b32.xlu0 %v1566, 32
        %v3007 = vpop.permute.xlu0 %3006
        %3008 = vrot.lane.b32.xlu0 %v1567, 32
        %v3009 = vpop.permute.xlu0 %3008
        %3010 = vrot.lane.b32.xlu0 %v1568, 32
        %v3011 = vpop.permute.xlu0 %3010
        %3012 = vrot.lane.b32.xlu0 %v1569, 32
        %v3013 = vpop.permute.xlu0 %3012
        %3014 = vrot.lane.b32.xlu0 %v1570, 32
        %v3015 = vpop.permute.xlu0 %3014
        %3016 = vrot.lane.b32.xlu0 %v1571, 32
        %v3017 = vpop.permute.xlu0 %3016
        %3018 = vrot.lane.b32.xlu0 %v1572, 32
        %v3019 = vpop.permute.xlu0 %3018
        %3020 = vrot.lane.b32.xlu0 %v1573, 32
        %v3021 = vpop.permute.xlu0 %3020
        %3022 = vrot.lane.b32.xlu0 %v1574, 32
        %v3023 = vpop.permute.xlu0 %3022
        %3024 = vrot.lane.b32.xlu0 %v1575, 32
        %v3025 = vpop.permute.xlu0 %3024
        %3026 = vrot.lane.b32.xlu0 %v1576, 32
        %v3027 = vpop.permute.xlu0 %3026
        %3028 = vrot.lane.b32.xlu0 %v1577, 32
        %v3029 = vpop.permute.xlu0 %3028
        %3030 = vrot.lane.b32.xlu0 %v1578, 32
        %v3031 = vpop.permute.xlu0 %3030
        %3032 = vrot.lane.b32.xlu0 %v1579, 32
        %v3033 = vpop.permute.xlu0 %3032
        %3034 = vrot.lane.b32.xlu0 %v1580, 32
        %v3035 = vpop.permute.xlu0 %3034
        %v3037 = vsel %vm1589, %v3005, 0
        %v3040 = vsel %vm1589, %v3007, 0
        %v3043 = vsel %vm1589, %v3009, 0
        %v3046 = vsel %vm1589, %v3011, 0
        %v3049 = vsel %vm1589, %v3013, 0
        %v3052 = vsel %vm1589, %v3015, 0
        %v3055 = vsel %vm1589, %v3017, 0
        %v3058 = vsel %vm1589, %v3019, 0
        %v3061 = vsel %vm1589, %v3021, 0
        %v3064 = vsel %vm1589, %v3023, 0
        %v3067 = vsel %vm1589, %v3025, 0
        %v3070 = vsel %vm1589, %v3027, 0
        %v3073 = vsel %vm1589, %v3029, 0
        %v3076 = vsel %vm1589, %v3031, 0
        %v3079 = vsel %vm1589, %v3033, 0
        %v3082 = vsel %vm1589, %v3035, 0
        %3084 = vmatprep.subr.bf16.mxu0 0
        %3085 = vmatpush1.bf16.xpose.msra.mxu0 %v3082
        %3086 = vmatprep.subr.bf16.mxu0 0
        %3087 = vmatpush1.bf16.xpose.msra.mxu0 %v3079
        %3088 = vmatprep.subr.bf16.mxu0 0
        %3089 = vmatpush1.bf16.xpose.msra.mxu0 %v3076
        %3090 = vmatprep.subr.bf16.mxu0 0
        %3091 = vmatpush1.bf16.xpose.msra.mxu0 %v3073
        %3092 = vmatprep.subr.bf16.mxu0 0
        %3093 = vmatpush1.bf16.xpose.msra.mxu0 %v3070
        %3094 = vmatprep.subr.bf16.mxu0 0
        %3095 = vmatpush1.bf16.xpose.msra.mxu0 %v3067
        %3096 = vmatprep.subr.bf16.mxu0 0
        %3097 = vmatpush1.bf16.xpose.msra.mxu0 %v3064
        %3098 = vmatprep.subr.bf16.mxu0 0
        %3099 = vmatpush1.bf16.xpose.msra.mxu0 %v3061
        %3100 = vmatprep.subr.bf16.mxu0 0
        %3101 = vmatpush2.bf16.xpose.msra.mxu0 0
        %3102 = vmatprep.subr.bf16.mxu0 0
        %3103 = vmatpush2.bf16.xpose.msra.mxu0 0
        %3104 = vmatprep.subr.bf16.mxu0 0
        %3105 = vmatpush2.bf16.xpose.msra.mxu0 0
        %3106 = vmatprep.subr.bf16.mxu0 0
        %3107 = vmatpush2.bf16.xpose.msra.mxu0 0
        %3108 = vmatprep.subr.bf16.mxu0 0
        %3109 = vmatpush2.bf16.xpose.msra.mxu0 0
        %3110 = vmatprep.subr.bf16.mxu0 0
        %3111 = vmatpush2.bf16.xpose.msra.mxu0 0
        %3112 = vmatprep.subr.bf16.mxu0 0
        %3113 = vmatpush2.bf16.xpose.msra.mxu0 0
        %3114 = vmatprep.subr.bf16.mxu0 0
        %3115 = vmatpush2.bf16.xpose.msra.mxu0 0
        %3116 = vmatprep.mubr.bf16.mxu0 0
        %3117 = vmatmul.mubr.bf16.gmra.mxu0 %v3037
        %v3118 = vpop.f32.mrf.mxu0
        %v3119 = vadd.f32 0.0, %v3118
        %v3120 = vpop.f32.mrf.mxu0
        %v3121 = vpop.f32.mrf.mxu0
        %v3122 = vadd.f32 0.0, %v3121
        %v3123 = vpop.f32.mrf.mxu0
        %3124 = vmatprep.mubr.bf16.mxu0 0
        %3125 = vmatmul.mubr.bf16.gmra.mxu0 %v3040
        %v3126 = vpop.f32.mrf.mxu0
        %v3127 = vadd.f32 0.0, %v3126
        %v3128 = vpop.f32.mrf.mxu0
        %v3129 = vpop.f32.mrf.mxu0
        %v3130 = vadd.f32 0.0, %v3129
        %v3131 = vpop.f32.mrf.mxu0
        %3132 = vmatprep.mubr.bf16.mxu0 0
        %3133 = vmatmul.mubr.bf16.gmra.mxu0 %v3043
        %v3134 = vpop.f32.mrf.mxu0
        %v3135 = vadd.f32 0.0, %v3134
        %v3136 = vpop.f32.mrf.mxu0
        %v3137 = vpop.f32.mrf.mxu0
        %v3138 = vadd.f32 0.0, %v3137
        %v3139 = vpop.f32.mrf.mxu0
        %3140 = vmatprep.mubr.bf16.mxu0 0
        %3141 = vmatmul.mubr.bf16.gmra.mxu0 %v3046
        %v3142 = vpop.f32.mrf.mxu0
        %v3143 = vadd.f32 0.0, %v3142
        %v3144 = vpop.f32.mrf.mxu0
        %v3145 = vpop.f32.mrf.mxu0
        %v3146 = vadd.f32 0.0, %v3145
        %v3147 = vpop.f32.mrf.mxu0
        %3148 = vmatprep.mubr.bf16.mxu0 0
        %3149 = vmatmul.mubr.bf16.gmra.mxu0 %v3049
        %v3150 = vpop.f32.mrf.mxu0
        %v3151 = vadd.f32 0.0, %v3150
        %v3152 = vpop.f32.mrf.mxu0
        %v3153 = vpop.f32.mrf.mxu0
        %v3154 = vadd.f32 0.0, %v3153
        %v3155 = vpop.f32.mrf.mxu0
        %3156 = vmatprep.mubr.bf16.mxu0 0
        %3157 = vmatmul.mubr.bf16.gmra.mxu0 %v3052
        %v3158 = vpop.f32.mrf.mxu0
        %v3159 = vadd.f32 0.0, %v3158
        %v3160 = vpop.f32.mrf.mxu0
        %v3161 = vpop.f32.mrf.mxu0
        %v3162 = vadd.f32 0.0, %v3161
        %v3163 = vpop.f32.mrf.mxu0
        %3164 = vmatprep.mubr.bf16.mxu0 0
        %3165 = vmatmul.mubr.bf16.gmra.mxu0 %v3055
        %v3166 = vpop.f32.mrf.mxu0
        %v3167 = vadd.f32 0.0, %v3166
        %v3168 = vpop.f32.mrf.mxu0
        %v3169 = vpop.f32.mrf.mxu0
        %v3170 = vadd.f32 0.0, %v3169
        %v3171 = vpop.f32.mrf.mxu0
        %3172 = vmatprep.mubr.bf16.mxu0 0
        %3173 = vmatmul.mubr.bf16.gmra.mxu0 %v3058
        %v3174 = vpop.f32.mrf.mxu0
        %v3175 = vadd.f32 0.0, %v3174
        %v3176 = vpop.f32.mrf.mxu0
        %v3177 = vpop.f32.mrf.mxu0
        %v3178 = vadd.f32 0.0, %v3177
        %v3179 = vpop.f32.mrf.mxu0
        %3180 = vdwg.mxu0
        %v3181 = vmul.f32 %v3119, 0.17677669
        %v3182 = vmul.f32 %v3122, 0.17677669
        %v3183 = vmul.f32 %v3127, 0.17677669
        %v3184 = vmul.f32 %v3130, 0.17677669
        %v3185 = vmul.f32 %v3135, 0.17677669
        %v3186 = vmul.f32 %v3138, 0.17677669
        %v3187 = vmul.f32 %v3143, 0.17677669
        %v3188 = vmul.f32 %v3146, 0.17677669
        %v3189 = vmul.f32 %v3151, 0.17677669
        %v3190 = vmul.f32 %v3154, 0.17677669
        %v3191 = vmul.f32 %v3159, 0.17677669
        %v3192 = vmul.f32 %v3162, 0.17677669
        %v3193 = vmul.f32 %v3167, 0.17677669
        %v3194 = vmul.f32 %v3170, 0.17677669
        %v3195 = vmul.f32 %v3175, 0.17677669
        %v3196 = vmul.f32 %v3178, 0.17677669
        %v3197 = vadd.f32 %v3181, %v723
        %v3198 = vadd.f32 %v3182, %v724
        %v3199 = vadd.f32 %v3183, %v725
        %v3200 = vadd.f32 %v3184, %v726
        %v3201 = vadd.f32 %v3185, %v727
        %v3202 = vadd.f32 %v3186, %v728
        %v3203 = vadd.f32 %v3187, %v729
        %v3204 = vadd.f32 %v3188, %v730
        %v3205 = vadd.f32 %v3189, %v731
        %v3206 = vadd.f32 %v3190, %v732
        %v3207 = vadd.f32 %v3191, %v733
        %v3208 = vadd.f32 %v3192, %v734
        %v3209 = vadd.f32 %v3193, %v735
        %v3210 = vadd.f32 %v3194, %v736
        %v3211 = vadd.f32 %v3195, %v737
        %v3212 = vadd.f32 %v3196, %v738
        %3213 = vmax.xlane.f32.xlu0 %v3197
        %v3214 = vpop.xlane.xlu0 %3213
        %3215 = vmax.xlane.f32.xlu0 %v3198
        %v3216 = vpop.xlane.xlu0 %3215
        %3217 = vmax.xlane.f32.xlu0 %v3199
        %v3218 = vpop.xlane.xlu0 %3217
        %3219 = vmax.xlane.f32.xlu0 %v3200
        %v3220 = vpop.xlane.xlu0 %3219
        %3221 = vmax.xlane.f32.xlu0 %v3201
        %v3222 = vpop.xlane.xlu0 %3221
        %3223 = vmax.xlane.f32.xlu0 %v3202
        %v3224 = vpop.xlane.xlu0 %3223
        %3225 = vmax.xlane.f32.xlu0 %v3203
        %v3226 = vpop.xlane.xlu0 %3225
        %3227 = vmax.xlane.f32.xlu0 %v3204
        %v3228 = vpop.xlane.xlu0 %3227
        %3229 = vmax.xlane.f32.xlu0 %v3205
        %v3230 = vpop.xlane.xlu0 %3229
        %3231 = vmax.xlane.f32.xlu0 %v3206
        %v3232 = vpop.xlane.xlu0 %3231
        %3233 = vmax.xlane.f32.xlu0 %v3207
        %v3234 = vpop.xlane.xlu0 %3233
        %3235 = vmax.xlane.f32.xlu0 %v3208
        %v3236 = vpop.xlane.xlu0 %3235
        %3237 = vmax.xlane.f32.xlu0 %v3209
        %v3238 = vpop.xlane.xlu0 %3237
        %3239 = vmax.xlane.f32.xlu0 %v3210
        %v3240 = vpop.xlane.xlu0 %3239
        %3241 = vmax.xlane.f32.xlu0 %v3211
        %v3242 = vpop.xlane.xlu0 %3241
        %3243 = vmax.xlane.f32.xlu0 %v3212
        %v3244 = vpop.xlane.xlu0 %3243
        %v3245 = vsub.f32 %v3197, %v3214
        %v3246 = vsub.f32 %v3198, %v3216
        %v3247 = vsub.f32 %v3199, %v3218
        %v3248 = vsub.f32 %v3200, %v3220
        %v3249 = vsub.f32 %v3201, %v3222
        %v3250 = vsub.f32 %v3202, %v3224
        %v3251 = vsub.f32 %v3203, %v3226
        %v3252 = vsub.f32 %v3204, %v3228
        %v3253 = vsub.f32 %v3205, %v3230
        %v3254 = vsub.f32 %v3206, %v3232
        %v3255 = vsub.f32 %v3207, %v3234
        %v3256 = vsub.f32 %v3208, %v3236
        %v3257 = vsub.f32 %v3209, %v3238
        %v3258 = vsub.f32 %v3210, %v3240
        %v3259 = vsub.f32 %v3211, %v3242
        %v3260 = vsub.f32 %v3212, %v3244
        %v3261 = vmul.f32 %v3245, 1.442695
        %v3262 = vpow.pop %v3261
        %v3263 = vmul.f32 %v3246, 1.442695
        %v3264 = vpow.pop %v3263
        %v3265 = vmul.f32 %v3247, 1.442695
        %v3266 = vpow.pop %v3265
        %v3267 = vmul.f32 %v3248, 1.442695
        %v3268 = vpow.pop %v3267
        %v3269 = vmul.f32 %v3249, 1.442695
        %v3270 = vpow.pop %v3269
        %v3271 = vmul.f32 %v3250, 1.442695
        %v3272 = vpow.pop %v3271
        %v3273 = vmul.f32 %v3251, 1.442695
        %v3274 = vpow.pop %v3273
        %v3275 = vmul.f32 %v3252, 1.442695
        %v3276 = vpow.pop %v3275
        %v3277 = vmul.f32 %v3253, 1.442695
        %v3278 = vpow.pop %v3277
        %v3279 = vmul.f32 %v3254, 1.442695
        %v3280 = vpow.pop %v3279
        %v3281 = vmul.f32 %v3255, 1.442695
        %v3282 = vpow.pop %v3281
        %v3283 = vmul.f32 %v3256, 1.442695
        %v3284 = vpow.pop %v3283
        %v3285 = vmul.f32 %v3257, 1.442695
        %v3286 = vpow.pop %v3285
        %v3287 = vmul.f32 %v3258, 1.442695
        %v3288 = vpow.pop %v3287
        %v3289 = vmul.f32 %v3259, 1.442695
        %v3290 = vpow.pop %v3289
        %v3291 = vmul.f32 %v3260, 1.442695
        %v3292 = vpow.pop %v3291
        %3293 = vadd.xlane.f32.xlu0 %v3262
        %v3294 = vpop.xlane.xlu0 %3293
        %3295 = vadd.xlane.f32.xlu0 %v3264
        %v3296 = vpop.xlane.xlu0 %3295
        %3297 = vadd.xlane.f32.xlu0 %v3266
        %v3298 = vpop.xlane.xlu0 %3297
        %3299 = vadd.xlane.f32.xlu0 %v3268
        %v3300 = vpop.xlane.xlu0 %3299
        %3301 = vadd.xlane.f32.xlu0 %v3270
        %v3302 = vpop.xlane.xlu0 %3301
        %3303 = vadd.xlane.f32.xlu0 %v3272
        %v3304 = vpop.xlane.xlu0 %3303
        %3305 = vadd.xlane.f32.xlu0 %v3274
        %v3306 = vpop.xlane.xlu0 %3305
        %3307 = vadd.xlane.f32.xlu0 %v3276
        %v3308 = vpop.xlane.xlu0 %3307
        %3309 = vadd.xlane.f32.xlu0 %v3278
        %v3310 = vpop.xlane.xlu0 %3309
        %3311 = vadd.xlane.f32.xlu0 %v3280
        %v3312 = vpop.xlane.xlu0 %3311
        %3313 = vadd.xlane.f32.xlu0 %v3282
        %v3314 = vpop.xlane.xlu0 %3313
        %3315 = vadd.xlane.f32.xlu0 %v3284
        %v3316 = vpop.xlane.xlu0 %3315
        %3317 = vadd.xlane.f32.xlu0 %v3286
        %v3318 = vpop.xlane.xlu0 %3317
        %3319 = vadd.xlane.f32.xlu0 %v3288
        %v3320 = vpop.xlane.xlu0 %3319
        %3321 = vadd.xlane.f32.xlu0 %v3290
        %v3322 = vpop.xlane.xlu0 %3321
        %3323 = vadd.xlane.f32.xlu0 %v3292
        %v3324 = vpop.xlane.xlu0 %3323
        %v3325 = vrcp.pop %v3294
        %v3326 = vrcp.pop %v3296
        %v3327 = vrcp.pop %v3298
        %v3328 = vrcp.pop %v3300
        %v3329 = vrcp.pop %v3302
        %v3330 = vrcp.pop %v3304
        %v3331 = vrcp.pop %v3306
        %v3332 = vrcp.pop %v3308
        %v3333 = vrcp.pop %v3310
        %v3334 = vrcp.pop %v3312
        %v3335 = vrcp.pop %v3314
        %v3336 = vrcp.pop %v3316
        %v3337 = vrcp.pop %v3318
        %v3338 = vrcp.pop %v3320
        %v3339 = vrcp.pop %v3322
        %v3340 = vrcp.pop %v3324
        %v3341 = vmul.f32 %v3262, %v3325
        %v3342 = vmul.f32 %v3264, %v3326
        %v3343 = vmul.f32 %v3266, %v3327
        %v3344 = vmul.f32 %v3268, %v3328
        %v3345 = vmul.f32 %v3270, %v3329
        %v3346 = vmul.f32 %v3272, %v3330
        %v3347 = vmul.f32 %v3274, %v3331
        %v3348 = vmul.f32 %v3276, %v3332
        %v3349 = vmul.f32 %v3278, %v3333
        %v3350 = vmul.f32 %v3280, %v3334
        %v3351 = vmul.f32 %v3282, %v3335
        %v3352 = vmul.f32 %v3284, %v3336
        %v3353 = vmul.f32 %v3286, %v3337
        %v3354 = vmul.f32 %v3288, %v3338
        %v3355 = vmul.f32 %v3290, %v3339
        %v3356 = vmul.f32 %v3292, %v3340
        %v3357 = vpack.c.bf16 %v3342, %v3341
        %v3358 = vpack.c.bf16 %v3344, %v3343
        %v3359 = vpack.c.bf16 %v3346, %v3345
        %v3360 = vpack.c.bf16 %v3348, %v3347
        %v3361 = vpack.c.bf16 %v3350, %v3349
        %v3362 = vpack.c.bf16 %v3352, %v3351
        %v3363 = vpack.c.bf16 %v3354, %v3353
        %v3364 = vpack.c.bf16 %v3356, %v3355
        %3365 = vrot.lane.b32.xlu0 %v1581, 32
        %v3366 = vpop.permute.xlu0 %3365
        %3367 = vrot.lane.b32.xlu0 %v1582, 32
        %v3368 = vpop.permute.xlu0 %3367
        %3369 = vrot.lane.b32.xlu0 %v1583, 32
        %v3370 = vpop.permute.xlu0 %3369
        %3371 = vrot.lane.b32.xlu0 %v1584, 32
        %v3372 = vpop.permute.xlu0 %3371
        %3373 = vrot.lane.b32.xlu0 %v1585, 32
        %v3374 = vpop.permute.xlu0 %3373
        %3375 = vrot.lane.b32.xlu0 %v1586, 32
        %v3376 = vpop.permute.xlu0 %3375
        %3377 = vrot.lane.b32.xlu0 %v1587, 32
        %v3378 = vpop.permute.xlu0 %3377
        %3379 = vrot.lane.b32.xlu0 %v1588, 32
        %v3380 = vpop.permute.xlu0 %3379
        %3389 = vmatprep.subr.bf16.mxu0 0
        %3390 = vmatpush1.bf16.msra.mxu0 %v3380
        %3391 = vmatprep.subr.bf16.mxu0 0
        %3392 = vmatpush1.bf16.msra.mxu0 %v3378
        %3393 = vmatprep.subr.bf16.mxu0 0
        %3394 = vmatpush1.bf16.msra.mxu0 %v3376
        %3395 = vmatprep.subr.bf16.mxu0 0
        %3396 = vmatpush1.bf16.msra.mxu0 %v3374
        %3397 = vmatprep.subr.bf16.mxu0 0
        %3398 = vmatpush1.bf16.msra.mxu0 %v3372
        %3399 = vmatprep.subr.bf16.mxu0 0
        %3400 = vmatpush1.bf16.msra.mxu0 %v3370
        %3401 = vmatprep.subr.bf16.mxu0 0
        %3402 = vmatpush1.bf16.msra.mxu0 %v3368
        %3403 = vmatprep.subr.bf16.mxu0 0
        %3404 = vmatpush1.bf16.msra.mxu0 %v3366
        %3405 = vmatprep.subr.bf16.mxu0 0
        %3406 = vmatpush2.bf16.msra.mxu0 0
        %3407 = vmatprep.subr.bf16.mxu0 0
        %3408 = vmatpush2.bf16.msra.mxu0 0
        %3409 = vmatprep.subr.bf16.mxu0 0
        %3410 = vmatpush2.bf16.msra.mxu0 0
        %3411 = vmatprep.subr.bf16.mxu0 0
        %3412 = vmatpush2.bf16.msra.mxu0 0
        %3413 = vmatprep.subr.bf16.mxu0 0
        %3414 = vmatpush2.bf16.msra.mxu0 0
        %3415 = vmatprep.subr.bf16.mxu0 0
        %3416 = vmatpush2.bf16.msra.mxu0 0
        %3417 = vmatprep.subr.bf16.mxu0 0
        %3418 = vmatpush2.bf16.msra.mxu0 0
        %3419 = vmatprep.subr.bf16.mxu0 0
        %3420 = vmatpush2.bf16.msra.mxu0 0
        %3421 = vmatprep.mubr.bf16.mxu0 0
        %3422 = vmatmul.mubr.bf16.gmra.mxu0 %v3357
        %v3423 = vpop.f32.mrf.mxu0
        %v3424 = vadd.f32 0.0, %v3423
        %v3425 = vpop.f32.mrf.mxu0
        %v3426 = vpop.f32.mrf.mxu0
        %v3427 = vadd.f32 0.0, %v3426
        %v3428 = vpop.f32.mrf.mxu0
        %3429 = vmatprep.mubr.bf16.mxu0 0
        %3430 = vmatmul.mubr.bf16.gmra.mxu0 %v3358
        %v3431 = vpop.f32.mrf.mxu0
        %v3432 = vadd.f32 0.0, %v3431
        %v3433 = vpop.f32.mrf.mxu0
        %v3434 = vpop.f32.mrf.mxu0
        %v3435 = vadd.f32 0.0, %v3434
        %v3436 = vpop.f32.mrf.mxu0
        %3437 = vmatprep.mubr.bf16.mxu0 0
        %3438 = vmatmul.mubr.bf16.gmra.mxu0 %v3359
        %v3439 = vpop.f32.mrf.mxu0
        %v3440 = vadd.f32 0.0, %v3439
        %v3441 = vpop.f32.mrf.mxu0
        %v3442 = vpop.f32.mrf.mxu0
        %v3443 = vadd.f32 0.0, %v3442
        %v3444 = vpop.f32.mrf.mxu0
        %3445 = vmatprep.mubr.bf16.mxu0 0
        %3446 = vmatmul.mubr.bf16.gmra.mxu0 %v3360
        %v3447 = vpop.f32.mrf.mxu0
        %v3448 = vadd.f32 0.0, %v3447
        %v3449 = vpop.f32.mrf.mxu0
        %v3450 = vpop.f32.mrf.mxu0
        %v3451 = vadd.f32 0.0, %v3450
        %v3452 = vpop.f32.mrf.mxu0
        %3453 = vmatprep.mubr.bf16.mxu0 0
        %3454 = vmatmul.mubr.bf16.gmra.mxu0 %v3361
        %v3455 = vpop.f32.mrf.mxu0
        %v3456 = vadd.f32 0.0, %v3455
        %v3457 = vpop.f32.mrf.mxu0
        %v3458 = vpop.f32.mrf.mxu0
        %v3459 = vadd.f32 0.0, %v3458
        %v3460 = vpop.f32.mrf.mxu0
        %3461 = vmatprep.mubr.bf16.mxu0 0
        %3462 = vmatmul.mubr.bf16.gmra.mxu0 %v3362
        %v3463 = vpop.f32.mrf.mxu0
        %v3464 = vadd.f32 0.0, %v3463
        %v3465 = vpop.f32.mrf.mxu0
        %v3466 = vpop.f32.mrf.mxu0
        %v3467 = vadd.f32 0.0, %v3466
        %v3468 = vpop.f32.mrf.mxu0
        %3469 = vmatprep.mubr.bf16.mxu0 0
        %3470 = vmatmul.mubr.bf16.gmra.mxu0 %v3363
        %v3471 = vpop.f32.mrf.mxu0
        %v3472 = vadd.f32 0.0, %v3471
        %v3473 = vpop.f32.mrf.mxu0
        %v3474 = vpop.f32.mrf.mxu0
        %v3475 = vadd.f32 0.0, %v3474
        %v3476 = vpop.f32.mrf.mxu0
        %3477 = vmatprep.mubr.bf16.mxu0 0
        %3478 = vmatmul.mubr.bf16.gmra.mxu0 %v3364
        %v3479 = vpop.f32.mrf.mxu0
        %v3480 = vadd.f32 0.0, %v3479
        %v3481 = vpop.f32.mrf.mxu0
        %v3482 = vpop.f32.mrf.mxu0
        %v3483 = vadd.f32 0.0, %v3482
        %v3484 = vpop.f32.mrf.mxu0
        %3485 = vdwg.mxu0
        %3502 = vrot.lane.b32.xlu0 %v2460, 32
        %v3503 = vpop.permute.xlu0 %3502
        %3504 = vrot.lane.b32.xlu0 %v2463, 32
        %v3505 = vpop.permute.xlu0 %3504
        %3506 = vrot.lane.b32.xlu0 %v2468, 32
        %v3507 = vpop.permute.xlu0 %3506
        %3508 = vrot.lane.b32.xlu0 %v2471, 32
        %v3509 = vpop.permute.xlu0 %3508
        %3510 = vrot.lane.b32.xlu0 %v2476, 32
        %v3511 = vpop.permute.xlu0 %3510
        %3512 = vrot.lane.b32.xlu0 %v2479, 32
        %v3513 = vpop.permute.xlu0 %3512
        %3514 = vrot.lane.b32.xlu0 %v2484, 32
        %v3515 = vpop.permute.xlu0 %3514
        %3516 = vrot.lane.b32.xlu0 %v2487, 32
        %v3517 = vpop.permute.xlu0 %3516
        %3518 = vrot.lane.b32.xlu0 %v2492, 32
        %v3519 = vpop.permute.xlu0 %3518
        %3520 = vrot.lane.b32.xlu0 %v2495, 32
        %v3521 = vpop.permute.xlu0 %3520
        %3522 = vrot.lane.b32.xlu0 %v2500, 32
        %v3523 = vpop.permute.xlu0 %3522
        %3524 = vrot.lane.b32.xlu0 %v2503, 32
        %v3525 = vpop.permute.xlu0 %3524
        %3526 = vrot.lane.b32.xlu0 %v2508, 32
        %v3527 = vpop.permute.xlu0 %3526
        %3528 = vrot.lane.b32.xlu0 %v2511, 32
        %v3529 = vpop.permute.xlu0 %3528
        %3530 = vrot.lane.b32.xlu0 %v2516, 32
        %v3531 = vpop.permute.xlu0 %3530
        %3532 = vrot.lane.b32.xlu0 %v2519, 32
        %v3533 = vpop.permute.xlu0 %3532
        %3566 = vrot.lane.b32.xlu0 %v2942, 64
        %v3567 = vpop.permute.xlu0 %3566
        %3568 = vrot.lane.b32.xlu0 %v2945, 64
        %v3569 = vpop.permute.xlu0 %3568
        %3570 = vrot.lane.b32.xlu0 %v2950, 64
        %v3571 = vpop.permute.xlu0 %3570
        %3572 = vrot.lane.b32.xlu0 %v2953, 64
        %v3573 = vpop.permute.xlu0 %3572
        %3574 = vrot.lane.b32.xlu0 %v2958, 64
        %v3575 = vpop.permute.xlu0 %3574
        %3576 = vrot.lane.b32.xlu0 %v2961, 64
        %v3577 = vpop.permute.xlu0 %3576
        %3578 = vrot.lane.b32.xlu0 %v2966, 64
        %v3579 = vpop.permute.xlu0 %3578
        %3580 = vrot.lane.b32.xlu0 %v2969, 64
        %v3581 = vpop.permute.xlu0 %3580
        %3582 = vrot.lane.b32.xlu0 %v2974, 64
        %v3583 = vpop.permute.xlu0 %3582
        %3584 = vrot.lane.b32.xlu0 %v2977, 64
        %v3585 = vpop.permute.xlu0 %3584
        %3586 = vrot.lane.b32.xlu0 %v2982, 64
        %v3587 = vpop.permute.xlu0 %3586
        %3588 = vrot.lane.b32.xlu0 %v2985, 64
        %v3589 = vpop.permute.xlu0 %3588
        %3590 = vrot.lane.b32.xlu0 %v2990, 64
        %v3591 = vpop.permute.xlu0 %3590
        %3592 = vrot.lane.b32.xlu0 %v2993, 64
        %v3593 = vpop.permute.xlu0 %3592
        %3594 = vrot.lane.b32.xlu0 %v2998, 64
        %v3595 = vpop.permute.xlu0 %3594
        %3596 = vrot.lane.b32.xlu0 %v3001, 64
        %v3597 = vpop.permute.xlu0 %3596
        %3630 = vrot.lane.b32.xlu0 %v3424, 96
        %v3631 = vpop.permute.xlu0 %3630
        %3632 = vrot.lane.b32.xlu0 %v3427, 96
        %v3633 = vpop.permute.xlu0 %3632
        %3634 = vrot.lane.b32.xlu0 %v3432, 96
        %v3635 = vpop.permute.xlu0 %3634
        %3636 = vrot.lane.b32.xlu0 %v3435, 96
        %v3637 = vpop.permute.xlu0 %3636
        %3638 = vrot.lane.b32.xlu0 %v3440, 96
        %v3639 = vpop.permute.xlu0 %3638
        %3640 = vrot.lane.b32.xlu0 %v3443, 96
        %v3641 = vpop.permute.xlu0 %3640
        %3642 = vrot.lane.b32.xlu0 %v3448, 96
        %v3643 = vpop.permute.xlu0 %3642
        %3644 = vrot.lane.b32.xlu0 %v3451, 96
        %v3645 = vpop.permute.xlu0 %3644
        %3646 = vrot.lane.b32.xlu0 %v3456, 96
        %v3647 = vpop.permute.xlu0 %3646
        %3648 = vrot.lane.b32.xlu0 %v3459, 96
        %v3649 = vpop.permute.xlu0 %3648
        %3650 = vrot.lane.b32.xlu0 %v3464, 96
        %v3651 = vpop.permute.xlu0 %3650
        %3652 = vrot.lane.b32.xlu0 %v3467, 96
        %v3653 = vpop.permute.xlu0 %3652
        %3654 = vrot.lane.b32.xlu0 %v3472, 96
        %v3655 = vpop.permute.xlu0 %3654
        %3656 = vrot.lane.b32.xlu0 %v3475, 96
        %v3657 = vpop.permute.xlu0 %3656
        %3658 = vrot.lane.b32.xlu0 %v3480, 96
        %v3659 = vpop.permute.xlu0 %3658
        %3660 = vrot.lane.b32.xlu0 %v3483, 96
        %v3661 = vpop.permute.xlu0 %3660
        %v3678 = vsel %vm1589, %v1954, %v3503
        %v3679 = vsel %vm1589, %v1957, %v3505
        %v3680 = vsel %vm1589, %v1962, %v3507
        %v3681 = vsel %vm1589, %v1965, %v3509
        %v3682 = vsel %vm1589, %v1970, %v3511
        %v3683 = vsel %vm1589, %v1973, %v3513
        %v3684 = vsel %vm1589, %v1978, %v3515
        %v3685 = vsel %vm1589, %v1981, %v3517
        %v3686 = vsel %vm1589, %v1986, %v3519
        %v3687 = vsel %vm1589, %v1989, %v3521
        %v3688 = vsel %vm1589, %v1994, %v3523
        %v3689 = vsel %vm1589, %v1997, %v3525
        %v3690 = vsel %vm1589, %v2002, %v3527
        %v3691 = vsel %vm1589, %v2005, %v3529
        %v3692 = vsel %vm1589, %v2010, %v3531
        %v3693 = vsel %vm1589, %v2013, %v3533
        %vm3694 = vcmask 523264
        %v3695 = vsel %vm3694, %v3678, %v3567
        %v3696 = vsel %vm3694, %v3679, %v3569
        %v3697 = vsel %vm3694, %v3680, %v3571
        %v3698 = vsel %vm3694, %v3681, %v3573
        %v3699 = vsel %vm3694, %v3682, %v3575
        %v3700 = vsel %vm3694, %v3683, %v3577
        %v3701 = vsel %vm3694, %v3684, %v3579
        %v3702 = vsel %vm3694, %v3685, %v3581
        %v3703 = vsel %vm3694, %v3686, %v3583
        %v3704 = vsel %vm3694, %v3687, %v3585
        %v3705 = vsel %vm3694, %v3688, %v3587
        %v3706 = vsel %vm3694, %v3689, %v3589
        %v3707 = vsel %vm3694, %v3690, %v3591
        %v3708 = vsel %vm3694, %v3691, %v3593
        %v3709 = vsel %vm3694, %v3692, %v3595
        %v3710 = vsel %vm3694, %v3693, %v3597
        %vm3711 = vcmask 785408
        %v3712 = vsel %vm3711, %v3695, %v3631
        %v3713 = vsel %vm3711, %v3696, %v3633
        %v3714 = vsel %vm3711, %v3697, %v3635
        %v3715 = vsel %vm3711, %v3698, %v3637
        %v3716 = vsel %vm3711, %v3699, %v3639
        %v3717 = vsel %vm3711, %v3700, %v3641
        %v3718 = vsel %vm3711, %v3701, %v3643
        %v3719 = vsel %vm3711, %v3702, %v3645
        %v3720 = vsel %vm3711, %v3703, %v3647
        %v3721 = vsel %vm3711, %v3704, %v3649
        %v3722 = vsel %vm3711, %v3705, %v3651
        %v3723 = vsel %vm3711, %v3706, %v3653
        %v3724 = vsel %vm3711, %v3707, %v3655
        %v3725 = vsel %vm3711, %v3708, %v3657
        %v3726 = vsel %vm3711, %v3709, %v3659
        %v3727 = vsel %vm3711, %v3710, %v3661
        %v3728 = vpack.c.bf16 %v3713, %v3712
        %v3729 = vpack.c.bf16 %v3715, %v3714
        %v3730 = vpack.c.bf16 %v3717, %v3716
        %v3731 = vpack.c.bf16 %v3719, %v3718
        %v3732 = vpack.c.bf16 %v3721, %v3720
        %v3733 = vpack.c.bf16 %v3723, %v3722
        %v3734 = vpack.c.bf16 %v3725, %v3724
        %v3735 = vpack.c.bf16 %v3727, %v3726
        %v3736 = vld [vmem:[#allocation8] sm:$0xf]
        %v3737 = vld [vmem:[#allocation8 + $0x4] sm:$0xf]
        %v3738 = vld [vmem:[#allocation8 + $0x8] sm:$0xf]
        %v3739 = vld [vmem:[#allocation8 + $0xc] sm:$0xf]
        %v3740 = vld [vmem:[#allocation8 + $0x10] sm:$0xf]
        %v3741 = vld [vmem:[#allocation8 + $0x14] sm:$0xf]
        %v3742 = vld [vmem:[#allocation8 + $0x18] sm:$0xf]
        %v3743 = vld [vmem:[#allocation8 + $0x1c] sm:$0xf]
        %v3744 = vld [vmem:[#allocation8 + $0x20] sm:$0xf]
        %v3745 = vld [vmem:[#allocation8 + $0x24] sm:$0xf]
        %v3746 = vld [vmem:[#allocation8 + $0x28] sm:$0xf]
        %v3747 = vld [vmem:[#allocation8 + $0x2c] sm:$0xf]
        %v3748 = vld [vmem:[#allocation8 + $0x30] sm:$0xf]
        %v3749 = vld [vmem:[#allocation8 + $0x34] sm:$0xf]
        %v3750 = vld [vmem:[#allocation8 + $0x38] sm:$0xf]
        %v3751 = vld [vmem:[#allocation8 + $0x3c] sm:$0xf]
        %v3768 = vunpack.c.l.b16 %v3736
        %v3769 = vunpack.c.l.b16 %v3737
        %v3770 = vunpack.c.l.b16 %v3738
        %v3771 = vunpack.c.l.b16 %v3739
        %v3772 = vunpack.c.l.b16 %v3740
        %v3773 = vunpack.c.l.b16 %v3741
        %v3774 = vunpack.c.l.b16 %v3742
        %v3775 = vunpack.c.l.b16 %v3743
        %v3776 = vunpack.c.l.b16 %v3744
        %v3777 = vunpack.c.l.b16 %v3745
        %v3778 = vunpack.c.l.b16 %v3746
        %v3779 = vunpack.c.l.b16 %v3747
        %v3780 = vunpack.c.l.b16 %v3748
        %v3781 = vunpack.c.l.b16 %v3749
        %v3782 = vunpack.c.l.b16 %v3750
        %v3783 = vunpack.c.l.b16 %v3751
        %v3784 = vpack.c.b16 %v3769, %v3768
        %v3785 = vpack.c.b16 %v3771, %v3770
        %v3786 = vpack.c.b16 %v3773, %v3772
        %v3787 = vpack.c.b16 %v3775, %v3774
        %v3788 = vpack.c.b16 %v3777, %v3776
        %v3789 = vpack.c.b16 %v3779, %v3778
        %v3790 = vpack.c.b16 %v3781, %v3780
        %v3791 = vpack.c.b16 %v3783, %v3782
        %3800 = vmatprep.subr.bf16.mxu0 0
        %3801 = vmatpush1.bf16.msra.mxu0 %v3791
        %3802 = vmatprep.subr.bf16.mxu0 0
        %3803 = vmatpush1.bf16.msra.mxu0 %v3790
        %3804 = vmatprep.subr.bf16.mxu0 0
        %3805 = vmatpush1.bf16.msra.mxu0 %v3789
        %3806 = vmatprep.subr.bf16.mxu0 0
        %3807 = vmatpush1.bf16.msra.mxu0 %v3788
        %3808 = vmatprep.subr.bf16.mxu0 0
        %3809 = vmatpush1.bf16.msra.mxu0 %v3787
        %3810 = vmatprep.subr.bf16.mxu0 0
        %3811 = vmatpush1.bf16.msra.mxu0 %v3786
        %3812 = vmatprep.subr.bf16.mxu0 0
        %3813 = vmatpush1.bf16.msra.mxu0 %v3785
        %3814 = vmatprep.subr.bf16.mxu0 0
        %3815 = vmatpush1.bf16.msra.mxu0 %v3784
        %3816 = vmatprep.subr.bf16.mxu0 0
        %3817 = vmatpush2.bf16.msra.mxu0 0
        %3818 = vmatprep.subr.bf16.mxu0 0
        %3819 = vmatpush2.bf16.msra.mxu0 0
        %3820 = vmatprep.subr.bf16.mxu0 0
        %3821 = vmatpush2.bf16.msra.mxu0 0
        %3822 = vmatprep.subr.bf16.mxu0 0
        %3823 = vmatpush2.bf16.msra.mxu0 0
        %3824 = vmatprep.subr.bf16.mxu0 0
        %3825 = vmatpush2.bf16.msra.mxu0 0
        %3826 = vmatprep.subr.bf16.mxu0 0
        %3827 = vmatpush2.bf16.msra.mxu0 0
        %3828 = vmatprep.subr.bf16.mxu0 0
        %3829 = vmatpush2.bf16.msra.mxu0 0
        %3830 = vmatprep.subr.bf16.mxu0 0
        %3831 = vmatpush2.bf16.msra.mxu0 0
        %3832 = vmatprep.mubr.bf16.mxu0 0
        %3833 = vmatmul.mubr.bf16.gmra.mxu0 %v3728
        %v3834 = vpop.f32.mrf.mxu0
        %v3835 = vadd.f32 0.0, %v3834
        %v3836 = vpop.f32.mrf.mxu0
        %v3837 = vpop.f32.mrf.mxu0
        %v3838 = vadd.f32 0.0, %v3837
        %v3839 = vpop.f32.mrf.mxu0
        %3840 = vmatprep.mubr.bf16.mxu0 0
        %3841 = vmatmul.mubr.bf16.gmra.mxu0 %v3729
        %v3842 = vpop.f32.mrf.mxu0
        %v3843 = vadd.f32 0.0, %v3842
        %v3844 = vpop.f32.mrf.mxu0
        %v3845 = vpop.f32.mrf.mxu0
        %v3846 = vadd.f32 0.0, %v3845
        %v3847 = vpop.f32.mrf.mxu0
        %3848 = vmatprep.mubr.bf16.mxu0 0
        %3849 = vmatmul.mubr.bf16.gmra.mxu0 %v3730
        %v3850 = vpop.f32.mrf.mxu0
        %v3851 = vadd.f32 0.0, %v3850
        %v3852 = vpop.f32.mrf.mxu0
        %v3853 = vpop.f32.mrf.mxu0
        %v3854 = vadd.f32 0.0, %v3853
        %v3855 = vpop.f32.mrf.mxu0
        %3856 = vmatprep.mubr.bf16.mxu0 0
        %3857 = vmatmul.mubr.bf16.gmra.mxu0 %v3731
        %v3858 = vpop.f32.mrf.mxu0
        %v3859 = vadd.f32 0.0, %v3858
        %v3860 = vpop.f32.mrf.mxu0
        %v3861 = vpop.f32.mrf.mxu0
        %v3862 = vadd.f32 0.0, %v3861
        %v3863 = vpop.f32.mrf.mxu0
        %3864 = vmatprep.mubr.bf16.mxu0 0
        %3865 = vmatmul.mubr.bf16.gmra.mxu0 %v3732
        %v3866 = vpop.f32.mrf.mxu0
        %v3867 = vadd.f32 0.0, %v3866
        %v3868 = vpop.f32.mrf.mxu0
        %v3869 = vpop.f32.mrf.mxu0
        %v3870 = vadd.f32 0.0, %v3869
        %v3871 = vpop.f32.mrf.mxu0
        %3872 = vmatprep.mubr.bf16.mxu0 0
        %3873 = vmatmul.mubr.bf16.gmra.mxu0 %v3733
        %v3874 = vpop.f32.mrf.mxu0
        %v3875 = vadd.f32 0.0, %v3874
        %v3876 = vpop.f32.mrf.mxu0
        %v3877 = vpop.f32.mrf.mxu0
        %v3878 = vadd.f32 0.0, %v3877
        %v3879 = vpop.f32.mrf.mxu0
        %3880 = vmatprep.mubr.bf16.mxu0 0
        %3881 = vmatmul.mubr.bf16.gmra.mxu0 %v3734
        %v3882 = vpop.f32.mrf.mxu0
        %v3883 = vadd.f32 0.0, %v3882
        %v3884 = vpop.f32.mrf.mxu0
        %v3885 = vpop.f32.mrf.mxu0
        %v3886 = vadd.f32 0.0, %v3885
        %v3887 = vpop.f32.mrf.mxu0
        %3888 = vmatprep.mubr.bf16.mxu0 0
        %3889 = vmatmul.mubr.bf16.gmra.mxu0 %v3735
        %v3890 = vpop.f32.mrf.mxu0
        %v3891 = vadd.f32 0.0, %v3890
        %v3892 = vpop.f32.mrf.mxu0
        %v3893 = vpop.f32.mrf.mxu0
        %v3894 = vadd.f32 0.0, %v3893
        %v3895 = vpop.f32.mrf.mxu0
        %3896 = vdwg.mxu0
        %v3897 = vadd.f32 %v622, %v3835
        %v3898 = vadd.f32 %v623, %v3838
        %v3899 = vadd.f32 %v624, %v3843
        %v3900 = vadd.f32 %v625, %v3846
        %v3901 = vadd.f32 %v626, %v3851
        %v3902 = vadd.f32 %v627, %v3854
        %v3903 = vadd.f32 %v628, %v3859
        %v3904 = vadd.f32 %v629, %v3862
        %v3905 = vadd.f32 %v630, %v3867
        %v3906 = vadd.f32 %v631, %v3870
        %v3907 = vadd.f32 %v632, %v3875
        %v3908 = vadd.f32 %v633, %v3878
        %v3909 = vadd.f32 %v634, %v3883
        %v3910 = vadd.f32 %v635, %v3886
        %v3911 = vadd.f32 %v636, %v3891
        %v3912 = vadd.f32 %v637, %v3894
        %v3913 = vld [vmem:[%s13] sm:$0x1]
        %v3914 = vld [vmem:[%s14] sm:$0x1]
        %3915 = vadd.xlane.f32.xlu0 %v3897
        %v3916 = vpop.xlane.xlu0 %3915
        %3917 = vadd.xlane.f32.xlu0 %v3898
        %v3918 = vpop.xlane.xlu0 %3917
        %3919 = vadd.xlane.f32.xlu0 %v3899
        %v3920 = vpop.xlane.xlu0 %3919
        %3921 = vadd.xlane.f32.xlu0 %v3900
        %v3922 = vpop.xlane.xlu0 %3921
        %3923 = vadd.xlane.f32.xlu0 %v3901
        %v3924 = vpop.xlane.xlu0 %3923
        %3925 = vadd.xlane.f32.xlu0 %v3902
        %v3926 = vpop.xlane.xlu0 %3925
        %3927 = vadd.xlane.f32.xlu0 %v3903
        %v3928 = vpop.xlane.xlu0 %3927
        %3929 = vadd.xlane.f32.xlu0 %v3904
        %v3930 = vpop.xlane.xlu0 %3929
        %3931 = vadd.xlane.f32.xlu0 %v3905
        %v3932 = vpop.xlane.xlu0 %3931
        %3933 = vadd.xlane.f32.xlu0 %v3906
        %v3934 = vpop.xlane.xlu0 %3933
        %3935 = vadd.xlane.f32.xlu0 %v3907
        %v3936 = vpop.xlane.xlu0 %3935
        %3937 = vadd.xlane.f32.xlu0 %v3908
        %v3938 = vpop.xlane.xlu0 %3937
        %3939 = vadd.xlane.f32.xlu0 %v3909
        %v3940 = vpop.xlane.xlu0 %3939
        %3941 = vadd.xlane.f32.xlu0 %v3910
        %v3942 = vpop.xlane.xlu0 %3941
        %3943 = vadd.xlane.f32.xlu0 %v3911
        %v3944 = vpop.xlane.xlu0 %3943
        %3945 = vadd.xlane.f32.xlu0 %v3912
        %v3946 = vpop.xlane.xlu0 %3945
        %v3947 = vmul.f32 %v3916, %v773
        %v3948 = vmul.f32 %v3918, %v773
        %v3949 = vmul.f32 %v3920, %v773
        %v3950 = vmul.f32 %v3922, %v773
        %v3951 = vmul.f32 %v3924, %v773
        %v3952 = vmul.f32 %v3926, %v773
        %v3953 = vmul.f32 %v3928, %v773
        %v3954 = vmul.f32 %v3930, %v773
        %v3955 = vmul.f32 %v3932, %v773
        %v3956 = vmul.f32 %v3934, %v773
        %v3957 = vmul.f32 %v3936, %v773
        %v3958 = vmul.f32 %v3938, %v773
        %v3959 = vmul.f32 %v3940, %v773
        %v3960 = vmul.f32 %v3942, %v773
        %v3961 = vmul.f32 %v3944, %v773
        %v3962 = vmul.f32 %v3946, %v773
        %v3963 = vsub.f32 %v3897, %v3947
        %v3964 = vsub.f32 %v3898, %v3948
        %v3965 = vsub.f32 %v3899, %v3949
        %v3966 = vsub.f32 %v3900, %v3950
        %v3967 = vsub.f32 %v3901, %v3951
        %v3968 = vsub.f32 %v3902, %v3952
        %v3969 = vsub.f32 %v3903, %v3953
        %v3970 = vsub.f32 %v3904, %v3954
        %v3971 = vsub.f32 %v3905, %v3955
        %v3972 = vsub.f32 %v3906, %v3956
        %v3973 = vsub.f32 %v3907, %v3957
        %v3974 = vsub.f32 %v3908, %v3958
        %v3975 = vsub.f32 %v3909, %v3959
        %v3976 = vsub.f32 %v3910, %v3960
        %v3977 = vsub.f32 %v3911, %v3961
        %v3978 = vsub.f32 %v3912, %v3962
        %v3979 = vmul.f32 %v3963, %v3963
        %v3980 = vmul.f32 %v3964, %v3964
        %v3981 = vmul.f32 %v3965, %v3965
        %v3982 = vmul.f32 %v3966, %v3966
        %v3983 = vmul.f32 %v3967, %v3967
        %v3984 = vmul.f32 %v3968, %v3968
        %v3985 = vmul.f32 %v3969, %v3969
        %v3986 = vmul.f32 %v3970, %v3970
        %v3987 = vmul.f32 %v3971, %v3971
        %v3988 = vmul.f32 %v3972, %v3972
        %v3989 = vmul.f32 %v3973, %v3973
        %v3990 = vmul.f32 %v3974, %v3974
        %v3991 = vmul.f32 %v3975, %v3975
        %v3992 = vmul.f32 %v3976, %v3976
        %v3993 = vmul.f32 %v3977, %v3977
        %v3994 = vmul.f32 %v3978, %v3978
        %3995 = vadd.xlane.f32.xlu0 %v3979
        %v3996 = vpop.xlane.xlu0 %3995
        %3997 = vadd.xlane.f32.xlu0 %v3980
        %v3998 = vpop.xlane.xlu0 %3997
        %3999 = vadd.xlane.f32.xlu0 %v3981
        %v4000 = vpop.xlane.xlu0 %3999
        %4001 = vadd.xlane.f32.xlu0 %v3982
        %v4002 = vpop.xlane.xlu0 %4001
        %4003 = vadd.xlane.f32.xlu0 %v3983
        %v4004 = vpop.xlane.xlu0 %4003
        %4005 = vadd.xlane.f32.xlu0 %v3984
        %v4006 = vpop.xlane.xlu0 %4005
        %4007 = vadd.xlane.f32.xlu0 %v3985
        %v4008 = vpop.xlane.xlu0 %4007
        %4009 = vadd.xlane.f32.xlu0 %v3986
        %v4010 = vpop.xlane.xlu0 %4009
        %4011 = vadd.xlane.f32.xlu0 %v3987
        %v4012 = vpop.xlane.xlu0 %4011
        %4013 = vadd.xlane.f32.xlu0 %v3988
        %v4014 = vpop.xlane.xlu0 %4013
        %4015 = vadd.xlane.f32.xlu0 %v3989
        %v4016 = vpop.xlane.xlu0 %4015
        %4017 = vadd.xlane.f32.xlu0 %v3990
        %v4018 = vpop.xlane.xlu0 %4017
        %4019 = vadd.xlane.f32.xlu0 %v3991
        %v4020 = vpop.xlane.xlu0 %4019
        %4021 = vadd.xlane.f32.xlu0 %v3992
        %v4022 = vpop.xlane.xlu0 %4021
        %4023 = vadd.xlane.f32.xlu0 %v3993
        %v4024 = vpop.xlane.xlu0 %4023
        %4025 = vadd.xlane.f32.xlu0 %v3994
        %v4026 = vpop.xlane.xlu0 %4025
        %v4027 = vmul.f32 %v3996, 0.007874016
        %v4028 = vmul.f32 %v3998, 0.007874016
        %v4029 = vmul.f32 %v4000, 0.007874016
        %v4030 = vmul.f32 %v4002, 0.007874016
        %v4031 = vmul.f32 %v4004, 0.007874016
        %v4032 = vmul.f32 %v4006, 0.007874016
        %v4033 = vmul.f32 %v4008, 0.007874016
        %v4034 = vmul.f32 %v4010, 0.007874016
        %v4035 = vmul.f32 %v4012, 0.007874016
        %v4036 = vmul.f32 %v4014, 0.007874016
        %v4037 = vmul.f32 %v4016, 0.007874016
        %v4038 = vmul.f32 %v4018, 0.007874016
        %v4039 = vmul.f32 %v4020, 0.007874016
        %v4040 = vmul.f32 %v4022, 0.007874016
        %v4041 = vmul.f32 %v4024, 0.007874016
        %v4042 = vmul.f32 %v4026, 0.007874016
        %v4043 = vrsqrt.pop %v4027
        %v4044 = vmul.f32 %v4027, %v4043
        %vm4045 = vcmp.eq.f32.partialorder %v4027, inf
        %v4046 = vsel %vm4045, %v4027, %v4044
        %vm4047 = vcmp.eq.f32.partialorder %v4027, 0.0
        %v4048 = vand.u32 %v4027, 2147483648
        %v4049 = vsel %vm4047, %v4048, %v4046
        %v4050 = vrsqrt.pop %v4028
        %v4051 = vmul.f32 %v4028, %v4050
        %vm4052 = vcmp.eq.f32.partialorder %v4028, inf
        %v4053 = vsel %vm4052, %v4028, %v4051
        %vm4054 = vcmp.eq.f32.partialorder %v4028, 0.0
        %v4055 = vand.u32 %v4028, 2147483648
        %v4056 = vsel %vm4054, %v4055, %v4053
        %v4057 = vrsqrt.pop %v4029
        %v4058 = vmul.f32 %v4029, %v4057
        %vm4059 = vcmp.eq.f32.partialorder %v4029, inf
        %v4060 = vsel %vm4059, %v4029, %v4058
        %vm4061 = vcmp.eq.f32.partialorder %v4029, 0.0
        %v4062 = vand.u32 %v4029, 2147483648
        %v4063 = vsel %vm4061, %v4062, %v4060
        %v4064 = vrsqrt.pop %v4030
        %v4065 = vmul.f32 %v4030, %v4064
        %vm4066 = vcmp.eq.f32.partialorder %v4030, inf
        %v4067 = vsel %vm4066, %v4030, %v4065
        %vm4068 = vcmp.eq.f32.partialorder %v4030, 0.0
        %v4069 = vand.u32 %v4030, 2147483648
        %v4070 = vsel %vm4068, %v4069, %v4067
        %v4071 = vrsqrt.pop %v4031
        %v4072 = vmul.f32 %v4031, %v4071
        %vm4073 = vcmp.eq.f32.partialorder %v4031, inf
        %v4074 = vsel %vm4073, %v4031, %v4072
        %vm4075 = vcmp.eq.f32.partialorder %v4031, 0.0
        %v4076 = vand.u32 %v4031, 2147483648
        %v4077 = vsel %vm4075, %v4076, %v4074
        %v4078 = vrsqrt.pop %v4032
        %v4079 = vmul.f32 %v4032, %v4078
        %vm4080 = vcmp.eq.f32.partialorder %v4032, inf
        %v4081 = vsel %vm4080, %v4032, %v4079
        %vm4082 = vcmp.eq.f32.partialorder %v4032, 0.0
        %v4083 = vand.u32 %v4032, 2147483648
        %v4084 = vsel %vm4082, %v4083, %v4081
        %v4085 = vrsqrt.pop %v4033
        %v4086 = vmul.f32 %v4033, %v4085
        %vm4087 = vcmp.eq.f32.partialorder %v4033, inf
        %v4088 = vsel %vm4087, %v4033, %v4086
        %vm4089 = vcmp.eq.f32.partialorder %v4033, 0.0
        %v4090 = vand.u32 %v4033, 2147483648
        %v4091 = vsel %vm4089, %v4090, %v4088
        %v4092 = vrsqrt.pop %v4034
        %v4093 = vmul.f32 %v4034, %v4092
        %vm4094 = vcmp.eq.f32.partialorder %v4034, inf
        %v4095 = vsel %vm4094, %v4034, %v4093
        %vm4096 = vcmp.eq.f32.partialorder %v4034, 0.0
        %v4097 = vand.u32 %v4034, 2147483648
        %v4098 = vsel %vm4096, %v4097, %v4095
        %v4099 = vrsqrt.pop %v4035
        %v4100 = vmul.f32 %v4035, %v4099
        %vm4101 = vcmp.eq.f32.partialorder %v4035, inf
        %v4102 = vsel %vm4101, %v4035, %v4100
        %vm4103 = vcmp.eq.f32.partialorder %v4035, 0.0
        %v4104 = vand.u32 %v4035, 2147483648
        %v4105 = vsel %vm4103, %v4104, %v4102
        %v4106 = vrsqrt.pop %v4036
        %v4107 = vmul.f32 %v4036, %v4106
        %vm4108 = vcmp.eq.f32.partialorder %v4036, inf
        %v4109 = vsel %vm4108, %v4036, %v4107
        %vm4110 = vcmp.eq.f32.partialorder %v4036, 0.0
        %v4111 = vand.u32 %v4036, 2147483648
        %v4112 = vsel %vm4110, %v4111, %v4109
        %v4113 = vrsqrt.pop %v4037
        %v4114 = vmul.f32 %v4037, %v4113
        %vm4115 = vcmp.eq.f32.partialorder %v4037, inf
        %v4116 = vsel %vm4115, %v4037, %v4114
        %vm4117 = vcmp.eq.f32.partialorder %v4037, 0.0
        %v4118 = vand.u32 %v4037, 2147483648
        %v4119 = vsel %vm4117, %v4118, %v4116
        %v4120 = vrsqrt.pop %v4038
        %v4121 = vmul.f32 %v4038, %v4120
        %vm4122 = vcmp.eq.f32.partialorder %v4038, inf
        %v4123 = vsel %vm4122, %v4038, %v4121
        %vm4124 = vcmp.eq.f32.partialorder %v4038, 0.0
        %v4125 = vand.u32 %v4038, 2147483648
        %v4126 = vsel %vm4124, %v4125, %v4123
        %v4127 = vrsqrt.pop %v4039
        %v4128 = vmul.f32 %v4039, %v4127
        %vm4129 = vcmp.eq.f32.partialorder %v4039, inf
        %v4130 = vsel %vm4129, %v4039, %v4128
        %vm4131 = vcmp.eq.f32.partialorder %v4039, 0.0
        %v4132 = vand.u32 %v4039, 2147483648
        %v4133 = vsel %vm4131, %v4132, %v4130
        %v4134 = vrsqrt.pop %v4040
        %v4135 = vmul.f32 %v4040, %v4134
        %vm4136 = vcmp.eq.f32.partialorder %v4040, inf
        %v4137 = vsel %vm4136, %v4040, %v4135
        %vm4138 = vcmp.eq.f32.partialorder %v4040, 0.0
        %v4139 = vand.u32 %v4040, 2147483648
        %v4140 = vsel %vm4138, %v4139, %v4137
        %v4141 = vrsqrt.pop %v4041
        %v4142 = vmul.f32 %v4041, %v4141
        %vm4143 = vcmp.eq.f32.partialorder %v4041, inf
        %v4144 = vsel %vm4143, %v4041, %v4142
        %vm4145 = vcmp.eq.f32.partialorder %v4041, 0.0
        %v4146 = vand.u32 %v4041, 2147483648
        %v4147 = vsel %vm4145, %v4146, %v4144
        %v4148 = vrsqrt.pop %v4042
        %v4149 = vmul.f32 %v4042, %v4148
        %vm4150 = vcmp.eq.f32.partialorder %v4042, inf
        %v4151 = vsel %vm4150, %v4042, %v4149
        %vm4152 = vcmp.eq.f32.partialorder %v4042, 0.0
        %v4153 = vand.u32 %v4042, 2147483648
        %v4154 = vsel %vm4152, %v4153, %v4151
        %v4155 = vadd.f32 %v4049, 1e-06
        %v4156 = vadd.f32 %v4056, 1e-06
        %v4157 = vadd.f32 %v4063, 1e-06
        %v4158 = vadd.f32 %v4070, 1e-06
        %v4159 = vadd.f32 %v4077, 1e-06
        %v4160 = vadd.f32 %v4084, 1e-06
        %v4161 = vadd.f32 %v4091, 1e-06
        %v4162 = vadd.f32 %v4098, 1e-06
        %v4163 = vadd.f32 %v4105, 1e-06
        %v4164 = vadd.f32 %v4112, 1e-06
        %v4165 = vadd.f32 %v4119, 1e-06
        %v4166 = vadd.f32 %v4126, 1e-06
        %v4167 = vadd.f32 %v4133, 1e-06
        %v4168 = vadd.f32 %v4140, 1e-06
        %v4169 = vadd.f32 %v4147, 1e-06
        %v4170 = vadd.f32 %v4154, 1e-06
        %v4171 = vrcp.pop %v4155
        %v4172 = vrcp.pop %v4156
        %v4173 = vrcp.pop %v4157
        %v4174 = vrcp.pop %v4158
        %v4175 = vrcp.pop %v4159
        %v4176 = vrcp.pop %v4160
        %v4177 = vrcp.pop %v4161
        %v4178 = vrcp.pop %v4162
        %v4179 = vrcp.pop %v4163
        %v4180 = vrcp.pop %v4164
        %v4181 = vrcp.pop %v4165
        %v4182 = vrcp.pop %v4166
        %v4183 = vrcp.pop %v4167
        %v4184 = vrcp.pop %v4168
        %v4185 = vrcp.pop %v4169
        %v4186 = vrcp.pop %v4170
        %v4188 = vlaneseq
        %v4189 = vshrl.u32 %v4188, 7
        %v4190 = vsub.s32 0, %v4189
        %v4191 = vrot.slane %v3913, %v4190
        %v4193 = vmul.f32 %v4191, %v3963
        %v4194 = vmul.f32 %v4191, %v3964
        %v4195 = vmul.f32 %v4191, %v3965
        %v4196 = vmul.f32 %v4191, %v3966
        %v4197 = vmul.f32 %v4191, %v3967
        %v4198 = vmul.f32 %v4191, %v3968
        %v4199 = vmul.f32 %v4191, %v3969
        %v4200 = vmul.f32 %v4191, %v3970
        %v4201 = vmul.f32 %v4191, %v3971
        %v4202 = vmul.f32 %v4191, %v3972
        %v4203 = vmul.f32 %v4191, %v3973
        %v4204 = vmul.f32 %v4191, %v3974
        %v4205 = vmul.f32 %v4191, %v3975
        %v4206 = vmul.f32 %v4191, %v3976
        %v4207 = vmul.f32 %v4191, %v3977
        %v4208 = vmul.f32 %v4191, %v3978
        %v4209 = vmul.f32 %v4193, %v4171
        %v4210 = vmul.f32 %v4194, %v4172
        %v4211 = vmul.f32 %v4195, %v4173
        %v4212 = vmul.f32 %v4196, %v4174
        %v4213 = vmul.f32 %v4197, %v4175
        %v4214 = vmul.f32 %v4198, %v4176
        %v4215 = vmul.f32 %v4199, %v4177
        %v4216 = vmul.f32 %v4200, %v4178
        %v4217 = vmul.f32 %v4201, %v4179
        %v4218 = vmul.f32 %v4202, %v4180
        %v4219 = vmul.f32 %v4203, %v4181
        %v4220 = vmul.f32 %v4204, %v4182
        %v4221 = vmul.f32 %v4205, %v4183
        %v4222 = vmul.f32 %v4206, %v4184
        %v4223 = vmul.f32 %v4207, %v4185
        %v4224 = vmul.f32 %v4208, %v4186
        %v4226 = vlaneseq
        %v4227 = vshrl.u32 %v4226, 7
        %v4228 = vsub.s32 0, %v4227
        %v4229 = vrot.slane %v3914, %v4228
        %v4231 = vadd.f32 %v4209, %v4229
        %v4232 = vadd.f32 %v4210, %v4229
        %v4233 = vadd.f32 %v4211, %v4229
        %v4234 = vadd.f32 %v4212, %v4229
        %v4235 = vadd.f32 %v4213, %v4229
        %v4236 = vadd.f32 %v4214, %v4229
        %v4237 = vadd.f32 %v4215, %v4229
        %v4238 = vadd.f32 %v4216, %v4229
        %v4239 = vadd.f32 %v4217, %v4229
        %v4240 = vadd.f32 %v4218, %v4229
        %v4241 = vadd.f32 %v4219, %v4229
        %v4242 = vadd.f32 %v4220, %v4229
        %v4243 = vadd.f32 %v4221, %v4229
        %v4244 = vadd.f32 %v4222, %v4229
        %v4245 = vadd.f32 %v4223, %v4229
        %v4246 = vadd.f32 %v4224, %v4229
        %v4247 = vpack.c.bf16 %v4232, %v4231
        %v4248 = vpack.c.bf16 %v4234, %v4233
        %v4249 = vpack.c.bf16 %v4236, %v4235
        %v4250 = vpack.c.bf16 %v4238, %v4237
        %v4251 = vpack.c.bf16 %v4240, %v4239
        %v4252 = vpack.c.bf16 %v4242, %v4241
        %v4253 = vpack.c.bf16 %v4244, %v4243
        %v4254 = vpack.c.bf16 %v4246, %v4245
        %v4255 = vld [vmem:[#allocation10] sm:$0xff]
        %v4256 = vld [vmem:[#allocation10 + $0x8] sm:$0xff]
        %v4257 = vld [vmem:[#allocation10 + $0x10] sm:$0xff]
        %v4258 = vld [vmem:[#allocation10 + $0x18] sm:$0xff]
        %v4259 = vld [vmem:[#allocation10 + $0x20] sm:$0xff]
        %v4260 = vld [vmem:[#allocation10 + $0x28] sm:$0xff]
        %v4261 = vld [vmem:[#allocation10 + $0x30] sm:$0xff]
        %v4262 = vld [vmem:[#allocation10 + $0x38] sm:$0xff]
        %v4263 = vld [vmem:[#allocation10 + $0x40] sm:$0xff]
        %v4264 = vld [vmem:[#allocation10 + $0x48] sm:$0xff]
        %v4265 = vld [vmem:[#allocation10 + $0x50] sm:$0xff]
        %v4266 = vld [vmem:[#allocation10 + $0x58] sm:$0xff]
        %v4267 = vld [vmem:[#allocation10 + $0x60] sm:$0xff]
        %v4268 = vld [vmem:[#allocation10 + $0x68] sm:$0xff]
        %v4269 = vld [vmem:[#allocation10 + $0x70] sm:$0xff]
        %v4270 = vld [vmem:[#allocation10 + $0x78] sm:$0xff]
        %v4271 = vld [vmem:[%s10] sm:$0x3]
        %v4273 = vlaneseq
        %v4274 = vshrl.u32 %v4273, 7
        %v4275 = vsub.s32 0, %v4274
        %v4276 = vrot.slane %v4271, %v4275
        %v4277 = vlaneseq
        %v4278 = vshrl.u32 %v4277, 7
        %v4279 = vsub.s32 1, %v4278
        %v4280 = vrot.slane %v4271, %v4279
        %v4299 = vunpack.c.l.b16 %v4255
        %v4300 = vunpack.c.h.b16 %v4255
        %v4301 = vunpack.c.l.b16 %v4256
        %v4302 = vunpack.c.h.b16 %v4256
        %v4303 = vunpack.c.l.b16 %v4257
        %v4304 = vunpack.c.h.b16 %v4257
        %v4305 = vunpack.c.l.b16 %v4258
        %v4306 = vunpack.c.h.b16 %v4258
        %v4307 = vunpack.c.l.b16 %v4259
        %v4308 = vunpack.c.h.b16 %v4259
        %v4309 = vunpack.c.l.b16 %v4260
        %v4310 = vunpack.c.h.b16 %v4260
        %v4311 = vunpack.c.l.b16 %v4261
        %v4312 = vunpack.c.h.b16 %v4261
        %v4313 = vunpack.c.l.b16 %v4262
        %v4314 = vunpack.c.h.b16 %v4262
        %v4315 = vunpack.c.l.b16 %v4263
        %v4316 = vunpack.c.h.b16 %v4263
        %v4317 = vunpack.c.l.b16 %v4264
        %v4318 = vunpack.c.h.b16 %v4264
        %v4319 = vunpack.c.l.b16 %v4265
        %v4320 = vunpack.c.h.b16 %v4265
        %v4321 = vunpack.c.l.b16 %v4266
        %v4322 = vunpack.c.h.b16 %v4266
        %v4323 = vunpack.c.l.b16 %v4267
        %v4324 = vunpack.c.h.b16 %v4267
        %v4325 = vunpack.c.l.b16 %v4268
        %v4326 = vunpack.c.h.b16 %v4268
        %v4327 = vunpack.c.l.b16 %v4269
        %v4328 = vunpack.c.h.b16 %v4269
        %v4329 = vunpack.c.l.b16 %v4270
        %v4330 = vunpack.c.h.b16 %v4270
        %v4331 = vpack.c.b16 %v4301, %v4299
        %v4332 = vpack.c.b16 %v4302, %v4300
        %v4333 = vpack.c.b16 %v4305, %v4303
        %v4334 = vpack.c.b16 %v4306, %v4304
        %v4335 = vpack.c.b16 %v4309, %v4307
        %v4336 = vpack.c.b16 %v4310, %v4308
        %v4337 = vpack.c.b16 %v4313, %v4311
        %v4338 = vpack.c.b16 %v4314, %v4312
        %v4339 = vpack.c.b16 %v4317, %v4315
        %v4340 = vpack.c.b16 %v4318, %v4316
        %v4341 = vpack.c.b16 %v4321, %v4319
        %v4342 = vpack.c.b16 %v4322, %v4320
        %v4343 = vpack.c.b16 %v4325, %v4323
        %v4344 = vpack.c.b16 %v4326, %v4324
        %v4345 = vpack.c.b16 %v4329, %v4327
        %v4346 = vpack.c.b16 %v4330, %v4328
        %4363 = vmatprep.subr.bf16.mxu0 %v4346
        %4364 = vmatpush1.bf16.msra.mxu0 %v4345
        %4365 = vmatprep.subr.bf16.mxu0 %v4344
        %4366 = vmatpush1.bf16.msra.mxu0 %v4343
        %4367 = vmatprep.subr.bf16.mxu0 %v4342
        %4368 = vmatpush1.bf16.msra.mxu0 %v4341
        %4369 = vmatprep.subr.bf16.mxu0 %v4340
        %4370 = vmatpush1.bf16.msra.mxu0 %v4339
        %4371 = vmatprep.subr.bf16.mxu0 %v4338
        %4372 = vmatpush1.bf16.msra.mxu0 %v4337
        %4373 = vmatprep.subr.bf16.mxu0 %v4336
        %4374 = vmatpush1.bf16.msra.mxu0 %v4335
        %4375 = vmatprep.subr.bf16.mxu0 %v4334
        %4376 = vmatpush1.bf16.msra.mxu0 %v4333
        %4377 = vmatprep.subr.bf16.mxu0 %v4332
        %4378 = vmatpush1.bf16.msra.mxu0 %v4331
        %4379 = vmatprep.subr.bf16.mxu0 0
        %4380 = vmatpush2.bf16.msra.mxu0 0
        %4381 = vmatprep.subr.bf16.mxu0 0
        %4382 = vmatpush2.bf16.msra.mxu0 0
        %4383 = vmatprep.subr.bf16.mxu0 0
        %4384 = vmatpush2.bf16.msra.mxu0 0
        %4385 = vmatprep.subr.bf16.mxu0 0
        %4386 = vmatpush2.bf16.msra.mxu0 0
        %4387 = vmatprep.subr.bf16.mxu0 0
        %4388 = vmatpush2.bf16.msra.mxu0 0
        %4389 = vmatprep.subr.bf16.mxu0 0
        %4390 = vmatpush2.bf16.msra.mxu0 0
        %4391 = vmatprep.subr.bf16.mxu0 0
        %4392 = vmatpush2.bf16.msra.mxu0 0
        %4393 = vmatprep.subr.bf16.mxu0 0
        %4394 = vmatpush2.bf16.msra.mxu0 0
        %4395 = vmatprep.mubr.bf16.mxu0 0
        %4396 = vmatmul.mubr.bf16.gmra.mxu0 %v4247
        %v4397 = vpop.f32.mrf.mxu0
        %v4398 = vadd.f32 %v4276, %v4397
        %v4399 = vpop.f32.mrf.mxu0
        %v4400 = vadd.f32 %v4280, %v4399
        %v4401 = vpop.f32.mrf.mxu0
        %v4402 = vadd.f32 %v4276, %v4401
        %v4403 = vpop.f32.mrf.mxu0
        %v4404 = vadd.f32 %v4280, %v4403
        %4405 = vmatprep.mubr.bf16.mxu0 0
        %4406 = vmatmul.mubr.bf16.gmra.mxu0 %v4248
        %v4407 = vpop.f32.mrf.mxu0
        %v4408 = vadd.f32 %v4276, %v4407
        %v4409 = vpop.f32.mrf.mxu0
        %v4410 = vadd.f32 %v4280, %v4409
        %v4411 = vpop.f32.mrf.mxu0
        %v4412 = vadd.f32 %v4276, %v4411
        %v4413 = vpop.f32.mrf.mxu0
        %v4414 = vadd.f32 %v4280, %v4413
        %4415 = vmatprep.mubr.bf16.mxu0 0
        %4416 = vmatmul.mubr.bf16.gmra.mxu0 %v4249
        %v4417 = vpop.f32.mrf.mxu0
        %v4418 = vadd.f32 %v4276, %v4417
        %v4419 = vpop.f32.mrf.mxu0
        %v4420 = vadd.f32 %v4280, %v4419
        %v4421 = vpop.f32.mrf.mxu0
        %v4422 = vadd.f32 %v4276, %v4421
        %v4423 = vpop.f32.mrf.mxu0
        %v4424 = vadd.f32 %v4280, %v4423
        %4425 = vmatprep.mubr.bf16.mxu0 0
        %4426 = vmatmul.mubr.bf16.gmra.mxu0 %v4250
        %v4427 = vpop.f32.mrf.mxu0
        %v4428 = vadd.f32 %v4276, %v4427
        %v4429 = vpop.f32.mrf.mxu0
        %v4430 = vadd.f32 %v4280, %v4429
        %v4431 = vpop.f32.mrf.mxu0
        %v4432 = vadd.f32 %v4276, %v4431
        %v4433 = vpop.f32.mrf.mxu0
        %v4434 = vadd.f32 %v4280, %v4433
        %4435 = vmatprep.mubr.bf16.mxu0 0
        %4436 = vmatmul.mubr.bf16.gmra.mxu0 %v4251
        %v4437 = vpop.f32.mrf.mxu0
        %v4438 = vadd.f32 %v4276, %v4437
        %v4439 = vpop.f32.mrf.mxu0
        %v4440 = vadd.f32 %v4280, %v4439
        %v4441 = vpop.f32.mrf.mxu0
        %v4442 = vadd.f32 %v4276, %v4441
        %v4443 = vpop.f32.mrf.mxu0
        %v4444 = vadd.f32 %v4280, %v4443
        %4445 = vmatprep.mubr.bf16.mxu0 0
        %4446 = vmatmul.mubr.bf16.gmra.mxu0 %v4252
        %v4447 = vpop.f32.mrf.mxu0
        %v4448 = vadd.f32 %v4276, %v4447
        %v4449 = vpop.f32.mrf.mxu0
        %v4450 = vadd.f32 %v4280, %v4449
        %v4451 = vpop.f32.mrf.mxu0
        %v4452 = vadd.f32 %v4276, %v4451
        %v4453 = vpop.f32.mrf.mxu0
        %v4454 = vadd.f32 %v4280, %v4453
        %4455 = vmatprep.mubr.bf16.mxu0 0
        %4456 = vmatmul.mubr.bf16.gmra.mxu0 %v4253
        %v4457 = vpop.f32.mrf.mxu0
        %v4458 = vadd.f32 %v4276, %v4457
        %v4459 = vpop.f32.mrf.mxu0
        %v4460 = vadd.f32 %v4280, %v4459
        %v4461 = vpop.f32.mrf.mxu0
        %v4462 = vadd.f32 %v4276, %v4461
        %v4463 = vpop.f32.mrf.mxu0
        %v4464 = vadd.f32 %v4280, %v4463
        %4465 = vmatprep.mubr.bf16.mxu0 0
        %4466 = vmatmul.mubr.bf16.gmra.mxu0 %v4254
        %v4467 = vpop.f32.mrf.mxu0
        %v4468 = vadd.f32 %v4276, %v4467
        %v4469 = vpop.f32.mrf.mxu0
        %v4470 = vadd.f32 %v4280, %v4469
        %v4471 = vpop.f32.mrf.mxu0
        %v4472 = vadd.f32 %v4276, %v4471
        %v4473 = vpop.f32.mrf.mxu0
        %v4474 = vadd.f32 %v4280, %v4473
        %4475 = vdwg.mxu0
        %v4476 = vmax.f32 %v4398, 0.0
        %v4477 = vmax.f32 %v4400, 0.0
        %v4478 = vmax.f32 %v4402, 0.0
        %v4479 = vmax.f32 %v4404, 0.0
        %v4480 = vmax.f32 %v4408, 0.0
        %v4481 = vmax.f32 %v4410, 0.0
        %v4482 = vmax.f32 %v4412, 0.0
        %v4483 = vmax.f32 %v4414, 0.0
        %v4484 = vmax.f32 %v4418, 0.0
        %v4485 = vmax.f32 %v4420, 0.0
        %v4486 = vmax.f32 %v4422, 0.0
        %v4487 = vmax.f32 %v4424, 0.0
        %v4488 = vmax.f32 %v4428, 0.0
        %v4489 = vmax.f32 %v4430, 0.0
        %v4490 = vmax.f32 %v4432, 0.0
        %v4491 = vmax.f32 %v4434, 0.0
        %v4492 = vmax.f32 %v4438, 0.0
        %v4493 = vmax.f32 %v4440, 0.0
        %v4494 = vmax.f32 %v4442, 0.0
        %v4495 = vmax.f32 %v4444, 0.0
        %v4496 = vmax.f32 %v4448, 0.0
        %v4497 = vmax.f32 %v4450, 0.0
        %v4498 = vmax.f32 %v4452, 0.0
        %v4499 = vmax.f32 %v4454, 0.0
        %v4500 = vmax.f32 %v4458, 0.0
        %v4501 = vmax.f32 %v4460, 0.0
        %v4502 = vmax.f32 %v4462, 0.0
        %v4503 = vmax.f32 %v4464, 0.0
        %v4504 = vmax.f32 %v4468, 0.0
        %v4505 = vmax.f32 %v4470, 0.0
        %v4506 = vmax.f32 %v4472, 0.0
        %v4507 = vmax.f32 %v4474, 0.0
        %v4508 = vpack.c.bf16 %v4478, %v4476
        %v4509 = vpack.c.bf16 %v4479, %v4477
        %v4510 = vpack.c.bf16 %v4482, %v4480
        %v4511 = vpack.c.bf16 %v4483, %v4481
        %v4512 = vpack.c.bf16 %v4486, %v4484
        %v4513 = vpack.c.bf16 %v4487, %v4485
        %v4514 = vpack.c.bf16 %v4490, %v4488
        %v4515 = vpack.c.bf16 %v4491, %v4489
        %v4516 = vpack.c.bf16 %v4494, %v4492
        %v4517 = vpack.c.bf16 %v4495, %v4493
        %v4518 = vpack.c.bf16 %v4498, %v4496
        %v4519 = vpack.c.bf16 %v4499, %v4497
        %v4520 = vpack.c.bf16 %v4502, %v4500
        %v4521 = vpack.c.bf16 %v4503, %v4501
        %v4522 = vpack.c.bf16 %v4506, %v4504
        %v4523 = vpack.c.bf16 %v4507, %v4505
        %v4524 = vld [vmem:[#allocation11] sm:$0xf]
        %v4525 = vld [vmem:[#allocation11 + $0x4] sm:$0xf]
        %v4526 = vld [vmem:[#allocation11 + $0x8] sm:$0xf]
        %v4527 = vld [vmem:[#allocation11 + $0xc] sm:$0xf]
        %v4528 = vld [vmem:[#allocation11 + $0x10] sm:$0xf]
        %v4529 = vld [vmem:[#allocation11 + $0x14] sm:$0xf]
        %v4530 = vld [vmem:[#allocation11 + $0x18] sm:$0xf]
        %v4531 = vld [vmem:[#allocation11 + $0x1c] sm:$0xf]
        %v4532 = vld [vmem:[#allocation11 + $0x20] sm:$0xf]
        %v4533 = vld [vmem:[#allocation11 + $0x24] sm:$0xf]
        %v4534 = vld [vmem:[#allocation11 + $0x28] sm:$0xf]
        %v4535 = vld [vmem:[#allocation11 + $0x2c] sm:$0xf]
        %v4536 = vld [vmem:[#allocation11 + $0x30] sm:$0xf]
        %v4537 = vld [vmem:[#allocation11 + $0x34] sm:$0xf]
        %v4538 = vld [vmem:[#allocation11 + $0x38] sm:$0xf]
        %v4539 = vld [vmem:[#allocation11 + $0x3c] sm:$0xf]
        %v4540 = vld [vmem:[#allocation11 + $0x40] sm:$0xf]
        %v4541 = vld [vmem:[#allocation11 + $0x44] sm:$0xf]
        %v4542 = vld [vmem:[#allocation11 + $0x48] sm:$0xf]
        %v4543 = vld [vmem:[#allocation11 + $0x4c] sm:$0xf]
        %v4544 = vld [vmem:[#allocation11 + $0x50] sm:$0xf]
        %v4545 = vld [vmem:[#allocation11 + $0x54] sm:$0xf]
        %v4546 = vld [vmem:[#allocation11 + $0x58] sm:$0xf]
        %v4547 = vld [vmem:[#allocation11 + $0x5c] sm:$0xf]
        %v4548 = vld [vmem:[#allocation11 + $0x60] sm:$0xf]
        %v4549 = vld [vmem:[#allocation11 + $0x64] sm:$0xf]
        %v4550 = vld [vmem:[#allocation11 + $0x68] sm:$0xf]
        %v4551 = vld [vmem:[#allocation11 + $0x6c] sm:$0xf]
        %v4552 = vld [vmem:[#allocation11 + $0x70] sm:$0xf]
        %v4553 = vld [vmem:[#allocation11 + $0x74] sm:$0xf]
        %v4554 = vld [vmem:[#allocation11 + $0x78] sm:$0xf]
        %v4555 = vld [vmem:[#allocation11 + $0x7c] sm:$0xf]
        %v4556 = vld [vmem:[%s12] sm:$0x1]
        %v4558 = vlaneseq
        %v4559 = vshrl.u32 %v4558, 7
        %v4560 = vsub.s32 0, %v4559
        %v4561 = vrot.slane %v4556, %v4560
        %v4595 = vunpack.c.l.b16 %v4524
        %v4596 = vunpack.c.l.b16 %v4525
        %v4597 = vunpack.c.l.b16 %v4526
        %v4598 = vunpack.c.l.b16 %v4527
        %v4599 = vunpack.c.l.b16 %v4528
        %v4600 = vunpack.c.l.b16 %v4529
        %v4601 = vunpack.c.l.b16 %v4530
        %v4602 = vunpack.c.l.b16 %v4531
        %v4603 = vunpack.c.l.b16 %v4532
        %v4604 = vunpack.c.l.b16 %v4533
        %v4605 = vunpack.c.l.b16 %v4534
        %v4606 = vunpack.c.l.b16 %v4535
        %v4607 = vunpack.c.l.b16 %v4536
        %v4608 = vunpack.c.l.b16 %v4537
        %v4609 = vunpack.c.l.b16 %v4538
        %v4610 = vunpack.c.l.b16 %v4539
        %v4611 = vunpack.c.l.b16 %v4540
        %v4612 = vunpack.c.l.b16 %v4541
        %v4613 = vunpack.c.l.b16 %v4542
        %v4614 = vunpack.c.l.b16 %v4543
        %v4615 = vunpack.c.l.b16 %v4544
        %v4616 = vunpack.c.l.b16 %v4545
        %v4617 = vunpack.c.l.b16 %v4546
        %v4618 = vunpack.c.l.b16 %v4547
        %v4619 = vunpack.c.l.b16 %v4548
        %v4620 = vunpack.c.l.b16 %v4549
        %v4621 = vunpack.c.l.b16 %v4550
        %v4622 = vunpack.c.l.b16 %v4551
        %v4623 = vunpack.c.l.b16 %v4552
        %v4624 = vunpack.c.l.b16 %v4553
        %v4625 = vunpack.c.l.b16 %v4554
        %v4626 = vunpack.c.l.b16 %v4555
        %v4627 = vpack.c.b16 %v4596, %v4595
        %v4628 = vpack.c.b16 %v4598, %v4597
        %v4629 = vpack.c.b16 %v4600, %v4599
        %v4630 = vpack.c.b16 %v4602, %v4601
        %v4631 = vpack.c.b16 %v4604, %v4603
        %v4632 = vpack.c.b16 %v4606, %v4605
        %v4633 = vpack.c.b16 %v4608, %v4607
        %v4634 = vpack.c.b16 %v4610, %v4609
        %v4635 = vpack.c.b16 %v4612, %v4611
        %v4636 = vpack.c.b16 %v4614, %v4613
        %v4637 = vpack.c.b16 %v4616, %v4615
        %v4638 = vpack.c.b16 %v4618, %v4617
        %v4639 = vpack.c.b16 %v4620, %v4619
        %v4640 = vpack.c.b16 %v4622, %v4621
        %v4641 = vpack.c.b16 %v4624, %v4623
        %v4642 = vpack.c.b16 %v4626, %v4625
        %4659 = vmatprep.subr.bf16.mxu0 0
        %4660 = vmatpush1.bf16.msra.mxu0 %v4634
        %4661 = vmatprep.subr.bf16.mxu0 0
        %4662 = vmatpush1.bf16.msra.mxu0 %v4633
        %4663 = vmatprep.subr.bf16.mxu0 0
        %4664 = vmatpush1.bf16.msra.mxu0 %v4632
        %4665 = vmatprep.subr.bf16.mxu0 0
        %4666 = vmatpush1.bf16.msra.mxu0 %v4631
        %4667 = vmatprep.subr.bf16.mxu0 0
        %4668 = vmatpush1.bf16.msra.mxu0 %v4630
        %4669 = vmatprep.subr.bf16.mxu0 0
        %4670 = vmatpush1.bf16.msra.mxu0 %v4629
        %4671 = vmatprep.subr.bf16.mxu0 0
        %4672 = vmatpush1.bf16.msra.mxu0 %v4628
        %4673 = vmatprep.subr.bf16.mxu0 0
        %4674 = vmatpush1.bf16.msra.mxu0 %v4627
        %4675 = vmatprep.subr.bf16.mxu0 0
        %4676 = vmatpush2.bf16.msra.mxu0 %v4642
        %4677 = vmatprep.subr.bf16.mxu0 0
        %4678 = vmatpush2.bf16.msra.mxu0 %v4641
        %4679 = vmatprep.subr.bf16.mxu0 0
        %4680 = vmatpush2.bf16.msra.mxu0 %v4640
        %4681 = vmatprep.subr.bf16.mxu0 0
        %4682 = vmatpush2.bf16.msra.mxu0 %v4639
        %4683 = vmatprep.subr.bf16.mxu0 0
        %4684 = vmatpush2.bf16.msra.mxu0 %v4638
        %4685 = vmatprep.subr.bf16.mxu0 0
        %4686 = vmatpush2.bf16.msra.mxu0 %v4637
        %4687 = vmatprep.subr.bf16.mxu0 0
        %4688 = vmatpush2.bf16.msra.mxu0 %v4636
        %4689 = vmatprep.subr.bf16.mxu0 0
        %4690 = vmatpush2.bf16.msra.mxu0 %v4635
        %4691 = vmatprep.mubr.bf16.mxu0 %v4509
        %4692 = vmatmul.mubr.bf16.gmra.mxu0 %v4508
        %v4693 = vpop.f32.mrf.mxu0
        %v4694 = vadd.f32 %v4561, %v4693
        %v4695 = vpop.f32.mrf.mxu0
        %v4696 = vpop.f32.mrf.mxu0
        %v4697 = vadd.f32 %v4561, %v4696
        %v4698 = vpop.f32.mrf.mxu0
        %4699 = vmatprep.mubr.bf16.mxu0 %v4511
        %4700 = vmatmul.mubr.bf16.gmra.mxu0 %v4510
        %v4701 = vpop.f32.mrf.mxu0
        %v4702 = vadd.f32 %v4561, %v4701
        %v4703 = vpop.f32.mrf.mxu0
        %v4704 = vpop.f32.mrf.mxu0
        %v4705 = vadd.f32 %v4561, %v4704
        %v4706 = vpop.f32.mrf.mxu0
        %4707 = vmatprep.mubr.bf16.mxu0 %v4513
        %4708 = vmatmul.mubr.bf16.gmra.mxu0 %v4512
        %v4709 = vpop.f32.mrf.mxu0
        %v4710 = vadd.f32 %v4561, %v4709
        %v4711 = vpop.f32.mrf.mxu0
        %v4712 = vpop.f32.mrf.mxu0
        %v4713 = vadd.f32 %v4561, %v4712
        %v4714 = vpop.f32.mrf.mxu0
        %4715 = vmatprep.mubr.bf16.mxu0 %v4515
        %4716 = vmatmul.mubr.bf16.gmra.mxu0 %v4514
        %v4717 = vpop.f32.mrf.mxu0
        %v4718 = vadd.f32 %v4561, %v4717
        %v4719 = vpop.f32.mrf.mxu0
        %v4720 = vpop.f32.mrf.mxu0
        %v4721 = vadd.f32 %v4561, %v4720
        %v4722 = vpop.f32.mrf.mxu0
        %4723 = vmatprep.mubr.bf16.mxu0 %v4517
        %4724 = vmatmul.mubr.bf16.gmra.mxu0 %v4516
        %v4725 = vpop.f32.mrf.mxu0
        %v4726 = vadd.f32 %v4561, %v4725
        %v4727 = vpop.f32.mrf.mxu0
        %v4728 = vpop.f32.mrf.mxu0
        %v4729 = vadd.f32 %v4561, %v4728
        %v4730 = vpop.f32.mrf.mxu0
        %4731 = vmatprep.mubr.bf16.mxu0 %v4519
        %4732 = vmatmul.mubr.bf16.gmra.mxu0 %v4518
        %v4733 = vpop.f32.mrf.mxu0
        %v4734 = vadd.f32 %v4561, %v4733
        %v4735 = vpop.f32.mrf.mxu0
        %v4736 = vpop.f32.mrf.mxu0
        %v4737 = vadd.f32 %v4561, %v4736
        %v4738 = vpop.f32.mrf.mxu0
        %4739 = vmatprep.mubr.bf16.mxu0 %v4521
        %4740 = vmatmul.mubr.bf16.gmra.mxu0 %v4520
        %v4741 = vpop.f32.mrf.mxu0
        %v4742 = vadd.f32 %v4561, %v4741
        %v4743 = vpop.f32.mrf.mxu0
        %v4744 = vpop.f32.mrf.mxu0
        %v4745 = vadd.f32 %v4561, %v4744
        %v4746 = vpop.f32.mrf.mxu0
        %4747 = vmatprep.mubr.bf16.mxu0 %v4523
        %4748 = vmatmul.mubr.bf16.gmra.mxu0 %v4522
        %v4749 = vpop.f32.mrf.mxu0
        %v4750 = vadd.f32 %v4561, %v4749
        %v4751 = vpop.f32.mrf.mxu0
        %v4752 = vpop.f32.mrf.mxu0
        %v4753 = vadd.f32 %v4561, %v4752
        %v4754 = vpop.f32.mrf.mxu0
        %4755 = vdwg.mxu0
        %v4756 = vadd.f32 %v3897, %v4694
        %v4757 = vadd.f32 %v3898, %v4697
        %v4758 = vadd.f32 %v3899, %v4702
        %v4759 = vadd.f32 %v3900, %v4705
        %v4760 = vadd.f32 %v3901, %v4710
        %v4761 = vadd.f32 %v3902, %v4713
        %v4762 = vadd.f32 %v3903, %v4718
        %v4763 = vadd.f32 %v3904, %v4721
        %v4764 = vadd.f32 %v3905, %v4726
        %v4765 = vadd.f32 %v3906, %v4729
        %v4766 = vadd.f32 %v3907, %v4734
        %v4767 = vadd.f32 %v3908, %v4737
        %v4768 = vadd.f32 %v3909, %v4742
        %v4769 = vadd.f32 %v3910, %v4745
        %v4770 = vadd.f32 %v3911, %v4750
        %v4771 = vadd.f32 %v3912, %v4753
        %4772 = vst [vmem:[%s604] sm:$0xff] %v4756
        %4773 = vst [vmem:[%s604 + $0x8] sm:$0xff] %v4757
        %4774 = vst [vmem:[%s604 + $0x10] sm:$0xff] %v4758
        %4775 = vst [vmem:[%s604 + $0x18] sm:$0xff] %v4759
        %4776 = vst [vmem:[%s604 + $0x20] sm:$0xff] %v4760
        %4777 = vst [vmem:[%s604 + $0x28] sm:$0xff] %v4761
        %4778 = vst [vmem:[%s604 + $0x30] sm:$0xff] %v4762
        %4779 = vst [vmem:[%s604 + $0x38] sm:$0xff] %v4763
        %4780 = vst [vmem:[%s604 + $0x40] sm:$0xff] %v4764
        %4781 = vst [vmem:[%s604 + $0x48] sm:$0xff] %v4765
        %4782 = vst [vmem:[%s604 + $0x50] sm:$0xff] %v4766
        %4783 = vst [vmem:[%s604 + $0x58] sm:$0xff] %v4767
        %4784 = vst [vmem:[%s604 + $0x60] sm:$0xff] %v4768
        %4785 = vst [vmem:[%s604 + $0x68] sm:$0xff] %v4769
        %4786 = vst [vmem:[%s604 + $0x70] sm:$0xff] %v4770
        %4787 = vst [vmem:[%s604 + $0x78] sm:$0xff] %v4771
        %s4788 = sand.u32 %s371, 1
        %s4789 = scalar_lea.sflag [#allocation4], %s4788
        %s4790 = sand.u32 %s371, 1
        %s4791 = smul.addr %s4790, 128
        %s4792 = scalar_lea.vmem [#allocation13], %s4791
        // Predicated region
        $region105: #{tpu_custom_call.1} parent=79 // pred_check
          %p4793 = pneg %p381
        $region106: #{tpu_custom_call.1} parent=79 // pred_check_branch
          %4795 = sbr.rel (%p4793) target = $region108
        $region107: #{tpu_custom_call.1} parent=79 // pred_region
          %s4796 = smul.u32 4, %s33
          %s4798 = ssub.s32 2048, 2048
          %4799 = vsyncadd %s4789, %s4798
          %s4800 = smul.addr %s4796, 4
          %s4801 = smul.addr %s4800, 128
          %s4802 = scalar_lea.hbm %s15, %s4801
          %s4803 = sshll.u32 %s4792, 4
          %s4804 = int_to_ptr.vmem [resolvable:$true] %s4803
          %4809 = dma.vmem_to_hbm [thread:$0]  %s4804, 2048, %s4802, %s4789, 128, 128, 8
        $region108: #{tpu_custom_call.1} parent=79 // pred_fallthru
          _
      $region80: #{tpu_custom_call.1} parent=5 // pred_fallthru
        _
      %p4810 = scmp.le.s32.totalorder 2, %s28
      // Predicated region
      $region109: #{tpu_custom_call.1} parent=5 // pred_check
        %p4811 = pneg %p4810
      $region110: #{tpu_custom_call.1} parent=5 // pred_check_branch
        %4813 = sbr.rel (%p4811) target = $region112
      $region111: #{tpu_custom_call.1} parent=5 // pred_region
        %s4814 = ssub.s32 %s28, 2
        // Predicated region
        $region113: #{tpu_custom_call.1} parent=111 // pred_check
          %p4815 = pneg %p387
        $region114: #{tpu_custom_call.1} parent=111 // pred_check_branch
          %4817 = sbr.rel (%p4815) target = $region116
        $region115: #{tpu_custom_call.1} parent=111 // pred_region
          %s4818 = sand.u32 %s372, 1
          %s4819 = scalar_lea.sflag [#allocation4], %s4818
          %s4820 = sand.u32 %s372, 1
          %s4821 = smul.addr %s4820, 128
          %s4822 = scalar_lea.vmem [#allocation13], %s4821
          %4823 = dma.done %s4819, 2048
        $region116: #{tpu_custom_call.1} parent=111 // pred_fallthru
          _
      $region112: #{tpu_custom_call.1} parent=5 // pred_fallthru
        _
    $region6: #{tpu_custom_call.1} parent=1 // loop_footer
      %s32 = sadd.s32 1, %s28
    $region7: #{tpu_custom_call.1} parent=1 // loop_footer_branch
      %27 = sbr.rel target = $region3
    $region8: #{tpu_custom_call.1} parent=1 // loop_exit
      _
    %4824 = vsyncpa [#allocation3], 1
    %s4825 = scalar_lea.sflag [#allocation3], 1
    %4826 = vsyncpa %s4825, 1
    %4827 = vsyncpa [#allocation6], 1
    %4828 = vsyncpa [#allocation9], 1
    %4829 = vsyncpa [#allocation12], 1
    %4830 = vsyncpa [#allocation4], 1
    %s4831 = scalar_lea.sflag [#allocation4], 1
    %4832 = vsyncpa %s4831, 1

</llo_original>
